<compile_context>
chip_gen: v6e
topology: v6e:2x2x1
jax: 0.10.0
libtpu: 0.0.40
codegen_flags: <defaults>
</compile_context>

<pallas_src>
import math
import jax
import jax.numpy as jnp
from jax.experimental import pallas as pl
from jax.experimental.pallas import tpu as pltpu

# ---- small, module-consistent configuration ----
BATCH = 2
TUPLE_LEN = 4
CHANNELS = 4
SPATIAL = 16
FEATURE_SIZE = 256
HIDDEN_SIZE = 32
CLASS_NUM = math.factorial(TUPLE_LEN)          # 24
IN_DIM = CHANNELS * SPATIAL * SPATIAL          # 1024

# fused-gate width (both directions, 4 gates each) == pack lane width
GATES = 8 * HIDDEN_SIZE                        # 256
# The packed-parameter layout below assumes this equality (lane-uniform packs).
assert FEATURE_SIZE == GATES

# f32 parameter-pack row offsets (shared by init_params and the kernel)
_PB_VEC = 0                                    # rows 0..7: base_b, b0, b1, fc_b, pad
_PB_WHH0 = 8
_PB_WIH1 = _PB_WHH0 + 2 * HIDDEN_SIZE          # 72
_PB_WHH1 = _PB_WIH1 + 2 * HIDDEN_SIZE          # 136
_PB_FCW = _PB_WHH1 + 2 * HIDDEN_SIZE           # 200
_PB_ROWS = _PB_FCW + 2 * HIDDEN_SIZE           # 264

_VMEM = pl.BlockSpec(memory_space=pltpu.MemorySpace.VMEM)


# ------------------------- fused kernel -------------------------

def _opn_kernel(x_ref, wbf_ref, wf32_ref, out_ref):
    H = HIDDEN_SIZE
    G = GATES
    B = out_ref.shape[0]
    T = x_ref.shape[0] // B          # x rows are (b, t)-ordered

    # --- static views into the two packed parameter operands ---
    base_w = wbf_ref[0:IN_DIM, :]                          # (1024, F)  bf16
    wih0 = wbf_ref[IN_DIM:IN_DIM + FEATURE_SIZE, :]        # (F, 8H)    bf16

    base_b = wf32_ref[0:1, :]                              # (1, F)
    b0 = wf32_ref[1:2, :]                                  # (1, 8H)
    b1 = wf32_ref[2:3, :]                                  # (1, 8H)
    fc_b = wf32_ref[3:4, 0:128]                            # (1, 128) lane-padded
    whh0 = wf32_ref[_PB_WHH0:_PB_WHH0 + 2 * H, :]          # (2H, 8H) block-diag
    wih1 = wf32_ref[_PB_WIH1:_PB_WIH1 + 2 * H, :]          # (2H, 8H)
    whh1 = wf32_ref[_PB_WHH1:_PB_WHH1 + 2 * H, :]          # (2H, 8H) block-diag
    fc_w = wf32_ref[_PB_FCW:_PB_FCW + 2 * H, 0:128]        # (2H, 128) lane-padded

    # fwd-direction lane mask over the interleaved gate columns
    # [i_f i_b f_f f_b g_f g_b o_f o_b]: a column is "fwd" iff (col mod 2H) < H.
    col = jax.lax.broadcasted_iota(jnp.int32, (1, G), 1)
    fwd_mask = (col % (2 * H)) < H                         # (1, 8H) bool

    # --- base_network: flatten + Linear for all B*T frames (bf16 MXU, f32 acc) ---
    feats = (jnp.dot(x_ref[...].astype(jnp.bfloat16), base_w,
                     preferred_element_type=jnp.float32) + base_b)   # (B*T, F)

    # --- layer-0 hoisted input projection, both directions in one matmul ---
    gih0 = (jnp.dot(feats.astype(jnp.bfloat16), wih0,
                    preferred_element_type=jnp.float32) + b0)        # (B*T, 8H)
    gih0_bt = gih0.reshape(B, T, G)
    # Per-time slices + fwd/bwd lane selects are hoisted off the serial chain.
    gih0_t = [gih0_bt[:, t, :] for t in range(T)]                    # (B, 8H) each
    g_pre0 = [jnp.where(fwd_mask, gih0_t[s], gih0_t[T - 1 - s])
              for s in range(T)]

    def lstm_cell(g_pre, whh, h, c):
        # g_pre already holds x@W_ih + b; add only the recurrent part.
        gates = g_pre + jnp.dot(h, whh, preferred_element_type=jnp.float32)
        sig = jax.nn.sigmoid(gates)        # one EUP pass over the full 8H tile
        th = jnp.tanh(gates)               # one EUP pass over the full 8H tile
        i = sig[:, 0:2 * H]
        f = sig[:, 2 * H:4 * H]
        g = th[:, 4 * H:6 * H]
        o = sig[:, 6 * H:8 * H]
        c = f * c + i * g                  # state layout [fwd | bwd]
        h = o * jnp.tanh(c)
        return h, c

    # --- layer 0: fused fwd+bwd recurrence (T steps, fully unrolled) ---
    h = jnp.zeros((B, 2 * H), jnp.float32)
    c = jnp.zeros((B, 2 * H), jnp.float32)
    gih1_f = [None] * T
    gih1_b = [None] * T
    for s in range(T):
        h, c = lstm_cell(g_pre0[s], whh0, h, c)
        # Incremental layer-1 input projection (idle-MXU filler):
        #   fwd half of h is layer-0 output at time s,
        #   bwd half of h is layer-0 output at time T-1-s.
        gih1_f[s] = jnp.dot(h[:, 0:H], wih1[0:H, :],
                            preferred_element_type=jnp.float32)
        gih1_b[T - 1 - s] = jnp.dot(h[:, H:2 * H], wih1[H:2 * H, :],
                                    preferred_element_type=jnp.float32)

    gih1 = [gih1_f[t] + gih1_b[t] + b1 for t in range(T)]            # (B, 8H) per t
    g_pre1 = [jnp.where(fwd_mask, gih1[s], gih1[T - 1 - s])
              for s in range(T)]

    # --- layer 1: fused fwd+bwd recurrence ---
    h = jnp.zeros((B, 2 * H), jnp.float32)
    c = jnp.zeros((B, 2 * H), jnp.float32)
    h1_first = None
    for s in range(T):
        h, c = lstm_cell(g_pre1[s], whh1, h, c)
        if s == 0:
            h1_first = h                   # its bwd half = bwd output at t = T-1

    # --- outputs[-1] -> final Linear, fc_w consumed as split halves ---
    # outputs[-1] = [fwd hidden at t=T-1 | bwd hidden stored at position T-1]
    out_ref[...] = (jnp.dot(h[:, 0:H], fc_w[0:H, :],
                            preferred_element_type=jnp.float32)
                    + jnp.dot(h1_first[:, H:2 * H], fc_w[H:2 * H, :],
                              preferred_element_type=jnp.float32)
                    + fc_b)


# ------------------------- params (PyTorch layout -> fused packs) ----------------

def _interleave_gates(wf, wb):
    """wf, wb: (rows, 4H), gate order i,f,g,o ->
    (rows, 8H) with columns [i_f, i_b, f_f, f_b, g_f, g_b, o_f, o_b]."""
    H = wf.shape[1] // 4
    cols = []
    for g in range(4):
        cols.append(wf[:, g * H:(g + 1) * H])
        cols.append(wb[:, g * H:(g + 1) * H])
    return jnp.concatenate(cols, axis=1)


def init_params(key):
    ks = jax.random.split(key, 20)

    def unif(k, shape, scale):
        return jax.random.uniform(k, shape, jnp.float32, -scale, scale)

    H = HIDDEN_SIZE
    # ---- raw, PyTorch-layout parameters ----
    kb = 1.0 / math.sqrt(IN_DIM)
    base_w = unif(ks[0], (IN_DIM, FEATURE_SIZE), kb)   # == torch Linear.weight.T
    base_b = unif(ks[1], (FEATURE_SIZE,), kb)

    kh = 1.0 / math.sqrt(H)
    raw, idx = {}, 2
    for layer in range(2):
        in_size = FEATURE_SIZE if layer == 0 else 2 * H
        for tag in ("f", "b"):                         # fwd, reverse direction
            raw[f"w_ih{layer}{tag}"] = unif(ks[idx], (4 * H, in_size), kh); idx += 1
            raw[f"w_hh{layer}{tag}"] = unif(ks[idx], (4 * H, H), kh); idx += 1
            raw[f"b{layer}{tag}"] = (unif(ks[idx], (4 * H,), kh)
                                     + unif(ks[idx + 1], (4 * H,), kh))   # b_ih+b_hh
            idx += 2
    kf = 1.0 / math.sqrt(2 * H)
    fc_w = unif(ks[idx], (2 * H, CLASS_NUM), kf)       # == torch fc.weight.T
    fc_b = unif(ks[idx + 1], (CLASS_NUM,), kf)

    # ---- fuse into direction-interleaved layouts ----
    z = jnp.zeros((H, 4 * H), jnp.float32)
    wih0 = _interleave_gates(raw["w_ih0f"].T, raw["w_ih0b"].T)        # (F, 8H)
    whh0 = jnp.concatenate([_interleave_gates(raw["w_hh0f"].T, z),
                            _interleave_gates(z, raw["w_hh0b"].T)], axis=0)  # (2H, 8H)
    b0 = _interleave_gates(raw["b0f"][None, :], raw["b0b"][None, :])  # (1, 8H)
    wih1 = _interleave_gates(raw["w_ih1f"].T, raw["w_ih1b"].T)        # (2H, 8H)
    whh1 = jnp.concatenate([_interleave_gates(raw["w_hh1f"].T, z),
                            _interleave_gates(z, raw["w_hh1b"].T)], axis=0)
    b1 = _interleave_gates(raw["b1f"][None, :], raw["b1b"][None, :])

    def pad_lanes(a):
        return jnp.pad(a, ((0, 0), (0, GATES - a.shape[1])))

    # ---- pack into two operands (3 DMAs total incl. x) ----
    # bf16 pack: base_w rows 0:IN_DIM, layer-0 W_ih rows IN_DIM:IN_DIM+F
    pack_bf16 = jnp.concatenate([base_w, wih0], axis=0).astype(jnp.bfloat16)
    # f32 pack: rows 0..7 = [base_b, b0, b1, fc_b(pad), 0,0,0,0]; then whh0,
    # wih1, whh1, fc_w(pad) at the _PB_* offsets above.
    vec_rows = jnp.concatenate([base_b[None, :], b0, b1,
                                pad_lanes(fc_b[None, :]),
                                jnp.zeros((4, GATES), jnp.float32)], axis=0)
    pack_f32 = jnp.concatenate([vec_rows, whh0, wih1, whh1,
                                pad_lanes(fc_w)], axis=0)
    assert pack_f32.shape == (_PB_ROWS, GATES)
    return {"pack_bf16": pack_bf16, "pack_f32": pack_f32}


# ------------------------- wrapper -------------------------

def opn_rnn_forward(x, params):
    """x: (B, T, C, H, W) float32 -> (B, tuple_len!) logits."""
    B, T, C, Hs, Ws = x.shape
    # Free reshape (no transpose / HBM copy): rows are (b, t)-ordered; the kernel
    # handles the row order with static, hoisted slices.
    x2 = x.reshape(B * T, C * Hs * Ws).astype(jnp.float32)

    out_pad = pl.pallas_call(
        _opn_kernel,
        out_shape=jax.ShapeDtypeStruct((B, 128), jnp.float32),   # lane-dense store
        in_specs=[_VMEM, _VMEM, _VMEM],
        out_specs=_VMEM,
    )(x2, params["pack_bf16"], params["pack_f32"])
    return out_pad[:, :CLASS_NUM]


if __name__ == "__main__":
    key = jax.random.PRNGKey(0)
    k_x, k_p = jax.random.split(key)
    x = jax.random.normal(k_x, (BATCH, TUPLE_LEN, CHANNELS, SPATIAL, SPATIAL),
                          dtype=jnp.float32)
    params = init_params(k_p)

    logits = opn_rnn_forward(x, params)
    jax.block_until_ready(logits)
    assert logits.shape == (BATCH, CLASS_NUM)
    print("KERNEL_OK")
</pallas_src>

<mosaic_0001>
module attributes {stable_mosaic.version = 11 : i64} {
  func.func @_opn_kernel(%arg0: memref<8x1024xf32, #tpu.memory_space<vmem>>, %arg1: memref<1280x256xbf16, #tpu.memory_space<vmem>>, %arg2: memref<264x256xf32, #tpu.memory_space<vmem>>, %arg3: memref<2x128xf32, #tpu.memory_space<vmem>>) attributes {dimension_semantics = [], scalar_prefetch = 0 : i64, scratch_operands = 0 : i64, tpu.core_type = #tpu.core_type<tc>} {
    %c0 = arith.constant 0 : index
    %c0_0 = arith.constant 0 : index
    %0 = vector.load %arg1[%c0, %c0_0] : memref<1280x256xbf16, #tpu.memory_space<vmem>>, vector<1024x256xbf16>
    %c1024 = arith.constant 1024 : index
    %c0_1 = arith.constant 0 : index
    %1 = vector.load %arg1[%c1024, %c0_1] : memref<1280x256xbf16, #tpu.memory_space<vmem>>, vector<256x256xbf16>
    %c0_2 = arith.constant 0 : index
    %c0_3 = arith.constant 0 : index
    %2 = vector.load %arg2[%c0_2, %c0_3] : memref<264x256xf32, #tpu.memory_space<vmem>>, vector<1x256xf32>
    %c1 = arith.constant 1 : index
    %c0_4 = arith.constant 0 : index
    %3 = vector.load %arg2[%c1, %c0_4] : memref<264x256xf32, #tpu.memory_space<vmem>>, vector<1x256xf32>
    %c2 = arith.constant 2 : index
    %c0_5 = arith.constant 0 : index
    %4 = vector.load %arg2[%c2, %c0_5] : memref<264x256xf32, #tpu.memory_space<vmem>>, vector<1x256xf32>
    %c3 = arith.constant 3 : index
    %c0_6 = arith.constant 0 : index
    %5 = vector.load %arg2[%c3, %c0_6] : memref<264x256xf32, #tpu.memory_space<vmem>>, vector<1x128xf32>
    %c8 = arith.constant 8 : index
    %c0_7 = arith.constant 0 : index
    %6 = vector.load %arg2[%c8, %c0_7] : memref<264x256xf32, #tpu.memory_space<vmem>>, vector<64x256xf32>
    %c72 = arith.constant 72 : index
    %c0_8 = arith.constant 0 : index
    %7 = vector.load %arg2[%c72, %c0_8] : memref<264x256xf32, #tpu.memory_space<vmem>>, vector<64x256xf32>
    %c136 = arith.constant 136 : index
    %c0_9 = arith.constant 0 : index
    %8 = vector.load %arg2[%c136, %c0_9] : memref<264x256xf32, #tpu.memory_space<vmem>>, vector<64x256xf32>
    %c200 = arith.constant 200 : index
    %c0_10 = arith.constant 0 : index
    %9 = vector.load %arg2[%c200, %c0_10] : memref<264x256xf32, #tpu.memory_space<vmem>>, vector<64x128xf32>
    %10 = tpu.iota {dimensions = array<i32: 1>} : vector<1x256xi32>
    %c64_i32 = arith.constant 64 : i32
    %c0_i32 = arith.constant 0 : i32
    %11 = arith.cmpi eq, %c64_i32, %c0_i32 : i32
    %c1_i32 = arith.constant 1 : i32
    %12 = arith.select %11, %c1_i32, %c64_i32 : i32
    %13 = vector.broadcast %12 : i32 to vector<1x256xi32>
    %14 = arith.remsi %10, %13 : vector<1x256xi32>
    %c0_i32_11 = arith.constant 0 : i32
    %15 = vector.broadcast %c0_i32_11 : i32 to vector<1x256xi32>
    %16 = arith.cmpi ne, %14, %15 : vector<1x256xi32>
    %c0_i32_12 = arith.constant 0 : i32
    %17 = vector.broadcast %c0_i32_12 : i32 to vector<1x256xi32>
    %18 = arith.cmpi slt, %14, %17 : vector<1x256xi32>
    %c0_i32_13 = arith.constant 0 : i32
    %19 = arith.cmpi slt, %12, %c0_i32_13 : i32
    %20 = vector.broadcast %19 : i1 to vector<1x256xi1>
    %21 = vector.broadcast %20 : vector<1x256xi1> to vector<1x256xi1>
    %22 = arith.xori %18, %21 : vector<1x256xi1>
    %23 = arith.andi %22, %16 : vector<1x256xi1>
    %24 = vector.broadcast %12 : i32 to vector<1x256xi32>
    %25 = arith.addi %14, %24 : vector<1x256xi32>
    %26 = arith.select %23, %25, %14 : vector<1x256xi1>, vector<1x256xi32>
    %c32_i32 = arith.constant 32 : i32
    %27 = vector.broadcast %c32_i32 : i32 to vector<1x256xi32>
    %28 = arith.cmpi slt, %26, %27 : vector<1x256xi32>
    %c0_14 = arith.constant 0 : index
    %c0_15 = arith.constant 0 : index
    %29 = vector.load %arg0[%c0_14, %c0_15] : memref<8x1024xf32, #tpu.memory_space<vmem>>, vector<8x1024xf32>
    %30 = arith.truncf %29 : vector<8x1024xf32> to vector<8x1024xbf16>
    %cst = arith.constant dense<0.000000e+00> : vector<8x256xf32>
    %31 = tpu.matmul %30, %0, %cst {dimension_numbers = #tpu.dot_dimension_numbers<[1], [0], [0], [1], [0, 0, 1, 1], [], []>} : vector<8x1024xbf16>, vector<1024x256xbf16>, vector<8x256xf32> -> vector<8x256xf32>
    %32 = vector.broadcast %2 : vector<1x256xf32> to vector<8x256xf32>
    %33 = arith.addf %31, %32 : vector<8x256xf32>
    %34 = arith.truncf %33 : vector<8x256xf32> to vector<8x256xbf16>
    %cst_16 = arith.constant dense<0.000000e+00> : vector<8x256xf32>
    %35 = tpu.matmul %34, %1, %cst_16 {dimension_numbers = #tpu.dot_dimension_numbers<[1], [0], [0], [1], [0, 0, 1, 1], [], []>} : vector<8x256xbf16>, vector<256x256xbf16>, vector<8x256xf32> -> vector<8x256xf32>
    %36 = vector.broadcast %3 : vector<1x256xf32> to vector<8x256xf32>
    %37 = arith.addf %35, %36 : vector<8x256xf32>
    %38 = vector.shape_cast %37 : vector<8x256xf32> to vector<2x4x256xf32>
    %39 = vector.extract_strided_slice %38 {offsets = [0, 0, 0], sizes = [2, 1, 256], strides = [1, 1, 1]} : vector<2x4x256xf32> to vector<2x1x256xf32>
    %40 = vector.shape_cast %39 : vector<2x1x256xf32> to vector<2x256xf32>
    %41 = vector.extract_strided_slice %38 {offsets = [0, 1, 0], sizes = [2, 1, 256], strides = [1, 1, 1]} : vector<2x4x256xf32> to vector<2x1x256xf32>
    %42 = vector.shape_cast %41 : vector<2x1x256xf32> to vector<2x256xf32>
    %43 = vector.extract_strided_slice %38 {offsets = [0, 2, 0], sizes = [2, 1, 256], strides = [1, 1, 1]} : vector<2x4x256xf32> to vector<2x1x256xf32>
    %44 = vector.shape_cast %43 : vector<2x1x256xf32> to vector<2x256xf32>
    %45 = vector.extract_strided_slice %38 {offsets = [0, 3, 0], sizes = [2, 1, 256], strides = [1, 1, 1]} : vector<2x4x256xf32> to vector<2x1x256xf32>
    %46 = vector.shape_cast %45 : vector<2x1x256xf32> to vector<2x256xf32>
    %47 = vector.shape_cast %28 : vector<1x256xi1> to vector<1x256xi1>
    %48 = vector.broadcast %47 : vector<1x256xi1> to vector<2x256xi1>
    %49 = arith.select %48, %40, %46 : vector<2x256xi1>, vector<2x256xf32>
    %50 = vector.shape_cast %28 : vector<1x256xi1> to vector<1x256xi1>
    %51 = vector.broadcast %50 : vector<1x256xi1> to vector<2x256xi1>
    %52 = arith.select %51, %42, %44 : vector<2x256xi1>, vector<2x256xf32>
    %53 = vector.shape_cast %28 : vector<1x256xi1> to vector<1x256xi1>
    %54 = vector.broadcast %53 : vector<1x256xi1> to vector<2x256xi1>
    %55 = arith.select %54, %44, %42 : vector<2x256xi1>, vector<2x256xf32>
    %56 = vector.shape_cast %28 : vector<1x256xi1> to vector<1x256xi1>
    %57 = vector.broadcast %56 : vector<1x256xi1> to vector<2x256xi1>
    %58 = arith.select %57, %46, %40 : vector<2x256xi1>, vector<2x256xf32>
    %cst_17 = arith.constant 0.000000e+00 : f32
    %59 = vector.broadcast %cst_17 : f32 to vector<2x64xf32>
    %cst_18 = arith.constant 0.000000e+00 : f32
    %60 = vector.broadcast %cst_18 : f32 to vector<2x64xf32>
    %cst_19 = arith.constant dense<0.000000e+00> : vector<2x256xf32>
    %61 = tpu.matmul %59, %6, %cst_19 {dimension_numbers = #tpu.dot_dimension_numbers<[1], [0], [0], [1], [0, 0, 1, 1], [], []>} : vector<2x64xf32>, vector<64x256xf32>, vector<2x256xf32> -> vector<2x256xf32>
    %62 = arith.addf %49, %61 : vector<2x256xf32>
    %63 = arith.negf %62 : vector<2x256xf32>
    %64 = math.exp %63 : vector<2x256xf32>
    %cst_20 = arith.constant 1.000000e+00 : f32
    %65 = vector.broadcast %cst_20 : f32 to vector<2x256xf32>
    %66 = arith.addf %65, %64 : vector<2x256xf32>
    %67 = arith.divf %65, %66 : vector<2x256xf32>
    %68 = math.tanh %62 : vector<2x256xf32>
    %69 = vector.extract_strided_slice %67 {offsets = [0, 0], sizes = [2, 64], strides = [1, 1]} : vector<2x256xf32> to vector<2x64xf32>
    %70 = vector.extract_strided_slice %67 {offsets = [0, 64], sizes = [2, 64], strides = [1, 1]} : vector<2x256xf32> to vector<2x64xf32>
    %71 = vector.extract_strided_slice %68 {offsets = [0, 128], sizes = [2, 64], strides = [1, 1]} : vector<2x256xf32> to vector<2x64xf32>
    %72 = vector.extract_strided_slice %67 {offsets = [0, 192], sizes = [2, 64], strides = [1, 1]} : vector<2x256xf32> to vector<2x64xf32>
    %73 = arith.mulf %70, %60 : vector<2x64xf32>
    %74 = arith.mulf %69, %71 : vector<2x64xf32>
    %75 = arith.addf %73, %74 : vector<2x64xf32>
    %76 = math.tanh %75 : vector<2x64xf32>
    %77 = arith.mulf %72, %76 : vector<2x64xf32>
    %78 = vector.extract_strided_slice %77 {offsets = [0, 0], sizes = [2, 32], strides = [1, 1]} : vector<2x64xf32> to vector<2x32xf32>
    %79 = vector.extract_strided_slice %7 {offsets = [0, 0], sizes = [32, 256], strides = [1, 1]} : vector<64x256xf32> to vector<32x256xf32>
    %cst_21 = arith.constant dense<0.000000e+00> : vector<2x256xf32>
    %80 = tpu.matmul %78, %79, %cst_21 {dimension_numbers = #tpu.dot_dimension_numbers<[1], [0], [0], [1], [0, 0, 1, 1], [], []>} : vector<2x32xf32>, vector<32x256xf32>, vector<2x256xf32> -> vector<2x256xf32>
    %81 = vector.extract_strided_slice %77 {offsets = [0, 32], sizes = [2, 32], strides = [1, 1]} : vector<2x64xf32> to vector<2x32xf32>
    %82 = vector.extract_strided_slice %7 {offsets = [32, 0], sizes = [32, 256], strides = [1, 1]} : vector<64x256xf32> to vector<32x256xf32>
    %cst_22 = arith.constant dense<0.000000e+00> : vector<2x256xf32>
    %83 = tpu.matmul %81, %82, %cst_22 {dimension_numbers = #tpu.dot_dimension_numbers<[1], [0], [0], [1], [0, 0, 1, 1], [], []>} : vector<2x32xf32>, vector<32x256xf32>, vector<2x256xf32> -> vector<2x256xf32>
    %cst_23 = arith.constant dense<0.000000e+00> : vector<2x256xf32>
    %84 = tpu.matmul %77, %6, %cst_23 {dimension_numbers = #tpu.dot_dimension_numbers<[1], [0], [0], [1], [0, 0, 1, 1], [], []>} : vector<2x64xf32>, vector<64x256xf32>, vector<2x256xf32> -> vector<2x256xf32>
    %85 = arith.addf %52, %84 : vector<2x256xf32>
    %86 = arith.negf %85 : vector<2x256xf32>
    %87 = math.exp %86 : vector<2x256xf32>
    %cst_24 = arith.constant 1.000000e+00 : f32
    %88 = vector.broadcast %cst_24 : f32 to vector<2x256xf32>
    %89 = arith.addf %88, %87 : vector<2x256xf32>
    %90 = arith.divf %88, %89 : vector<2x256xf32>
    %91 = math.tanh %85 : vector<2x256xf32>
    %92 = vector.extract_strided_slice %90 {offsets = [0, 0], sizes = [2, 64], strides = [1, 1]} : vector<2x256xf32> to vector<2x64xf32>
    %93 = vector.extract_strided_slice %90 {offsets = [0, 64], sizes = [2, 64], strides = [1, 1]} : vector<2x256xf32> to vector<2x64xf32>
    %94 = vector.extract_strided_slice %91 {offsets = [0, 128], sizes = [2, 64], strides = [1, 1]} : vector<2x256xf32> to vector<2x64xf32>
    %95 = vector.extract_strided_slice %90 {offsets = [0, 192], sizes = [2, 64], strides = [1, 1]} : vector<2x256xf32> to vector<2x64xf32>
    %96 = arith.mulf %93, %75 : vector<2x64xf32>
    %97 = arith.mulf %92, %94 : vector<2x64xf32>
    %98 = arith.addf %96, %97 : vector<2x64xf32>
    %99 = math.tanh %98 : vector<2x64xf32>
    %100 = arith.mulf %95, %99 : vector<2x64xf32>
    %101 = vector.extract_strided_slice %100 {offsets = [0, 0], sizes = [2, 32], strides = [1, 1]} : vector<2x64xf32> to vector<2x32xf32>
    %102 = vector.extract_strided_slice %7 {offsets = [0, 0], sizes = [32, 256], strides = [1, 1]} : vector<64x256xf32> to vector<32x256xf32>
    %cst_25 = arith.constant dense<0.000000e+00> : vector<2x256xf32>
    %103 = tpu.matmul %101, %102, %cst_25 {dimension_numbers = #tpu.dot_dimension_numbers<[1], [0], [0], [1], [0, 0, 1, 1], [], []>} : vector<2x32xf32>, vector<32x256xf32>, vector<2x256xf32> -> vector<2x256xf32>
    %104 = vector.extract_strided_slice %100 {offsets = [0, 32], sizes = [2, 32], strides = [1, 1]} : vector<2x64xf32> to vector<2x32xf32>
    %105 = vector.extract_strided_slice %7 {offsets = [32, 0], sizes = [32, 256], strides = [1, 1]} : vector<64x256xf32> to vector<32x256xf32>
    %cst_26 = arith.constant dense<0.000000e+00> : vector<2x256xf32>
    %106 = tpu.matmul %104, %105, %cst_26 {dimension_numbers = #tpu.dot_dimension_numbers<[1], [0], [0], [1], [0, 0, 1, 1], [], []>} : vector<2x32xf32>, vector<32x256xf32>, vector<2x256xf32> -> vector<2x256xf32>
    %cst_27 = arith.constant dense<0.000000e+00> : vector<2x256xf32>
    %107 = tpu.matmul %100, %6, %cst_27 {dimension_numbers = #tpu.dot_dimension_numbers<[1], [0], [0], [1], [0, 0, 1, 1], [], []>} : vector<2x64xf32>, vector<64x256xf32>, vector<2x256xf32> -> vector<2x256xf32>
    %108 = arith.addf %55, %107 : vector<2x256xf32>
    %109 = arith.negf %108 : vector<2x256xf32>
    %110 = math.exp %109 : vector<2x256xf32>
    %cst_28 = arith.constant 1.000000e+00 : f32
    %111 = vector.broadcast %cst_28 : f32 to vector<2x256xf32>
    %112 = arith.addf %111, %110 : vector<2x256xf32>
    %113 = arith.divf %111, %112 : vector<2x256xf32>
    %114 = math.tanh %108 : vector<2x256xf32>
    %115 = vector.extract_strided_slice %113 {offsets = [0, 0], sizes = [2, 64], strides = [1, 1]} : vector<2x256xf32> to vector<2x64xf32>
    %116 = vector.extract_strided_slice %113 {offsets = [0, 64], sizes = [2, 64], strides = [1, 1]} : vector<2x256xf32> to vector<2x64xf32>
    %117 = vector.extract_strided_slice %114 {offsets = [0, 128], sizes = [2, 64], strides = [1, 1]} : vector<2x256xf32> to vector<2x64xf32>
    %118 = vector.extract_strided_slice %113 {offsets = [0, 192], sizes = [2, 64], strides = [1, 1]} : vector<2x256xf32> to vector<2x64xf32>
    %119 = arith.mulf %116, %98 : vector<2x64xf32>
    %120 = arith.mulf %115, %117 : vector<2x64xf32>
    %121 = arith.addf %119, %120 : vector<2x64xf32>
    %122 = math.tanh %121 : vector<2x64xf32>
    %123 = arith.mulf %118, %122 : vector<2x64xf32>
    %124 = vector.extract_strided_slice %123 {offsets = [0, 0], sizes = [2, 32], strides = [1, 1]} : vector<2x64xf32> to vector<2x32xf32>
    %125 = vector.extract_strided_slice %7 {offsets = [0, 0], sizes = [32, 256], strides = [1, 1]} : vector<64x256xf32> to vector<32x256xf32>
    %cst_29 = arith.constant dense<0.000000e+00> : vector<2x256xf32>
    %126 = tpu.matmul %124, %125, %cst_29 {dimension_numbers = #tpu.dot_dimension_numbers<[1], [0], [0], [1], [0, 0, 1, 1], [], []>} : vector<2x32xf32>, vector<32x256xf32>, vector<2x256xf32> -> vector<2x256xf32>
    %127 = vector.extract_strided_slice %123 {offsets = [0, 32], sizes = [2, 32], strides = [1, 1]} : vector<2x64xf32> to vector<2x32xf32>
    %128 = vector.extract_strided_slice %7 {offsets = [32, 0], sizes = [32, 256], strides = [1, 1]} : vector<64x256xf32> to vector<32x256xf32>
    %cst_30 = arith.constant dense<0.000000e+00> : vector<2x256xf32>
    %129 = tpu.matmul %127, %128, %cst_30 {dimension_numbers = #tpu.dot_dimension_numbers<[1], [0], [0], [1], [0, 0, 1, 1], [], []>} : vector<2x32xf32>, vector<32x256xf32>, vector<2x256xf32> -> vector<2x256xf32>
    %cst_31 = arith.constant dense<0.000000e+00> : vector<2x256xf32>
    %130 = tpu.matmul %123, %6, %cst_31 {dimension_numbers = #tpu.dot_dimension_numbers<[1], [0], [0], [1], [0, 0, 1, 1], [], []>} : vector<2x64xf32>, vector<64x256xf32>, vector<2x256xf32> -> vector<2x256xf32>
    %131 = arith.addf %58, %130 : vector<2x256xf32>
    %132 = arith.negf %131 : vector<2x256xf32>
    %133 = math.exp %132 : vector<2x256xf32>
    %cst_32 = arith.constant 1.000000e+00 : f32
    %134 = vector.broadcast %cst_32 : f32 to vector<2x256xf32>
    %135 = arith.addf %134, %133 : vector<2x256xf32>
    %136 = arith.divf %134, %135 : vector<2x256xf32>
    %137 = math.tanh %131 : vector<2x256xf32>
    %138 = vector.extract_strided_slice %136 {offsets = [0, 0], sizes = [2, 64], strides = [1, 1]} : vector<2x256xf32> to vector<2x64xf32>
    %139 = vector.extract_strided_slice %136 {offsets = [0, 64], sizes = [2, 64], strides = [1, 1]} : vector<2x256xf32> to vector<2x64xf32>
    %140 = vector.extract_strided_slice %137 {offsets = [0, 128], sizes = [2, 64], strides = [1, 1]} : vector<2x256xf32> to vector<2x64xf32>
    %141 = vector.extract_strided_slice %136 {offsets = [0, 192], sizes = [2, 64], strides = [1, 1]} : vector<2x256xf32> to vector<2x64xf32>
    %142 = arith.mulf %139, %121 : vector<2x64xf32>
    %143 = arith.mulf %138, %140 : vector<2x64xf32>
    %144 = arith.addf %142, %143 : vector<2x64xf32>
    %145 = math.tanh %144 : vector<2x64xf32>
    %146 = arith.mulf %141, %145 : vector<2x64xf32>
    %147 = vector.extract_strided_slice %146 {offsets = [0, 0], sizes = [2, 32], strides = [1, 1]} : vector<2x64xf32> to vector<2x32xf32>
    %148 = vector.extract_strided_slice %7 {offsets = [0, 0], sizes = [32, 256], strides = [1, 1]} : vector<64x256xf32> to vector<32x256xf32>
    %cst_33 = arith.constant dense<0.000000e+00> : vector<2x256xf32>
    %149 = tpu.matmul %147, %148, %cst_33 {dimension_numbers = #tpu.dot_dimension_numbers<[1], [0], [0], [1], [0, 0, 1, 1], [], []>} : vector<2x32xf32>, vector<32x256xf32>, vector<2x256xf32> -> vector<2x256xf32>
    %150 = vector.extract_strided_slice %146 {offsets = [0, 32], sizes = [2, 32], strides = [1, 1]} : vector<2x64xf32> to vector<2x32xf32>
    %151 = vector.extract_strided_slice %7 {offsets = [32, 0], sizes = [32, 256], strides = [1, 1]} : vector<64x256xf32> to vector<32x256xf32>
    %cst_34 = arith.constant dense<0.000000e+00> : vector<2x256xf32>
    %152 = tpu.matmul %150, %151, %cst_34 {dimension_numbers = #tpu.dot_dimension_numbers<[1], [0], [0], [1], [0, 0, 1, 1], [], []>} : vector<2x32xf32>, vector<32x256xf32>, vector<2x256xf32> -> vector<2x256xf32>
    %153 = arith.addf %80, %152 : vector<2x256xf32>
    %154 = vector.broadcast %4 : vector<1x256xf32> to vector<2x256xf32>
    %155 = arith.addf %153, %154 : vector<2x256xf32>
    %156 = arith.addf %103, %129 : vector<2x256xf32>
    %157 = vector.broadcast %4 : vector<1x256xf32> to vector<2x256xf32>
    %158 = arith.addf %156, %157 : vector<2x256xf32>
    %159 = arith.addf %126, %106 : vector<2x256xf32>
    %160 = vector.broadcast %4 : vector<1x256xf32> to vector<2x256xf32>
    %161 = arith.addf %159, %160 : vector<2x256xf32>
    %162 = arith.addf %149, %83 : vector<2x256xf32>
    %163 = vector.broadcast %4 : vector<1x256xf32> to vector<2x256xf32>
    %164 = arith.addf %162, %163 : vector<2x256xf32>
    %165 = vector.shape_cast %28 : vector<1x256xi1> to vector<1x256xi1>
    %166 = vector.broadcast %165 : vector<1x256xi1> to vector<2x256xi1>
    %167 = arith.select %166, %155, %164 : vector<2x256xi1>, vector<2x256xf32>
    %168 = vector.shape_cast %28 : vector<1x256xi1> to vector<1x256xi1>
    %169 = vector.broadcast %168 : vector<1x256xi1> to vector<2x256xi1>
    %170 = arith.select %169, %158, %161 : vector<2x256xi1>, vector<2x256xf32>
    %171 = vector.shape_cast %28 : vector<1x256xi1> to vector<1x256xi1>
    %172 = vector.broadcast %171 : vector<1x256xi1> to vector<2x256xi1>
    %173 = arith.select %172, %161, %158 : vector<2x256xi1>, vector<2x256xf32>
    %174 = vector.shape_cast %28 : vector<1x256xi1> to vector<1x256xi1>
    %175 = vector.broadcast %174 : vector<1x256xi1> to vector<2x256xi1>
    %176 = arith.select %175, %164, %155 : vector<2x256xi1>, vector<2x256xf32>
    %cst_35 = arith.constant 0.000000e+00 : f32
    %177 = vector.broadcast %cst_35 : f32 to vector<2x64xf32>
    %cst_36 = arith.constant 0.000000e+00 : f32
    %178 = vector.broadcast %cst_36 : f32 to vector<2x64xf32>
    %cst_37 = arith.constant dense<0.000000e+00> : vector<2x256xf32>
    %179 = tpu.matmul %177, %8, %cst_37 {dimension_numbers = #tpu.dot_dimension_numbers<[1], [0], [0], [1], [0, 0, 1, 1], [], []>} : vector<2x64xf32>, vector<64x256xf32>, vector<2x256xf32> -> vector<2x256xf32>
    %180 = arith.addf %167, %179 : vector<2x256xf32>
    %181 = arith.negf %180 : vector<2x256xf32>
    %182 = math.exp %181 : vector<2x256xf32>
    %cst_38 = arith.constant 1.000000e+00 : f32
    %183 = vector.broadcast %cst_38 : f32 to vector<2x256xf32>
    %184 = arith.addf %183, %182 : vector<2x256xf32>
    %185 = arith.divf %183, %184 : vector<2x256xf32>
    %186 = math.tanh %180 : vector<2x256xf32>
    %187 = vector.extract_strided_slice %185 {offsets = [0, 0], sizes = [2, 64], strides = [1, 1]} : vector<2x256xf32> to vector<2x64xf32>
    %188 = vector.extract_strided_slice %185 {offsets = [0, 64], sizes = [2, 64], strides = [1, 1]} : vector<2x256xf32> to vector<2x64xf32>
    %189 = vector.extract_strided_slice %186 {offsets = [0, 128], sizes = [2, 64], strides = [1, 1]} : vector<2x256xf32> to vector<2x64xf32>
    %190 = vector.extract_strided_slice %185 {offsets = [0, 192], sizes = [2, 64], strides = [1, 1]} : vector<2x256xf32> to vector<2x64xf32>
    %191 = arith.mulf %188, %178 : vector<2x64xf32>
    %192 = arith.mulf %187, %189 : vector<2x64xf32>
    %193 = arith.addf %191, %192 : vector<2x64xf32>
    %194 = math.tanh %193 : vector<2x64xf32>
    %195 = arith.mulf %190, %194 : vector<2x64xf32>
    %cst_39 = arith.constant dense<0.000000e+00> : vector<2x256xf32>
    %196 = tpu.matmul %195, %8, %cst_39 {dimension_numbers = #tpu.dot_dimension_numbers<[1], [0], [0], [1], [0, 0, 1, 1], [], []>} : vector<2x64xf32>, vector<64x256xf32>, vector<2x256xf32> -> vector<2x256xf32>
    %197 = arith.addf %170, %196 : vector<2x256xf32>
    %198 = arith.negf %197 : vector<2x256xf32>
    %199 = math.exp %198 : vector<2x256xf32>
    %cst_40 = arith.constant 1.000000e+00 : f32
    %200 = vector.broadcast %cst_40 : f32 to vector<2x256xf32>
    %201 = arith.addf %200, %199 : vector<2x256xf32>
    %202 = arith.divf %200, %201 : vector<2x256xf32>
    %203 = math.tanh %197 : vector<2x256xf32>
    %204 = vector.extract_strided_slice %202 {offsets = [0, 0], sizes = [2, 64], strides = [1, 1]} : vector<2x256xf32> to vector<2x64xf32>
    %205 = vector.extract_strided_slice %202 {offsets = [0, 64], sizes = [2, 64], strides = [1, 1]} : vector<2x256xf32> to vector<2x64xf32>
    %206 = vector.extract_strided_slice %203 {offsets = [0, 128], sizes = [2, 64], strides = [1, 1]} : vector<2x256xf32> to vector<2x64xf32>
    %207 = vector.extract_strided_slice %202 {offsets = [0, 192], sizes = [2, 64], strides = [1, 1]} : vector<2x256xf32> to vector<2x64xf32>
    %208 = arith.mulf %205, %193 : vector<2x64xf32>
    %209 = arith.mulf %204, %206 : vector<2x64xf32>
    %210 = arith.addf %208, %209 : vector<2x64xf32>
    %211 = math.tanh %210 : vector<2x64xf32>
    %212 = arith.mulf %207, %211 : vector<2x64xf32>
    %cst_41 = arith.constant dense<0.000000e+00> : vector<2x256xf32>
    %213 = tpu.matmul %212, %8, %cst_41 {dimension_numbers = #tpu.dot_dimension_numbers<[1], [0], [0], [1], [0, 0, 1, 1], [], []>} : vector<2x64xf32>, vector<64x256xf32>, vector<2x256xf32> -> vector<2x256xf32>
    %214 = arith.addf %173, %213 : vector<2x256xf32>
    %215 = arith.negf %214 : vector<2x256xf32>
    %216 = math.exp %215 : vector<2x256xf32>
    %cst_42 = arith.constant 1.000000e+00 : f32
    %217 = vector.broadcast %cst_42 : f32 to vector<2x256xf32>
    %218 = arith.addf %217, %216 : vector<2x256xf32>
    %219 = arith.divf %217, %218 : vector<2x256xf32>
    %220 = math.tanh %214 : vector<2x256xf32>
    %221 = vector.extract_strided_slice %219 {offsets = [0, 0], sizes = [2, 64], strides = [1, 1]} : vector<2x256xf32> to vector<2x64xf32>
    %222 = vector.extract_strided_slice %219 {offsets = [0, 64], sizes = [2, 64], strides = [1, 1]} : vector<2x256xf32> to vector<2x64xf32>
    %223 = vector.extract_strided_slice %220 {offsets = [0, 128], sizes = [2, 64], strides = [1, 1]} : vector<2x256xf32> to vector<2x64xf32>
    %224 = vector.extract_strided_slice %219 {offsets = [0, 192], sizes = [2, 64], strides = [1, 1]} : vector<2x256xf32> to vector<2x64xf32>
    %225 = arith.mulf %222, %210 : vector<2x64xf32>
    %226 = arith.mulf %221, %223 : vector<2x64xf32>
    %227 = arith.addf %225, %226 : vector<2x64xf32>
    %228 = math.tanh %227 : vector<2x64xf32>
    %229 = arith.mulf %224, %228 : vector<2x64xf32>
    %cst_43 = arith.constant dense<0.000000e+00> : vector<2x256xf32>
    %230 = tpu.matmul %229, %8, %cst_43 {dimension_numbers = #tpu.dot_dimension_numbers<[1], [0], [0], [1], [0, 0, 1, 1], [], []>} : vector<2x64xf32>, vector<64x256xf32>, vector<2x256xf32> -> vector<2x256xf32>
    %231 = arith.addf %176, %230 : vector<2x256xf32>
    %232 = arith.negf %231 : vector<2x256xf32>
    %233 = math.exp %232 : vector<2x256xf32>
    %cst_44 = arith.constant 1.000000e+00 : f32
    %234 = vector.broadcast %cst_44 : f32 to vector<2x256xf32>
    %235 = arith.addf %234, %233 : vector<2x256xf32>
    %236 = arith.divf %234, %235 : vector<2x256xf32>
    %237 = math.tanh %231 : vector<2x256xf32>
    %238 = vector.extract_strided_slice %236 {offsets = [0, 0], sizes = [2, 64], strides = [1, 1]} : vector<2x256xf32> to vector<2x64xf32>
    %239 = vector.extract_strided_slice %236 {offsets = [0, 64], sizes = [2, 64], strides = [1, 1]} : vector<2x256xf32> to vector<2x64xf32>
    %240 = vector.extract_strided_slice %237 {offsets = [0, 128], sizes = [2, 64], strides = [1, 1]} : vector<2x256xf32> to vector<2x64xf32>
    %241 = vector.extract_strided_slice %236 {offsets = [0, 192], sizes = [2, 64], strides = [1, 1]} : vector<2x256xf32> to vector<2x64xf32>
    %242 = arith.mulf %239, %227 : vector<2x64xf32>
    %243 = arith.mulf %238, %240 : vector<2x64xf32>
    %244 = arith.addf %242, %243 : vector<2x64xf32>
    %245 = math.tanh %244 : vector<2x64xf32>
    %246 = arith.mulf %241, %245 : vector<2x64xf32>
    %247 = vector.extract_strided_slice %246 {offsets = [0, 0], sizes = [2, 32], strides = [1, 1]} : vector<2x64xf32> to vector<2x32xf32>
    %248 = vector.extract_strided_slice %9 {offsets = [0, 0], sizes = [32, 128], strides = [1, 1]} : vector<64x128xf32> to vector<32x128xf32>
    %cst_45 = arith.constant dense<0.000000e+00> : vector<2x128xf32>
    %249 = tpu.matmul %247, %248, %cst_45 {dimension_numbers = #tpu.dot_dimension_numbers<[1], [0], [0], [1], [0, 0, 1, 1], [], []>} : vector<2x32xf32>, vector<32x128xf32>, vector<2x128xf32> -> vector<2x128xf32>
    %250 = vector.extract_strided_slice %195 {offsets = [0, 32], sizes = [2, 32], strides = [1, 1]} : vector<2x64xf32> to vector<2x32xf32>
    %251 = vector.extract_strided_slice %9 {offsets = [32, 0], sizes = [32, 128], strides = [1, 1]} : vector<64x128xf32> to vector<32x128xf32>
    %cst_46 = arith.constant dense<0.000000e+00> : vector<2x128xf32>
    %252 = tpu.matmul %250, %251, %cst_46 {dimension_numbers = #tpu.dot_dimension_numbers<[1], [0], [0], [1], [0, 0, 1, 1], [], []>} : vector<2x32xf32>, vector<32x128xf32>, vector<2x128xf32> -> vector<2x128xf32>
    %253 = arith.addf %249, %252 : vector<2x128xf32>
    %254 = vector.broadcast %5 : vector<1x128xf32> to vector<2x128xf32>
    %255 = arith.addf %253, %254 : vector<2x128xf32>
    %c0_47 = arith.constant 0 : index
    %c0_48 = arith.constant 0 : index
    %256 = vector.load %arg3[%c0_47, %c0_48] : memref<2x128xf32, #tpu.memory_space<vmem>>, vector<2x128xf32>
    tpu.vector_store %arg3[%c0_47, %c0_48], %255 {strides = array<i32>} : memref<2x128xf32, #tpu.memory_space<vmem>>, vector<2x128xf32>,
    return
  }
}

</mosaic_0001>

<llo_original>
// kernel: tpu_custom_call.1
$region0: #{tpu_custom_call.1}
  #allocation0 [shape = 'u32[]', space=smem, size = 0x4, offset = 0x4, fixed_abs, tag = 'smem constant byte address 0x4 - core index']
  #allocation1 [shape = 'u32[144,128]{1,0:T(1,128)}', space=vmem, size = 0x12000, scoped, tag = 'internal scratch']
  %s0 = inlined_call_operand.hbm [shape: f32[8,1024], index: 0, kind: input, shape index: {}]
  %s1 = inlined_call_operand.hbm [shape: bf16[1280,256], index: 1, kind: input, shape index: {}]
  %s2 = inlined_call_operand.hbm [shape: f32[264,256], index: 2, kind: input, shape index: {}]
  %s3 = inlined_call_operand.hbm [shape: f32[2,128], index: 3, kind: output, shape index: {}]
  %s4 = sld [smem:[#allocation0]]
  $region34: #{tpu_custom_call.1} parent=0
    _
  %s6 = ssub.s32 1, %s4
  %s7 = scalar_select 0, %s6, %s4
  $region1: #{tpu_custom_call.1} parent=0
    #allocation2 [shape = 'u8[32768]{0}', space=vmem, size = 0x8000, scoped, tag = 'input window, operand 0, single buffered']
    #allocation3 [shape = 's32[1]{0}', space=sflag, size = 0x4, scoped, tag = 'scoped memory for tpu_custom_call.1']
    #allocation4 [shape = 's32[1]{0}', space=sflag, size = 0x4, scoped, tag = 'scoped memory for tpu_custom_call.1']
    #allocation5 [shape = 'u8[655360]{0}', space=vmem, size = 0xa0000, scoped, tag = 'input window, operand 1, single buffered']
    #allocation6 [shape = 's32[1]{0}', space=sflag, size = 0x4, scoped, tag = 'scoped memory for tpu_custom_call.1']
    #allocation7 [shape = 'u8[270336]{0}', space=vmem, size = 0x42000, scoped, tag = 'input window, operand 2, single buffered']
    #allocation8 [shape = 'u8[1024]{0}', space=vmem, size = 0x400, scoped, tag = 'output window, operand 0, single buffered']
    %8 = vsyncpa [#allocation3], 0
    %9 = vsyncpa [#allocation6], 0
    %10 = vsyncpa [#allocation4], 0
    // Predicated region
    $region2: #{tpu_custom_call.1} parent=1 // pred_check
      _
    $region3: #{tpu_custom_call.1} parent=1 // pred_check_branch
      %12 = sbr.rel (0) target = $region5
    $region4: #{tpu_custom_call.1} parent=1 // pred_region
      %s14 = ssub.s32 1024, 1024
      %15 = vsyncadd [#allocation3], %s14
      %s17 = sshll.u32 [#allocation2], 4
      %s18 = int_to_ptr.vmem [resolvable:$true] %s17
      %20 = dma.hbm_to_vmem [thread:$0]  %s0, 1024, %s18, [#allocation3]
    $region5: #{tpu_custom_call.1} parent=1 // pred_fallthru
      _
    // Predicated region
    $region6: #{tpu_custom_call.1} parent=1 // pred_check
      _
    $region7: #{tpu_custom_call.1} parent=1 // pred_check_branch
      %22 = sbr.rel (0) target = $region9
    $region8: #{tpu_custom_call.1} parent=1 // pred_region
      %s24 = ssub.s32 20480, 20480
      %25 = vsyncadd [#allocation6], %s24
      %s26 = sshll.u32 [#allocation5], 4
      %s27 = int_to_ptr.vmem [resolvable:$true] %s26
      %32 = dma.hbm_to_vmem [thread:$0]  %s1, 20480, %s27, [#allocation6], 128, 128, 8
    $region9: #{tpu_custom_call.1} parent=1 // pred_fallthru
      _
    // Predicated region
    $region10: #{tpu_custom_call.1} parent=1 // pred_check
      _
    $region11: #{tpu_custom_call.1} parent=1 // pred_check_branch
      %34 = sbr.rel (0) target = $region13
    $region12: #{tpu_custom_call.1} parent=1 // pred_region
      %s36 = ssub.s32 8448, 8448
      %37 = vsyncadd [#allocation6], %s36
      %s38 = sshll.u32 [#allocation7], 4
      %s39 = int_to_ptr.vmem [resolvable:$true] %s38
      %44 = dma.hbm_to_vmem [thread:$0]  %s2, 8448, %s39, [#allocation6], 256, 256, 16
    $region13: #{tpu_custom_call.1} parent=1 // pred_fallthru
      _
    // Predicated region
    $region14: #{tpu_custom_call.1} parent=1 // pred_check
      _
    $region15: #{tpu_custom_call.1} parent=1 // pred_check_branch
      %46 = sbr.rel (0) target = $region17
    $region16: #{tpu_custom_call.1} parent=1 // pred_region
      %47 = dma.done [#allocation3], 1024
    $region17: #{tpu_custom_call.1} parent=1 // pred_fallthru
      _
    // Predicated region
    $region18: #{tpu_custom_call.1} parent=1 // pred_check
      _
    $region19: #{tpu_custom_call.1} parent=1 // pred_check_branch
      %49 = sbr.rel (0) target = $region21
    $region20: #{tpu_custom_call.1} parent=1 // pred_region
      %50 = dma.done [#allocation6], 20480
    $region21: #{tpu_custom_call.1} parent=1 // pred_fallthru
      _
    // Predicated region
    $region22: #{tpu_custom_call.1} parent=1 // pred_check
      _
    $region23: #{tpu_custom_call.1} parent=1 // pred_check_branch
      %52 = sbr.rel (0) target = $region25
    $region24: #{tpu_custom_call.1} parent=1 // pred_region
      %53 = dma.done [#allocation6], 8448
    $region25: #{tpu_custom_call.1} parent=1 // pred_fallthru
      _
    %v54 = vld [vmem:[#allocation5] sm:$0xff]
    %v55 = vld [vmem:[#allocation5 + $0x8] sm:$0xff]
    %v56 = vld [vmem:[#allocation5 + $0x10] sm:$0xff]
    %v57 = vld [vmem:[#allocation5 + $0x18] sm:$0xff]
    %v58 = vld [vmem:[#allocation5 + $0x20] sm:$0xff]
    %v59 = vld [vmem:[#allocation5 + $0x28] sm:$0xff]
    %v60 = vld [vmem:[#allocation5 + $0x30] sm:$0xff]
    %v61 = vld [vmem:[#allocation5 + $0x38] sm:$0xff]
    %v62 = vld [vmem:[#allocation5 + $0x40] sm:$0xff]
    %v63 = vld [vmem:[#allocation5 + $0x48] sm:$0xff]
    %v64 = vld [vmem:[#allocation5 + $0x50] sm:$0xff]
    %v65 = vld [vmem:[#allocation5 + $0x58] sm:$0xff]
    %v66 = vld [vmem:[#allocation5 + $0x60] sm:$0xff]
    %v67 = vld [vmem:[#allocation5 + $0x68] sm:$0xff]
    %v68 = vld [vmem:[#allocation5 + $0x70] sm:$0xff]
    %v69 = vld [vmem:[#allocation5 + $0x78] sm:$0xff]
    %v70 = vld [vmem:[#allocation5 + $0x80] sm:$0xff]
    %v71 = vld [vmem:[#allocation5 + $0x88] sm:$0xff]
    %v72 = vld [vmem:[#allocation5 + $0x90] sm:$0xff]
    %v73 = vld [vmem:[#allocation5 + $0x98] sm:$0xff]
    %v74 = vld [vmem:[#allocation5 + $0xa0] sm:$0xff]
    %v75 = vld [vmem:[#allocation5 + $0xa8] sm:$0xff]
    %v76 = vld [vmem:[#allocation5 + $0xb0] sm:$0xff]
    %v77 = vld [vmem:[#allocation5 + $0xb8] sm:$0xff]
    %v78 = vld [vmem:[#allocation5 + $0xc0] sm:$0xff]
    %v79 = vld [vmem:[#allocation5 + $0xc8] sm:$0xff]
    %v80 = vld [vmem:[#allocation5 + $0xd0] sm:$0xff]
    %v81 = vld [vmem:[#allocation5 + $0xd8] sm:$0xff]
    %v82 = vld [vmem:[#allocation5 + $0xe0] sm:$0xff]
    %v83 = vld [vmem:[#allocation5 + $0xe8] sm:$0xff]
    %v84 = vld [vmem:[#allocation5 + $0xf0] sm:$0xff]
    %v85 = vld [vmem:[#allocation5 + $0xf8] sm:$0xff]
    %v86 = vld [vmem:[#allocation5 + $0x100] sm:$0xff]
    %v87 = vld [vmem:[#allocation5 + $0x108] sm:$0xff]
    %v88 = vld [vmem:[#allocation5 + $0x110] sm:$0xff]
    %v89 = vld [vmem:[#allocation5 + $0x118] sm:$0xff]
    %v90 = vld [vmem:[#allocation5 + $0x120] sm:$0xff]
    %v91 = vld [vmem:[#allocation5 + $0x128] sm:$0xff]
    %v92 = vld [vmem:[#allocation5 + $0x130] sm:$0xff]
    %v93 = vld [vmem:[#allocation5 + $0x138] sm:$0xff]
    %v94 = vld [vmem:[#allocation5 + $0x140] sm:$0xff]
    %v95 = vld [vmem:[#allocation5 + $0x148] sm:$0xff]
    %v96 = vld [vmem:[#allocation5 + $0x150] sm:$0xff]
    %v97 = vld [vmem:[#allocation5 + $0x158] sm:$0xff]
    %v98 = vld [vmem:[#allocation5 + $0x160] sm:$0xff]
    %v99 = vld [vmem:[#allocation5 + $0x168] sm:$0xff]
    %v100 = vld [vmem:[#allocation5 + $0x170] sm:$0xff]
    %v101 = vld [vmem:[#allocation5 + $0x178] sm:$0xff]
    %v102 = vld [vmem:[#allocation5 + $0x180] sm:$0xff]
    %v103 = vld [vmem:[#allocation5 + $0x188] sm:$0xff]
    %v104 = vld [vmem:[#allocation5 + $0x190] sm:$0xff]
    %v105 = vld [vmem:[#allocation5 + $0x198] sm:$0xff]
    %v106 = vld [vmem:[#allocation5 + $0x1a0] sm:$0xff]
    %v107 = vld [vmem:[#allocation5 + $0x1a8] sm:$0xff]
    %v108 = vld [vmem:[#allocation5 + $0x1b0] sm:$0xff]
    %v109 = vld [vmem:[#allocation5 + $0x1b8] sm:$0xff]
    %v110 = vld [vmem:[#allocation5 + $0x1c0] sm:$0xff]
    %v111 = vld [vmem:[#allocation5 + $0x1c8] sm:$0xff]
    %v112 = vld [vmem:[#allocation5 + $0x1d0] sm:$0xff]
    %v113 = vld [vmem:[#allocation5 + $0x1d8] sm:$0xff]
    %v114 = vld [vmem:[#allocation5 + $0x1e0] sm:$0xff]
    %v115 = vld [vmem:[#allocation5 + $0x1e8] sm:$0xff]
    %v116 = vld [vmem:[#allocation5 + $0x1f0] sm:$0xff]
    %v117 = vld [vmem:[#allocation5 + $0x1f8] sm:$0xff]
    %v118 = vld [vmem:[#allocation5 + $0x200] sm:$0xff]
    %v119 = vld [vmem:[#allocation5 + $0x208] sm:$0xff]
    %v120 = vld [vmem:[#allocation5 + $0x210] sm:$0xff]
    %v121 = vld [vmem:[#allocation5 + $0x218] sm:$0xff]
    %v122 = vld [vmem:[#allocation5 + $0x220] sm:$0xff]
    %v123 = vld [vmem:[#allocation5 + $0x228] sm:$0xff]
    %v124 = vld [vmem:[#allocation5 + $0x230] sm:$0xff]
    %v125 = vld [vmem:[#allocation5 + $0x238] sm:$0xff]
    %v126 = vld [vmem:[#allocation5 + $0x240] sm:$0xff]
    %v127 = vld [vmem:[#allocation5 + $0x248] sm:$0xff]
    %v128 = vld [vmem:[#allocation5 + $0x250] sm:$0xff]
    %v129 = vld [vmem:[#allocation5 + $0x258] sm:$0xff]
    %v130 = vld [vmem:[#allocation5 + $0x260] sm:$0xff]
    %v131 = vld [vmem:[#allocation5 + $0x268] sm:$0xff]
    %v132 = vld [vmem:[#allocation5 + $0x270] sm:$0xff]
    %v133 = vld [vmem:[#allocation5 + $0x278] sm:$0xff]
    %v134 = vld [vmem:[#allocation5 + $0x280] sm:$0xff]
    %v135 = vld [vmem:[#allocation5 + $0x288] sm:$0xff]
    %v136 = vld [vmem:[#allocation5 + $0x290] sm:$0xff]
    %v137 = vld [vmem:[#allocation5 + $0x298] sm:$0xff]
    %v138 = vld [vmem:[#allocation5 + $0x2a0] sm:$0xff]
    %v139 = vld [vmem:[#allocation5 + $0x2a8] sm:$0xff]
    %v140 = vld [vmem:[#allocation5 + $0x2b0] sm:$0xff]
    %v141 = vld [vmem:[#allocation5 + $0x2b8] sm:$0xff]
    %v142 = vld [vmem:[#allocation5 + $0x2c0] sm:$0xff]
    %v143 = vld [vmem:[#allocation5 + $0x2c8] sm:$0xff]
    %v144 = vld [vmem:[#allocation5 + $0x2d0] sm:$0xff]
    %v145 = vld [vmem:[#allocation5 + $0x2d8] sm:$0xff]
    %v146 = vld [vmem:[#allocation5 + $0x2e0] sm:$0xff]
    %v147 = vld [vmem:[#allocation5 + $0x2e8] sm:$0xff]
    %v148 = vld [vmem:[#allocation5 + $0x2f0] sm:$0xff]
    %v149 = vld [vmem:[#allocation5 + $0x2f8] sm:$0xff]
    %v150 = vld [vmem:[#allocation5 + $0x300] sm:$0xff]
    %v151 = vld [vmem:[#allocation5 + $0x308] sm:$0xff]
    %v152 = vld [vmem:[#allocation5 + $0x310] sm:$0xff]
    %v153 = vld [vmem:[#allocation5 + $0x318] sm:$0xff]
    %v154 = vld [vmem:[#allocation5 + $0x320] sm:$0xff]
    %v155 = vld [vmem:[#allocation5 + $0x328] sm:$0xff]
    %v156 = vld [vmem:[#allocation5 + $0x330] sm:$0xff]
    %v157 = vld [vmem:[#allocation5 + $0x338] sm:$0xff]
    %v158 = vld [vmem:[#allocation5 + $0x340] sm:$0xff]
    %v159 = vld [vmem:[#allocation5 + $0x348] sm:$0xff]
    %v160 = vld [vmem:[#allocation5 + $0x350] sm:$0xff]
    %v161 = vld [vmem:[#allocation5 + $0x358] sm:$0xff]
    %v162 = vld [vmem:[#allocation5 + $0x360] sm:$0xff]
    %v163 = vld [vmem:[#allocation5 + $0x368] sm:$0xff]
    %v164 = vld [vmem:[#allocation5 + $0x370] sm:$0xff]
    %v165 = vld [vmem:[#allocation5 + $0x378] sm:$0xff]
    %v166 = vld [vmem:[#allocation5 + $0x380] sm:$0xff]
    %v167 = vld [vmem:[#allocation5 + $0x388] sm:$0xff]
    %v168 = vld [vmem:[#allocation5 + $0x390] sm:$0xff]
    %v169 = vld [vmem:[#allocation5 + $0x398] sm:$0xff]
    %v170 = vld [vmem:[#allocation5 + $0x3a0] sm:$0xff]
    %v171 = vld [vmem:[#allocation5 + $0x3a8] sm:$0xff]
    %v172 = vld [vmem:[#allocation5 + $0x3b0] sm:$0xff]
    %v173 = vld [vmem:[#allocation5 + $0x3b8] sm:$0xff]
    %v174 = vld [vmem:[#allocation5 + $0x3c0] sm:$0xff]
    %v175 = vld [vmem:[#allocation5 + $0x3c8] sm:$0xff]
    %v176 = vld [vmem:[#allocation5 + $0x3d0] sm:$0xff]
    %v177 = vld [vmem:[#allocation5 + $0x3d8] sm:$0xff]
    %v178 = vld [vmem:[#allocation5 + $0x3e0] sm:$0xff]
    %v179 = vld [vmem:[#allocation5 + $0x3e8] sm:$0xff]
    %v180 = vld [vmem:[#allocation5 + $0x3f0] sm:$0xff]
    %v181 = vld [vmem:[#allocation5 + $0x3f8] sm:$0xff]
    %v182 = vld [vmem:[#allocation5 + $0x400] sm:$0xff]
    %v183 = vld [vmem:[#allocation5 + $0x408] sm:$0xff]
    %v184 = vld [vmem:[#allocation5 + $0x410] sm:$0xff]
    %v185 = vld [vmem:[#allocation5 + $0x418] sm:$0xff]
    %v186 = vld [vmem:[#allocation5 + $0x420] sm:$0xff]
    %v187 = vld [vmem:[#allocation5 + $0x428] sm:$0xff]
    %v188 = vld [vmem:[#allocation5 + $0x430] sm:$0xff]
    %v189 = vld [vmem:[#allocation5 + $0x438] sm:$0xff]
    %v190 = vld [vmem:[#allocation5 + $0x440] sm:$0xff]
    %v191 = vld [vmem:[#allocation5 + $0x448] sm:$0xff]
    %v192 = vld [vmem:[#allocation5 + $0x450] sm:$0xff]
    %v193 = vld [vmem:[#allocation5 + $0x458] sm:$0xff]
    %v194 = vld [vmem:[#allocation5 + $0x460] sm:$0xff]
    %v195 = vld [vmem:[#allocation5 + $0x468] sm:$0xff]
    %v196 = vld [vmem:[#allocation5 + $0x470] sm:$0xff]
    %v197 = vld [vmem:[#allocation5 + $0x478] sm:$0xff]
    %v198 = vld [vmem:[#allocation5 + $0x480] sm:$0xff]
    %v199 = vld [vmem:[#allocation5 + $0x488] sm:$0xff]
    %v200 = vld [vmem:[#allocation5 + $0x490] sm:$0xff]
    %v201 = vld [vmem:[#allocation5 + $0x498] sm:$0xff]
    %v202 = vld [vmem:[#allocation5 + $0x4a0] sm:$0xff]
    %v203 = vld [vmem:[#allocation5 + $0x4a8] sm:$0xff]
    %v204 = vld [vmem:[#allocation5 + $0x4b0] sm:$0xff]
    %v205 = vld [vmem:[#allocation5 + $0x4b8] sm:$0xff]
    %v206 = vld [vmem:[#allocation5 + $0x4c0] sm:$0xff]
    %v207 = vld [vmem:[#allocation5 + $0x4c8] sm:$0xff]
    %v208 = vld [vmem:[#allocation5 + $0x4d0] sm:$0xff]
    %v209 = vld [vmem:[#allocation5 + $0x4d8] sm:$0xff]
    %v210 = vld [vmem:[#allocation5 + $0x4e0] sm:$0xff]
    %v211 = vld [vmem:[#allocation5 + $0x4e8] sm:$0xff]
    %v212 = vld [vmem:[#allocation5 + $0x4f0] sm:$0xff]
    %v213 = vld [vmem:[#allocation5 + $0x4f8] sm:$0xff]
    %v214 = vld [vmem:[#allocation7] ss:$8 sm:$0x3]
    %s215 = scalar_lea.vmem [#allocation7], 1
    %v216 = vld [vmem:[%s215] ss:$8 sm:$0x3]
    %s217 = scalar_lea.vmem [#allocation7], 2
    %v218 = vld [vmem:[%s217] ss:$8 sm:$0x3]
    %v219 = vld [vmem:[#allocation7 + $0x3] ss:$0 sm:$0xff]
    %v220 = vld [vmem:[#allocation7 + $0x10] sm:$0xff]
    %v221 = vld [vmem:[#allocation7 + $0x18] sm:$0xff]
    %v222 = vld [vmem:[#allocation7 + $0x20] sm:$0xff]
    %v223 = vld [vmem:[#allocation7 + $0x28] sm:$0xff]
    %v224 = vld [vmem:[#allocation7 + $0x30] sm:$0xff]
    %v225 = vld [vmem:[#allocation7 + $0x38] sm:$0xff]
    %v226 = vld [vmem:[#allocation7 + $0x40] sm:$0xff]
    %v227 = vld [vmem:[#allocation7 + $0x48] sm:$0xff]
    %v228 = vld [vmem:[#allocation7 + $0x50] sm:$0xff]
    %v229 = vld [vmem:[#allocation7 + $0x58] sm:$0xff]
    %v230 = vld [vmem:[#allocation7 + $0x60] sm:$0xff]
    %v231 = vld [vmem:[#allocation7 + $0x68] sm:$0xff]
    %v232 = vld [vmem:[#allocation7 + $0x70] sm:$0xff]
    %v233 = vld [vmem:[#allocation7 + $0x78] sm:$0xff]
    %v234 = vld [vmem:[#allocation7 + $0x80] sm:$0xff]
    %v235 = vld [vmem:[#allocation7 + $0x88] sm:$0xff]
    %v236 = vld [vmem:[#allocation7 + $0x90] sm:$0xff]
    %v237 = vld [vmem:[#allocation7 + $0x98] sm:$0xff]
    %v238 = vld [vmem:[#allocation7 + $0xa0] sm:$0xff]
    %v239 = vld [vmem:[#allocation7 + $0xa8] sm:$0xff]
    %v240 = vld [vmem:[#allocation7 + $0xb0] sm:$0xff]
    %v241 = vld [vmem:[#allocation7 + $0xb8] sm:$0xff]
    %v242 = vld [vmem:[#allocation7 + $0xc0] sm:$0xff]
    %v243 = vld [vmem:[#allocation7 + $0xc8] sm:$0xff]
    %v244 = vld [vmem:[#allocation7 + $0xd0] sm:$0xff]
    %v245 = vld [vmem:[#allocation7 + $0xd8] sm:$0xff]
    %v246 = vld [vmem:[#allocation7 + $0xe0] sm:$0xff]
    %v247 = vld [vmem:[#allocation7 + $0xe8] sm:$0xff]
    %v248 = vld [vmem:[#allocation7 + $0xf0] sm:$0xff]
    %v249 = vld [vmem:[#allocation7 + $0xf8] sm:$0xff]
    %v250 = vld [vmem:[#allocation7 + $0x100] sm:$0xff]
    %v251 = vld [vmem:[#allocation7 + $0x108] sm:$0xff]
    %v252 = vld [vmem:[#allocation7 + $0x110] sm:$0xff]
    %v253 = vld [vmem:[#allocation7 + $0x118] sm:$0xff]
    %v254 = vld [vmem:[#allocation7 + $0x120] sm:$0xff]
    %v255 = vld [vmem:[#allocation7 + $0x128] sm:$0xff]
    %v256 = vld [vmem:[#allocation7 + $0x130] sm:$0xff]
    %v257 = vld [vmem:[#allocation7 + $0x138] sm:$0xff]
    %v258 = vld [vmem:[#allocation7 + $0x140] sm:$0xff]
    %v259 = vld [vmem:[#allocation7 + $0x148] sm:$0xff]
    %v260 = vld [vmem:[#allocation7 + $0x150] sm:$0xff]
    %v261 = vld [vmem:[#allocation7 + $0x158] sm:$0xff]
    %v262 = vld [vmem:[#allocation7 + $0x160] sm:$0xff]
    %v263 = vld [vmem:[#allocation7 + $0x168] sm:$0xff]
    %v264 = vld [vmem:[#allocation7 + $0x170] sm:$0xff]
    %v265 = vld [vmem:[#allocation7 + $0x178] sm:$0xff]
    %v266 = vld [vmem:[#allocation7 + $0x180] sm:$0xff]
    %v267 = vld [vmem:[#allocation7 + $0x188] sm:$0xff]
    %v268 = vld [vmem:[#allocation7 + $0x190] sm:$0xff]
    %v269 = vld [vmem:[#allocation7 + $0x1a0] sm:$0xff]
    %v270 = vld [vmem:[#allocation7 + $0x1b0] sm:$0xff]
    %v271 = vld [vmem:[#allocation7 + $0x1c0] sm:$0xff]
    %v272 = vld [vmem:[#allocation7 + $0x1d0] sm:$0xff]
    %v273 = vld [vmem:[#allocation7 + $0x1e0] sm:$0xff]
    %v274 = vld [vmem:[#allocation7 + $0x1f0] sm:$0xff]
    %v275 = vld [vmem:[#allocation7 + $0x200] sm:$0xff]
    %v276 = vlaneseq
    %v277 = vand.u32 %v276, 127
    %v278 = vadd.s32 %v277, 128
    %vm279 = vcmp.lt.s32.totalorder %v277, 0
    %v280 = vsub.s32 0, %v277
    %v281 = vsel %vm279, %v280, %v277
    %v282 = vshrl.u32 %v281, 6
    %v283 = vand.u32 %v281, 63
    %v284 = vsub.s32 0, %v283
    %v285 = vsel %vm279, %v284, %v283
    %vm286 = vcmp.lt.s32.totalorder %v278, 0
    %v287 = vsub.s32 0, %v278
    %v288 = vsel %vm286, %v287, %v278
    %v289 = vshrl.u32 %v288, 6
    %v290 = vand.u32 %v288, 63
    %v291 = vsub.s32 0, %v290
    %v292 = vsel %vm286, %v291, %v290
    %vm293 = vcmp.ne.s32.totalorder %v285, 0
    %vm294 = vcmp.ne.s32.totalorder %v292, 0
    %vm295 = vcmp.lt.s32.totalorder %v285, 0
    %vm296 = vcmp.lt.s32.totalorder %v292, 0
    %vm297 = vmand %vm295, %vm293
    %vm298 = vmand %vm296, %vm294
    %v299 = vadd.s32 %v285, 64
    %v300 = vadd.s32 %v292, 64
    %v301 = vsel %vm297, %v299, %v285
    %v302 = vsel %vm298, %v300, %v292
    %vm303 = vcmp.lt.s32.totalorder %v301, 32
    %vm304 = vcmp.lt.s32.totalorder %v302, 32
    %v305 = vld [vmem:[#allocation2] sm:$0xff]
    %v306 = vld [vmem:[#allocation2 + $0x8] sm:$0xff]
    %v307 = vld [vmem:[#allocation2 + $0x10] sm:$0xff]
    %v308 = vld [vmem:[#allocation2 + $0x18] sm:$0xff]
    %v309 = vld [vmem:[#allocation2 + $0x20] sm:$0xff]
    %v310 = vld [vmem:[#allocation2 + $0x28] sm:$0xff]
    %v311 = vld [vmem:[#allocation2 + $0x30] sm:$0xff]
    %v312 = vld [vmem:[#allocation2 + $0x38] sm:$0xff]
    %v313 = vpack.c.bf16 %v305, %v305
    %v314 = vpack.c.bf16 %v306, %v306
    %v315 = vpack.c.bf16 %v307, %v307
    %v316 = vpack.c.bf16 %v308, %v308
    %v317 = vpack.c.bf16 %v309, %v309
    %v318 = vpack.c.bf16 %v310, %v310
    %v319 = vpack.c.bf16 %v311, %v311
    %v320 = vpack.c.bf16 %v312, %v312
    %v322 = vlaneseq
    %v323 = vshrl.u32 %v322, 7
    %v324 = vsub.s32 0, %v323
    %v325 = vrot.slane %v214, %v324
    %v326 = vlaneseq
    %v327 = vshrl.u32 %v326, 7
    %v328 = vsub.s32 1, %v327
    %v329 = vrot.slane %v214, %v328
    %v460 = vunpack.c.l.b16 %v54
    %v461 = vunpack.c.h.b16 %v54
    %v462 = vunpack.c.l.b16 %v55
    %v463 = vunpack.c.h.b16 %v55
    %v464 = vunpack.c.l.b16 %v56
    %v465 = vunpack.c.h.b16 %v56
    %v466 = vunpack.c.l.b16 %v57
    %v467 = vunpack.c.h.b16 %v57
    %v468 = vunpack.c.l.b16 %v58
    %v469 = vunpack.c.h.b16 %v58
    %v470 = vunpack.c.l.b16 %v59
    %v471 = vunpack.c.h.b16 %v59
    %v472 = vunpack.c.l.b16 %v60
    %v473 = vunpack.c.h.b16 %v60
    %v474 = vunpack.c.l.b16 %v61
    %v475 = vunpack.c.h.b16 %v61
    %v476 = vunpack.c.l.b16 %v62
    %v477 = vunpack.c.h.b16 %v62
    %v478 = vunpack.c.l.b16 %v63
    %v479 = vunpack.c.h.b16 %v63
    %v480 = vunpack.c.l.b16 %v64
    %v481 = vunpack.c.h.b16 %v64
    %v482 = vunpack.c.l.b16 %v65
    %v483 = vunpack.c.h.b16 %v65
    %v484 = vunpack.c.l.b16 %v66
    %v485 = vunpack.c.h.b16 %v66
    %v486 = vunpack.c.l.b16 %v67
    %v487 = vunpack.c.h.b16 %v67
    %v488 = vunpack.c.l.b16 %v68
    %v489 = vunpack.c.h.b16 %v68
    %v490 = vunpack.c.l.b16 %v69
    %v491 = vunpack.c.h.b16 %v69
    %v492 = vunpack.c.l.b16 %v70
    %v493 = vunpack.c.h.b16 %v70
    %v494 = vunpack.c.l.b16 %v71
    %v495 = vunpack.c.h.b16 %v71
    %v496 = vunpack.c.l.b16 %v72
    %v497 = vunpack.c.h.b16 %v72
    %v498 = vunpack.c.l.b16 %v73
    %v499 = vunpack.c.h.b16 %v73
    %v500 = vunpack.c.l.b16 %v74
    %v501 = vunpack.c.h.b16 %v74
    %v502 = vunpack.c.l.b16 %v75
    %v503 = vunpack.c.h.b16 %v75
    %v504 = vunpack.c.l.b16 %v76
    %v505 = vunpack.c.h.b16 %v76
    %v506 = vunpack.c.l.b16 %v77
    %v507 = vunpack.c.h.b16 %v77
    %v508 = vunpack.c.l.b16 %v78
    %v509 = vunpack.c.h.b16 %v78
    %v510 = vunpack.c.l.b16 %v79
    %v511 = vunpack.c.h.b16 %v79
    %v512 = vunpack.c.l.b16 %v80
    %v513 = vunpack.c.h.b16 %v80
    %v514 = vunpack.c.l.b16 %v81
    %v515 = vunpack.c.h.b16 %v81
    %v516 = vunpack.c.l.b16 %v82
    %v517 = vunpack.c.h.b16 %v82
    %v518 = vunpack.c.l.b16 %v83
    %v519 = vunpack.c.h.b16 %v83
    %v520 = vunpack.c.l.b16 %v84
    %v521 = vunpack.c.h.b16 %v84
    %v522 = vunpack.c.l.b16 %v85
    %v523 = vunpack.c.h.b16 %v85
    %v524 = vunpack.c.l.b16 %v86
    %v525 = vunpack.c.h.b16 %v86
    %v526 = vunpack.c.l.b16 %v87
    %v527 = vunpack.c.h.b16 %v87
    %v528 = vunpack.c.l.b16 %v88
    %v529 = vunpack.c.h.b16 %v88
    %v530 = vunpack.c.l.b16 %v89
    %v531 = vunpack.c.h.b16 %v89
    %v532 = vunpack.c.l.b16 %v90
    %v533 = vunpack.c.h.b16 %v90
    %v534 = vunpack.c.l.b16 %v91
    %v535 = vunpack.c.h.b16 %v91
    %v536 = vunpack.c.l.b16 %v92
    %v537 = vunpack.c.h.b16 %v92
    %v538 = vunpack.c.l.b16 %v93
    %v539 = vunpack.c.h.b16 %v93
    %v540 = vunpack.c.l.b16 %v94
    %v541 = vunpack.c.h.b16 %v94
    %v542 = vunpack.c.l.b16 %v95
    %v543 = vunpack.c.h.b16 %v95
    %v544 = vunpack.c.l.b16 %v96
    %v545 = vunpack.c.h.b16 %v96
    %v546 = vunpack.c.l.b16 %v97
    %v547 = vunpack.c.h.b16 %v97
    %v548 = vunpack.c.l.b16 %v98
    %v549 = vunpack.c.h.b16 %v98
    %v550 = vunpack.c.l.b16 %v99
    %v551 = vunpack.c.h.b16 %v99
    %v552 = vunpack.c.l.b16 %v100
    %v553 = vunpack.c.h.b16 %v100
    %v554 = vunpack.c.l.b16 %v101
    %v555 = vunpack.c.h.b16 %v101
    %v556 = vunpack.c.l.b16 %v102
    %v557 = vunpack.c.h.b16 %v102
    %v558 = vunpack.c.l.b16 %v103
    %v559 = vunpack.c.h.b16 %v103
    %v560 = vunpack.c.l.b16 %v104
    %v561 = vunpack.c.h.b16 %v104
    %v562 = vunpack.c.l.b16 %v105
    %v563 = vunpack.c.h.b16 %v105
    %v564 = vunpack.c.l.b16 %v106
    %v565 = vunpack.c.h.b16 %v106
    %v566 = vunpack.c.l.b16 %v107
    %v567 = vunpack.c.h.b16 %v107
    %v568 = vunpack.c.l.b16 %v108
    %v569 = vunpack.c.h.b16 %v108
    %v570 = vunpack.c.l.b16 %v109
    %v571 = vunpack.c.h.b16 %v109
    %v572 = vunpack.c.l.b16 %v110
    %v573 = vunpack.c.h.b16 %v110
    %v574 = vunpack.c.l.b16 %v111
    %v575 = vunpack.c.h.b16 %v111
    %v576 = vunpack.c.l.b16 %v112
    %v577 = vunpack.c.h.b16 %v112
    %v578 = vunpack.c.l.b16 %v113
    %v579 = vunpack.c.h.b16 %v113
    %v580 = vunpack.c.l.b16 %v114
    %v581 = vunpack.c.h.b16 %v114
    %v582 = vunpack.c.l.b16 %v115
    %v583 = vunpack.c.h.b16 %v115
    %v584 = vunpack.c.l.b16 %v116
    %v585 = vunpack.c.h.b16 %v116
    %v586 = vunpack.c.l.b16 %v117
    %v587 = vunpack.c.h.b16 %v117
    %v588 = vunpack.c.l.b16 %v118
    %v589 = vunpack.c.h.b16 %v118
    %v590 = vunpack.c.l.b16 %v119
    %v591 = vunpack.c.h.b16 %v119
    %v592 = vunpack.c.l.b16 %v120
    %v593 = vunpack.c.h.b16 %v120
    %v594 = vunpack.c.l.b16 %v121
    %v595 = vunpack.c.h.b16 %v121
    %v596 = vunpack.c.l.b16 %v122
    %v597 = vunpack.c.h.b16 %v122
    %v598 = vunpack.c.l.b16 %v123
    %v599 = vunpack.c.h.b16 %v123
    %v600 = vunpack.c.l.b16 %v124
    %v601 = vunpack.c.h.b16 %v124
    %v602 = vunpack.c.l.b16 %v125
    %v603 = vunpack.c.h.b16 %v125
    %v604 = vunpack.c.l.b16 %v126
    %v605 = vunpack.c.h.b16 %v126
    %v606 = vunpack.c.l.b16 %v127
    %v607 = vunpack.c.h.b16 %v127
    %v608 = vunpack.c.l.b16 %v128
    %v609 = vunpack.c.h.b16 %v128
    %v610 = vunpack.c.l.b16 %v129
    %v611 = vunpack.c.h.b16 %v129
    %v612 = vunpack.c.l.b16 %v130
    %v613 = vunpack.c.h.b16 %v130
    %v614 = vunpack.c.l.b16 %v131
    %v615 = vunpack.c.h.b16 %v131
    %v616 = vunpack.c.l.b16 %v132
    %v617 = vunpack.c.h.b16 %v132
    %v618 = vunpack.c.l.b16 %v133
    %v619 = vunpack.c.h.b16 %v133
    %v620 = vunpack.c.l.b16 %v134
    %v621 = vunpack.c.h.b16 %v134
    %v622 = vunpack.c.l.b16 %v135
    %v623 = vunpack.c.h.b16 %v135
    %v624 = vunpack.c.l.b16 %v136
    %v625 = vunpack.c.h.b16 %v136
    %v626 = vunpack.c.l.b16 %v137
    %v627 = vunpack.c.h.b16 %v137
    %v628 = vunpack.c.l.b16 %v138
    %v629 = vunpack.c.h.b16 %v138
    %v630 = vunpack.c.l.b16 %v139
    %v631 = vunpack.c.h.b16 %v139
    %v632 = vunpack.c.l.b16 %v140
    %v633 = vunpack.c.h.b16 %v140
    %v634 = vunpack.c.l.b16 %v141
    %v635 = vunpack.c.h.b16 %v141
    %v636 = vunpack.c.l.b16 %v142
    %v637 = vunpack.c.h.b16 %v142
    %v638 = vunpack.c.l.b16 %v143
    %v639 = vunpack.c.h.b16 %v143
    %v640 = vunpack.c.l.b16 %v144
    %v641 = vunpack.c.h.b16 %v144
    %v642 = vunpack.c.l.b16 %v145
    %v643 = vunpack.c.h.b16 %v145
    %v644 = vunpack.c.l.b16 %v146
    %v645 = vunpack.c.h.b16 %v146
    %v646 = vunpack.c.l.b16 %v147
    %v647 = vunpack.c.h.b16 %v147
    %v648 = vunpack.c.l.b16 %v148
    %v649 = vunpack.c.h.b16 %v148
    %v650 = vunpack.c.l.b16 %v149
    %v651 = vunpack.c.h.b16 %v149
    %v652 = vunpack.c.l.b16 %v150
    %v653 = vunpack.c.h.b16 %v150
    %v654 = vunpack.c.l.b16 %v151
    %v655 = vunpack.c.h.b16 %v151
    %v656 = vunpack.c.l.b16 %v152
    %v657 = vunpack.c.h.b16 %v152
    %v658 = vunpack.c.l.b16 %v153
    %v659 = vunpack.c.h.b16 %v153
    %v660 = vunpack.c.l.b16 %v154
    %v661 = vunpack.c.h.b16 %v154
    %v662 = vunpack.c.l.b16 %v155
    %v663 = vunpack.c.h.b16 %v155
    %v664 = vunpack.c.l.b16 %v156
    %v665 = vunpack.c.h.b16 %v156
    %v666 = vunpack.c.l.b16 %v157
    %v667 = vunpack.c.h.b16 %v157
    %v668 = vunpack.c.l.b16 %v158
    %v669 = vunpack.c.h.b16 %v158
    %v670 = vunpack.c.l.b16 %v159
    %v671 = vunpack.c.h.b16 %v159
    %v672 = vunpack.c.l.b16 %v160
    %v673 = vunpack.c.h.b16 %v160
    %v674 = vunpack.c.l.b16 %v161
    %v675 = vunpack.c.h.b16 %v161
    %v676 = vunpack.c.l.b16 %v162
    %v677 = vunpack.c.h.b16 %v162
    %v678 = vunpack.c.l.b16 %v163
    %v679 = vunpack.c.h.b16 %v163
    %v680 = vunpack.c.l.b16 %v164
    %v681 = vunpack.c.h.b16 %v164
    %v682 = vunpack.c.l.b16 %v165
    %v683 = vunpack.c.h.b16 %v165
    %v684 = vunpack.c.l.b16 %v166
    %v685 = vunpack.c.h.b16 %v166
    %v686 = vunpack.c.l.b16 %v167
    %v687 = vunpack.c.h.b16 %v167
    %v688 = vunpack.c.l.b16 %v168
    %v689 = vunpack.c.h.b16 %v168
    %v690 = vunpack.c.l.b16 %v169
    %v691 = vunpack.c.h.b16 %v169
    %v692 = vunpack.c.l.b16 %v170
    %v693 = vunpack.c.h.b16 %v170
    %v694 = vunpack.c.l.b16 %v171
    %v695 = vunpack.c.h.b16 %v171
    %v696 = vunpack.c.l.b16 %v172
    %v697 = vunpack.c.h.b16 %v172
    %v698 = vunpack.c.l.b16 %v173
    %v699 = vunpack.c.h.b16 %v173
    %v700 = vunpack.c.l.b16 %v174
    %v701 = vunpack.c.h.b16 %v174
    %v702 = vunpack.c.l.b16 %v175
    %v703 = vunpack.c.h.b16 %v175
    %v704 = vunpack.c.l.b16 %v176
    %v705 = vunpack.c.h.b16 %v176
    %v706 = vunpack.c.l.b16 %v177
    %v707 = vunpack.c.h.b16 %v177
    %v708 = vunpack.c.l.b16 %v178
    %v709 = vunpack.c.h.b16 %v178
    %v710 = vunpack.c.l.b16 %v179
    %v711 = vunpack.c.h.b16 %v179
    %v712 = vunpack.c.l.b16 %v180
    %v713 = vunpack.c.h.b16 %v180
    %v714 = vunpack.c.l.b16 %v181
    %v715 = vunpack.c.h.b16 %v181
    %v716 = vpack.c.b16 %v462, %v460
    %v717 = vpack.c.b16 %v463, %v461
    %v718 = vpack.c.b16 %v466, %v464
    %v719 = vpack.c.b16 %v467, %v465
    %v720 = vpack.c.b16 %v470, %v468
    %v721 = vpack.c.b16 %v471, %v469
    %v722 = vpack.c.b16 %v474, %v472
    %v723 = vpack.c.b16 %v475, %v473
    %v724 = vpack.c.b16 %v478, %v476
    %v725 = vpack.c.b16 %v479, %v477
    %v726 = vpack.c.b16 %v482, %v480
    %v727 = vpack.c.b16 %v483, %v481
    %v728 = vpack.c.b16 %v486, %v484
    %v729 = vpack.c.b16 %v487, %v485
    %v730 = vpack.c.b16 %v490, %v488
    %v731 = vpack.c.b16 %v491, %v489
    %v732 = vpack.c.b16 %v494, %v492
    %v733 = vpack.c.b16 %v495, %v493
    %v734 = vpack.c.b16 %v498, %v496
    %v735 = vpack.c.b16 %v499, %v497
    %v736 = vpack.c.b16 %v502, %v500
    %v737 = vpack.c.b16 %v503, %v501
    %v738 = vpack.c.b16 %v506, %v504
    %v739 = vpack.c.b16 %v507, %v505
    %v740 = vpack.c.b16 %v510, %v508
    %v741 = vpack.c.b16 %v511, %v509
    %v742 = vpack.c.b16 %v514, %v512
    %v743 = vpack.c.b16 %v515, %v513
    %v744 = vpack.c.b16 %v518, %v516
    %v745 = vpack.c.b16 %v519, %v517
    %v746 = vpack.c.b16 %v522, %v520
    %v747 = vpack.c.b16 %v523, %v521
    %v748 = vpack.c.b16 %v526, %v524
    %v749 = vpack.c.b16 %v527, %v525
    %v750 = vpack.c.b16 %v530, %v528
    %v751 = vpack.c.b16 %v531, %v529
    %v752 = vpack.c.b16 %v534, %v532
    %v753 = vpack.c.b16 %v535, %v533
    %v754 = vpack.c.b16 %v538, %v536
    %v755 = vpack.c.b16 %v539, %v537
    %v756 = vpack.c.b16 %v542, %v540
    %v757 = vpack.c.b16 %v543, %v541
    %v758 = vpack.c.b16 %v546, %v544
    %v759 = vpack.c.b16 %v547, %v545
    %v760 = vpack.c.b16 %v550, %v548
    %v761 = vpack.c.b16 %v551, %v549
    %v762 = vpack.c.b16 %v554, %v552
    %v763 = vpack.c.b16 %v555, %v553
    %v764 = vpack.c.b16 %v558, %v556
    %v765 = vpack.c.b16 %v559, %v557
    %v766 = vpack.c.b16 %v562, %v560
    %v767 = vpack.c.b16 %v563, %v561
    %v768 = vpack.c.b16 %v566, %v564
    %v769 = vpack.c.b16 %v567, %v565
    %v770 = vpack.c.b16 %v570, %v568
    %v771 = vpack.c.b16 %v571, %v569
    %v772 = vpack.c.b16 %v574, %v572
    %v773 = vpack.c.b16 %v575, %v573
    %v774 = vpack.c.b16 %v578, %v576
    %v775 = vpack.c.b16 %v579, %v577
    %v776 = vpack.c.b16 %v582, %v580
    %v777 = vpack.c.b16 %v583, %v581
    %v778 = vpack.c.b16 %v586, %v584
    %v779 = vpack.c.b16 %v587, %v585
    %v780 = vpack.c.b16 %v590, %v588
    %v781 = vpack.c.b16 %v591, %v589
    %v782 = vpack.c.b16 %v594, %v592
    %v783 = vpack.c.b16 %v595, %v593
    %v784 = vpack.c.b16 %v598, %v596
    %v785 = vpack.c.b16 %v599, %v597
    %v786 = vpack.c.b16 %v602, %v600
    %v787 = vpack.c.b16 %v603, %v601
    %v788 = vpack.c.b16 %v606, %v604
    %v789 = vpack.c.b16 %v607, %v605
    %v790 = vpack.c.b16 %v610, %v608
    %v791 = vpack.c.b16 %v611, %v609
    %v792 = vpack.c.b16 %v614, %v612
    %v793 = vpack.c.b16 %v615, %v613
    %v794 = vpack.c.b16 %v618, %v616
    %v795 = vpack.c.b16 %v619, %v617
    %v796 = vpack.c.b16 %v622, %v620
    %v797 = vpack.c.b16 %v623, %v621
    %v798 = vpack.c.b16 %v626, %v624
    %v799 = vpack.c.b16 %v627, %v625
    %v800 = vpack.c.b16 %v630, %v628
    %v801 = vpack.c.b16 %v631, %v629
    %v802 = vpack.c.b16 %v634, %v632
    %v803 = vpack.c.b16 %v635, %v633
    %v804 = vpack.c.b16 %v638, %v636
    %v805 = vpack.c.b16 %v639, %v637
    %v806 = vpack.c.b16 %v642, %v640
    %v807 = vpack.c.b16 %v643, %v641
    %v808 = vpack.c.b16 %v646, %v644
    %v809 = vpack.c.b16 %v647, %v645
    %v810 = vpack.c.b16 %v650, %v648
    %v811 = vpack.c.b16 %v651, %v649
    %v812 = vpack.c.b16 %v654, %v652
    %v813 = vpack.c.b16 %v655, %v653
    %v814 = vpack.c.b16 %v658, %v656
    %v815 = vpack.c.b16 %v659, %v657
    %v816 = vpack.c.b16 %v662, %v660
    %v817 = vpack.c.b16 %v663, %v661
    %v818 = vpack.c.b16 %v666, %v664
    %v819 = vpack.c.b16 %v667, %v665
    %v820 = vpack.c.b16 %v670, %v668
    %v821 = vpack.c.b16 %v671, %v669
    %v822 = vpack.c.b16 %v674, %v672
    %v823 = vpack.c.b16 %v675, %v673
    %v824 = vpack.c.b16 %v678, %v676
    %v825 = vpack.c.b16 %v679, %v677
    %v826 = vpack.c.b16 %v682, %v680
    %v827 = vpack.c.b16 %v683, %v681
    %v828 = vpack.c.b16 %v686, %v684
    %v829 = vpack.c.b16 %v687, %v685
    %v830 = vpack.c.b16 %v690, %v688
    %v831 = vpack.c.b16 %v691, %v689
    %v832 = vpack.c.b16 %v694, %v692
    %v833 = vpack.c.b16 %v695, %v693
    %v834 = vpack.c.b16 %v698, %v696
    %v835 = vpack.c.b16 %v699, %v697
    %v836 = vpack.c.b16 %v702, %v700
    %v837 = vpack.c.b16 %v703, %v701
    %v838 = vpack.c.b16 %v706, %v704
    %v839 = vpack.c.b16 %v707, %v705
    %v840 = vpack.c.b16 %v710, %v708
    %v841 = vpack.c.b16 %v711, %v709
    %v842 = vpack.c.b16 %v714, %v712
    %v843 = vpack.c.b16 %v715, %v713
    %972 = vmatprep.subr.bf16.mxu0 %v731
    %973 = vmatpush1.bf16.msra.mxu0 %v730
    %974 = vmatprep.subr.bf16.mxu0 %v729
    %975 = vmatpush1.bf16.msra.mxu0 %v728
    %976 = vmatprep.subr.bf16.mxu0 %v727
    %977 = vmatpush1.bf16.msra.mxu0 %v726
    %978 = vmatprep.subr.bf16.mxu0 %v725
    %979 = vmatpush1.bf16.msra.mxu0 %v724
    %980 = vmatprep.subr.bf16.mxu0 %v723
    %981 = vmatpush1.bf16.msra.mxu0 %v722
    %982 = vmatprep.subr.bf16.mxu0 %v721
    %983 = vmatpush1.bf16.msra.mxu0 %v720
    %984 = vmatprep.subr.bf16.mxu0 %v719
    %985 = vmatpush1.bf16.msra.mxu0 %v718
    %986 = vmatprep.subr.bf16.mxu0 %v717
    %987 = vmatpush1.bf16.msra.mxu0 %v716
    %988 = vmatprep.subr.bf16.mxu0 %v747
    %989 = vmatpush2.bf16.msra.mxu0 %v746
    %990 = vmatprep.subr.bf16.mxu0 %v745
    %991 = vmatpush2.bf16.msra.mxu0 %v744
    %992 = vmatprep.subr.bf16.mxu0 %v743
    %993 = vmatpush2.bf16.msra.mxu0 %v742
    %994 = vmatprep.subr.bf16.mxu0 %v741
    %995 = vmatpush2.bf16.msra.mxu0 %v740
    %996 = vmatprep.subr.bf16.mxu0 %v739
    %997 = vmatpush2.bf16.msra.mxu0 %v738
    %998 = vmatprep.subr.bf16.mxu0 %v737
    %999 = vmatpush2.bf16.msra.mxu0 %v736
    %1000 = vmatprep.subr.bf16.mxu0 %v735
    %1001 = vmatpush2.bf16.msra.mxu0 %v734
    %1002 = vmatprep.subr.bf16.mxu0 %v733
    %1003 = vmatpush2.bf16.msra.mxu0 %v732
    %1004 = vmatprep.mubr.bf16.mxu0 %v314
    %1005 = vmatmul.mubr.bf16.gmra.mxu0 %v313
    %v1006 = vpop.f32.mrf.mxu0
    %v1007 = vadd.f32 %v325, %v1006
    %v1008 = vpop.f32.mrf.mxu0
    %v1009 = vadd.f32 %v329, %v1008
    %v1010 = vpop.f32.mrf.mxu0
    %v1011 = vpop.f32.mrf.mxu0
    %1012 = vdwg.mxu0
    %1013 = vmatprep.subr.bf16.mxu0 %v763
    %1014 = vmatpush1.bf16.msra.mxu0 %v762
    %1015 = vmatprep.subr.bf16.mxu0 %v761
    %1016 = vmatpush1.bf16.msra.mxu0 %v760
    %1017 = vmatprep.subr.bf16.mxu0 %v759
    %1018 = vmatpush1.bf16.msra.mxu0 %v758
    %1019 = vmatprep.subr.bf16.mxu0 %v757
    %1020 = vmatpush1.bf16.msra.mxu0 %v756
    %1021 = vmatprep.subr.bf16.mxu0 %v755
    %1022 = vmatpush1.bf16.msra.mxu0 %v754
    %1023 = vmatprep.subr.bf16.mxu0 %v753
    %1024 = vmatpush1.bf16.msra.mxu0 %v752
    %1025 = vmatprep.subr.bf16.mxu0 %v751
    %1026 = vmatpush1.bf16.msra.mxu0 %v750
    %1027 = vmatprep.subr.bf16.mxu0 %v749
    %1028 = vmatpush1.bf16.msra.mxu0 %v748
    %1029 = vmatprep.subr.bf16.mxu0 %v779
    %1030 = vmatpush2.bf16.msra.mxu0 %v778
    %1031 = vmatprep.subr.bf16.mxu0 %v777
    %1032 = vmatpush2.bf16.msra.mxu0 %v776
    %1033 = vmatprep.subr.bf16.mxu0 %v775
    %1034 = vmatpush2.bf16.msra.mxu0 %v774
    %1035 = vmatprep.subr.bf16.mxu0 %v773
    %1036 = vmatpush2.bf16.msra.mxu0 %v772
    %1037 = vmatprep.subr.bf16.mxu0 %v771
    %1038 = vmatpush2.bf16.msra.mxu0 %v770
    %1039 = vmatprep.subr.bf16.mxu0 %v769
    %1040 = vmatpush2.bf16.msra.mxu0 %v768
    %1041 = vmatprep.subr.bf16.mxu0 %v767
    %1042 = vmatpush2.bf16.msra.mxu0 %v766
    %1043 = vmatprep.subr.bf16.mxu0 %v765
    %1044 = vmatpush2.bf16.msra.mxu0 %v764
    %1045 = vmatprep.mubr.bf16.mxu0 %v316
    %1046 = vmatmul.mubr.bf16.gmra.mxu0 %v315
    %v1047 = vpop.f32.mrf.mxu0
    %v1048 = vadd.f32 %v1007, %v1047
    %v1049 = vpop.f32.mrf.mxu0
    %v1050 = vadd.f32 %v1009, %v1049
    %v1051 = vpop.f32.mrf.mxu0
    %v1052 = vpop.f32.mrf.mxu0
    %1053 = vdwg.mxu0
    %1054 = vmatprep.subr.bf16.mxu0 %v795
    %1055 = vmatpush1.bf16.msra.mxu0 %v794
    %1056 = vmatprep.subr.bf16.mxu0 %v793
    %1057 = vmatpush1.bf16.msra.mxu0 %v792
    %1058 = vmatprep.subr.bf16.mxu0 %v791
    %1059 = vmatpush1.bf16.msra.mxu0 %v790
    %1060 = vmatprep.subr.bf16.mxu0 %v789
    %1061 = vmatpush1.bf16.msra.mxu0 %v788
    %1062 = vmatprep.subr.bf16.mxu0 %v787
    %1063 = vmatpush1.bf16.msra.mxu0 %v786
    %1064 = vmatprep.subr.bf16.mxu0 %v785
    %1065 = vmatpush1.bf16.msra.mxu0 %v784
    %1066 = vmatprep.subr.bf16.mxu0 %v783
    %1067 = vmatpush1.bf16.msra.mxu0 %v782
    %1068 = vmatprep.subr.bf16.mxu0 %v781
    %1069 = vmatpush1.bf16.msra.mxu0 %v780
    %1070 = vmatprep.subr.bf16.mxu0 %v811
    %1071 = vmatpush2.bf16.msra.mxu0 %v810
    %1072 = vmatprep.subr.bf16.mxu0 %v809
    %1073 = vmatpush2.bf16.msra.mxu0 %v808
    %1074 = vmatprep.subr.bf16.mxu0 %v807
    %1075 = vmatpush2.bf16.msra.mxu0 %v806
    %1076 = vmatprep.subr.bf16.mxu0 %v805
    %1077 = vmatpush2.bf16.msra.mxu0 %v804
    %1078 = vmatprep.subr.bf16.mxu0 %v803
    %1079 = vmatpush2.bf16.msra.mxu0 %v802
    %1080 = vmatprep.subr.bf16.mxu0 %v801
    %1081 = vmatpush2.bf16.msra.mxu0 %v800
    %1082 = vmatprep.subr.bf16.mxu0 %v799
    %1083 = vmatpush2.bf16.msra.mxu0 %v798
    %1084 = vmatprep.subr.bf16.mxu0 %v797
    %1085 = vmatpush2.bf16.msra.mxu0 %v796
    %1086 = vmatprep.mubr.bf16.mxu0 %v318
    %1087 = vmatmul.mubr.bf16.gmra.mxu0 %v317
    %v1088 = vpop.f32.mrf.mxu0
    %v1089 = vadd.f32 %v1048, %v1088
    %v1090 = vpop.f32.mrf.mxu0
    %v1091 = vadd.f32 %v1050, %v1090
    %v1092 = vpop.f32.mrf.mxu0
    %v1093 = vpop.f32.mrf.mxu0
    %1094 = vdwg.mxu0
    %1095 = vmatprep.subr.bf16.mxu0 %v827
    %1096 = vmatpush1.bf16.msra.mxu0 %v826
    %1097 = vmatprep.subr.bf16.mxu0 %v825
    %1098 = vmatpush1.bf16.msra.mxu0 %v824
    %1099 = vmatprep.subr.bf16.mxu0 %v823
    %1100 = vmatpush1.bf16.msra.mxu0 %v822
    %1101 = vmatprep.subr.bf16.mxu0 %v821
    %1102 = vmatpush1.bf16.msra.mxu0 %v820
    %1103 = vmatprep.subr.bf16.mxu0 %v819
    %1104 = vmatpush1.bf16.msra.mxu0 %v818
    %1105 = vmatprep.subr.bf16.mxu0 %v817
    %1106 = vmatpush1.bf16.msra.mxu0 %v816
    %1107 = vmatprep.subr.bf16.mxu0 %v815
    %1108 = vmatpush1.bf16.msra.mxu0 %v814
    %1109 = vmatprep.subr.bf16.mxu0 %v813
    %1110 = vmatpush1.bf16.msra.mxu0 %v812
    %1111 = vmatprep.subr.bf16.mxu0 %v843
    %1112 = vmatpush2.bf16.msra.mxu0 %v842
    %1113 = vmatprep.subr.bf16.mxu0 %v841
    %1114 = vmatpush2.bf16.msra.mxu0 %v840
    %1115 = vmatprep.subr.bf16.mxu0 %v839
    %1116 = vmatpush2.bf16.msra.mxu0 %v838
    %1117 = vmatprep.subr.bf16.mxu0 %v837
    %1118 = vmatpush2.bf16.msra.mxu0 %v836
    %1119 = vmatprep.subr.bf16.mxu0 %v835
    %1120 = vmatpush2.bf16.msra.mxu0 %v834
    %1121 = vmatprep.subr.bf16.mxu0 %v833
    %1122 = vmatpush2.bf16.msra.mxu0 %v832
    %1123 = vmatprep.subr.bf16.mxu0 %v831
    %1124 = vmatpush2.bf16.msra.mxu0 %v830
    %1125 = vmatprep.subr.bf16.mxu0 %v829
    %1126 = vmatpush2.bf16.msra.mxu0 %v828
    %1127 = vmatprep.mubr.bf16.mxu0 %v320
    %1128 = vmatmul.mubr.bf16.gmra.mxu0 %v319
    %v1129 = vpop.f32.mrf.mxu0
    %v1130 = vadd.f32 %v1089, %v1129
    %v1131 = vpop.f32.mrf.mxu0
    %v1132 = vadd.f32 %v1091, %v1131
    %v1133 = vpop.f32.mrf.mxu0
    %v1134 = vpop.f32.mrf.mxu0
    %1135 = vdwg.mxu0
    %v1136 = vpack.c.bf16 %v1130, %v1130
    %v1137 = vpack.c.bf16 %v1132, %v1132
    %v1139 = vlaneseq
    %v1140 = vshrl.u32 %v1139, 7
    %v1141 = vsub.s32 0, %v1140
    %v1142 = vrot.slane %v216, %v1141
    %v1143 = vlaneseq
    %v1144 = vshrl.u32 %v1143, 7
    %v1145 = vsub.s32 1, %v1144
    %v1146 = vrot.slane %v216, %v1145
    %v1181 = vunpack.c.l.b16 %v182
    %v1182 = vunpack.c.h.b16 %v182
    %v1183 = vunpack.c.l.b16 %v183
    %v1184 = vunpack.c.h.b16 %v183
    %v1185 = vunpack.c.l.b16 %v184
    %v1186 = vunpack.c.h.b16 %v184
    %v1187 = vunpack.c.l.b16 %v185
    %v1188 = vunpack.c.h.b16 %v185
    %v1189 = vunpack.c.l.b16 %v186
    %v1190 = vunpack.c.h.b16 %v186
    %v1191 = vunpack.c.l.b16 %v187
    %v1192 = vunpack.c.h.b16 %v187
    %v1193 = vunpack.c.l.b16 %v188
    %v1194 = vunpack.c.h.b16 %v188
    %v1195 = vunpack.c.l.b16 %v189
    %v1196 = vunpack.c.h.b16 %v189
    %v1197 = vunpack.c.l.b16 %v190
    %v1198 = vunpack.c.h.b16 %v190
    %v1199 = vunpack.c.l.b16 %v191
    %v1200 = vunpack.c.h.b16 %v191
    %v1201 = vunpack.c.l.b16 %v192
    %v1202 = vunpack.c.h.b16 %v192
    %v1203 = vunpack.c.l.b16 %v193
    %v1204 = vunpack.c.h.b16 %v193
    %v1205 = vunpack.c.l.b16 %v194
    %v1206 = vunpack.c.h.b16 %v194
    %v1207 = vunpack.c.l.b16 %v195
    %v1208 = vunpack.c.h.b16 %v195
    %v1209 = vunpack.c.l.b16 %v196
    %v1210 = vunpack.c.h.b16 %v196
    %v1211 = vunpack.c.l.b16 %v197
    %v1212 = vunpack.c.h.b16 %v197
    %v1213 = vunpack.c.l.b16 %v198
    %v1214 = vunpack.c.h.b16 %v198
    %v1215 = vunpack.c.l.b16 %v199
    %v1216 = vunpack.c.h.b16 %v199
    %v1217 = vunpack.c.l.b16 %v200
    %v1218 = vunpack.c.h.b16 %v200
    %v1219 = vunpack.c.l.b16 %v201
    %v1220 = vunpack.c.h.b16 %v201
    %v1221 = vunpack.c.l.b16 %v202
    %v1222 = vunpack.c.h.b16 %v202
    %v1223 = vunpack.c.l.b16 %v203
    %v1224 = vunpack.c.h.b16 %v203
    %v1225 = vunpack.c.l.b16 %v204
    %v1226 = vunpack.c.h.b16 %v204
    %v1227 = vunpack.c.l.b16 %v205
    %v1228 = vunpack.c.h.b16 %v205
    %v1229 = vunpack.c.l.b16 %v206
    %v1230 = vunpack.c.h.b16 %v206
    %v1231 = vunpack.c.l.b16 %v207
    %v1232 = vunpack.c.h.b16 %v207
    %v1233 = vunpack.c.l.b16 %v208
    %v1234 = vunpack.c.h.b16 %v208
    %v1235 = vunpack.c.l.b16 %v209
    %v1236 = vunpack.c.h.b16 %v209
    %v1237 = vunpack.c.l.b16 %v210
    %v1238 = vunpack.c.h.b16 %v210
    %v1239 = vunpack.c.l.b16 %v211
    %v1240 = vunpack.c.h.b16 %v211
    %v1241 = vunpack.c.l.b16 %v212
    %v1242 = vunpack.c.h.b16 %v212
    %v1243 = vunpack.c.l.b16 %v213
    %v1244 = vunpack.c.h.b16 %v213
    %v1245 = vpack.c.b16 %v1183, %v1181
    %v1246 = vpack.c.b16 %v1184, %v1182
    %v1247 = vpack.c.b16 %v1187, %v1185
    %v1248 = vpack.c.b16 %v1188, %v1186
    %v1249 = vpack.c.b16 %v1191, %v1189
    %v1250 = vpack.c.b16 %v1192, %v1190
    %v1251 = vpack.c.b16 %v1195, %v1193
    %v1252 = vpack.c.b16 %v1196, %v1194
    %v1253 = vpack.c.b16 %v1199, %v1197
    %v1254 = vpack.c.b16 %v1200, %v1198
    %v1255 = vpack.c.b16 %v1203, %v1201
    %v1256 = vpack.c.b16 %v1204, %v1202
    %v1257 = vpack.c.b16 %v1207, %v1205
    %v1258 = vpack.c.b16 %v1208, %v1206
    %v1259 = vpack.c.b16 %v1211, %v1209
    %v1260 = vpack.c.b16 %v1212, %v1210
    %v1261 = vpack.c.b16 %v1215, %v1213
    %v1262 = vpack.c.b16 %v1216, %v1214
    %v1263 = vpack.c.b16 %v1219, %v1217
    %v1264 = vpack.c.b16 %v1220, %v1218
    %v1265 = vpack.c.b16 %v1223, %v1221
    %v1266 = vpack.c.b16 %v1224, %v1222
    %v1267 = vpack.c.b16 %v1227, %v1225
    %v1268 = vpack.c.b16 %v1228, %v1226
    %v1269 = vpack.c.b16 %v1231, %v1229
    %v1270 = vpack.c.b16 %v1232, %v1230
    %v1271 = vpack.c.b16 %v1235, %v1233
    %v1272 = vpack.c.b16 %v1236, %v1234
    %v1273 = vpack.c.b16 %v1239, %v1237
    %v1274 = vpack.c.b16 %v1240, %v1238
    %v1275 = vpack.c.b16 %v1243, %v1241
    %v1276 = vpack.c.b16 %v1244, %v1242
    %1309 = vmatprep.subr.bf16.mxu0 %v1260
    %1310 = vmatpush1.bf16.msra.mxu0 %v1259
    %1311 = vmatprep.subr.bf16.mxu0 %v1258
    %1312 = vmatpush1.bf16.msra.mxu0 %v1257
    %1313 = vmatprep.subr.bf16.mxu0 %v1256
    %1314 = vmatpush1.bf16.msra.mxu0 %v1255
    %1315 = vmatprep.subr.bf16.mxu0 %v1254
    %1316 = vmatpush1.bf16.msra.mxu0 %v1253
    %1317 = vmatprep.subr.bf16.mxu0 %v1252
    %1318 = vmatpush1.bf16.msra.mxu0 %v1251
    %1319 = vmatprep.subr.bf16.mxu0 %v1250
    %1320 = vmatpush1.bf16.msra.mxu0 %v1249
    %1321 = vmatprep.subr.bf16.mxu0 %v1248
    %1322 = vmatpush1.bf16.msra.mxu0 %v1247
    %1323 = vmatprep.subr.bf16.mxu0 %v1246
    %1324 = vmatpush1.bf16.msra.mxu0 %v1245
    %1325 = vmatprep.subr.bf16.mxu0 %v1276
    %1326 = vmatpush2.bf16.msra.mxu0 %v1275
    %1327 = vmatprep.subr.bf16.mxu0 %v1274
    %1328 = vmatpush2.bf16.msra.mxu0 %v1273
    %1329 = vmatprep.subr.bf16.mxu0 %v1272
    %1330 = vmatpush2.bf16.msra.mxu0 %v1271
    %1331 = vmatprep.subr.bf16.mxu0 %v1270
    %1332 = vmatpush2.bf16.msra.mxu0 %v1269
    %1333 = vmatprep.subr.bf16.mxu0 %v1268
    %1334 = vmatpush2.bf16.msra.mxu0 %v1267
    %1335 = vmatprep.subr.bf16.mxu0 %v1266
    %1336 = vmatpush2.bf16.msra.mxu0 %v1265
    %1337 = vmatprep.subr.bf16.mxu0 %v1264
    %1338 = vmatpush2.bf16.msra.mxu0 %v1263
    %1339 = vmatprep.subr.bf16.mxu0 %v1262
    %1340 = vmatpush2.bf16.msra.mxu0 %v1261
    %1341 = vmatprep.mubr.bf16.mxu0 %v1137
    %1342 = vmatmul.mubr.bf16.gmra.mxu0 %v1136
    %v1343 = vpop.f32.mrf.mxu0
    %v1344 = vadd.f32 %v1142, %v1343
    %v1345 = vpop.f32.mrf.mxu0
    %v1346 = vadd.f32 %v1146, %v1345
    %v1347 = vpop.f32.mrf.mxu0
    %v1348 = vpop.f32.mrf.mxu0
    %1349 = vdwg.mxu0
    %v1352 = vcombine.low %v1344, %v1346
    %v1353 = vcombine.high %v1344, %v1346
    %v1354 = vsel %vm303, 1, 0
    %v1355 = vsel %vm304, 1, 0
    %vm1356 = vcmp.eq.s32.totalorder %v1354, 1
    %vm1357 = vcmp.eq.s32.totalorder %v1355, 1
    %v1358 = vlaneseq
    %v1359 = vshrl.u32 %v1358, 7
    %v1360 = vsub.s32 0, %v1359
    %v1361 = vrot.slane %v1352, %v1360
    %v1362 = vlaneseq
    %v1363 = vshrl.u32 %v1362, 7
    %v1364 = vsub.s32 4, %v1363
    %v1365 = vrot.slane %v1352, %v1364
    %v1366 = vlaneseq
    %v1367 = vshrl.u32 %v1366, 7
    %v1368 = vsub.s32 0, %v1367
    %v1369 = vrot.slane %v1353, %v1368
    %v1370 = vlaneseq
    %v1371 = vshrl.u32 %v1370, 7
    %v1372 = vsub.s32 4, %v1371
    %v1373 = vrot.slane %v1353, %v1372
    %vm1374 = vcmask 1041409
    %v1375 = vsel %vm1374, %v1369, %v1361
    %v1376 = vsel %vm1374, %v1373, %v1365
    %v1379 = vlaneseq
    %v1380 = vshrl.u32 %v1379, 7
    %v1381 = vsub.s32 3, %v1380
    %v1382 = vrot.slane %v1352, %v1381
    %v1383 = vlaneseq
    %v1384 = vshrl.u32 %v1383, 7
    %v1385 = vsub.s32 7, %v1384
    %v1386 = vrot.slane %v1352, %v1385
    %v1387 = vlaneseq
    %v1388 = vshrl.u32 %v1387, 7
    %v1389 = vsub.s32 3, %v1388
    %v1390 = vrot.slane %v1353, %v1389
    %v1391 = vlaneseq
    %v1392 = vshrl.u32 %v1391, 7
    %v1393 = vsub.s32 7, %v1392
    %v1394 = vrot.slane %v1353, %v1393
    %v1395 = vsel %vm1374, %v1390, %v1382
    %v1396 = vsel %vm1374, %v1394, %v1386
    %v1399 = vsel %vm1356, %v1375, %v1395
    %v1400 = vsel %vm1357, %v1376, %v1396
    %v1401 = vlaneseq
    %v1402 = vshrl.u32 %v1401, 7
    %v1403 = vsub.s32 1, %v1402
    %v1404 = vrot.slane %v1352, %v1403
    %v1405 = vlaneseq
    %v1406 = vshrl.u32 %v1405, 7
    %v1407 = vsub.s32 5, %v1406
    %v1408 = vrot.slane %v1352, %v1407
    %v1409 = vlaneseq
    %v1410 = vshrl.u32 %v1409, 7
    %v1411 = vsub.s32 1, %v1410
    %v1412 = vrot.slane %v1353, %v1411
    %v1413 = vlaneseq
    %v1414 = vshrl.u32 %v1413, 7
    %v1415 = vsub.s32 5, %v1414
    %v1416 = vrot.slane %v1353, %v1415
    %v1417 = vsel %vm1374, %v1412, %v1404
    %v1418 = vsel %vm1374, %v1416, %v1408
    %v1421 = vlaneseq
    %v1422 = vshrl.u32 %v1421, 7
    %v1423 = vsub.s32 2, %v1422
    %v1424 = vrot.slane %v1352, %v1423
    %v1425 = vlaneseq
    %v1426 = vshrl.u32 %v1425, 7
    %v1427 = vsub.s32 6, %v1426
    %v1428 = vrot.slane %v1352, %v1427
    %v1429 = vlaneseq
    %v1430 = vshrl.u32 %v1429, 7
    %v1431 = vsub.s32 2, %v1430
    %v1432 = vrot.slane %v1353, %v1431
    %v1433 = vlaneseq
    %v1434 = vshrl.u32 %v1433, 7
    %v1435 = vsub.s32 6, %v1434
    %v1436 = vrot.slane %v1353, %v1435
    %v1437 = vsel %vm1374, %v1432, %v1424
    %v1438 = vsel %vm1374, %v1436, %v1428
    %v1441 = vsel %vm1356, %v1417, %v1437
    %v1442 = vsel %vm1357, %v1418, %v1438
    %v1443 = vsel %vm1356, %v1437, %v1417
    %v1444 = vsel %vm1357, %v1438, %v1418
    %v1445 = vsel %vm1356, %v1395, %v1375
    %v1446 = vsel %vm1357, %v1396, %v1376
    %vm1447 = vcmask 523264
    %v1449 = vsel %vm1447, 0.0, 0
    %1451 = vmatprep.subr.mxu0 0.0
    %1452 = vmatpush1.msra.mxu0 0.0
    %1453 = vmatprep.subr.mxu0 0.0
    %1454 = vmatpush1.msra.mxu0 0.0
    %1455 = vmatprep.subr.mxu0 0.0
    %1456 = vmatpush1.msra.mxu0 0.0
    %1457 = vmatprep.subr.mxu0 0.0
    %1458 = vmatpush1.msra.mxu0 0.0
    %1459 = vmatprep.subr.mxu0 0.0
    %1460 = vmatpush1.msra.mxu0 0.0
    %1461 = vmatprep.subr.mxu0 0.0
    %1462 = vmatpush1.msra.mxu0 0.0
    %1463 = vmatprep.subr.mxu0 0.0
    %1464 = vmatpush1.msra.mxu0 0.0
    %1465 = vmatprep.subr.mxu0 0.0
    %1466 = vmatpush1.msra.mxu0 0.0
    %1467 = vmatprep.subr.mxu0 %v235
    %1468 = vmatpush1.msra.mxu0 %v234
    %1469 = vmatprep.subr.mxu0 %v233
    %1470 = vmatpush1.msra.mxu0 %v232
    %1471 = vmatprep.subr.mxu0 %v231
    %1472 = vmatpush1.msra.mxu0 %v230
    %1473 = vmatprep.subr.mxu0 %v229
    %1474 = vmatpush1.msra.mxu0 %v228
    %1475 = vmatprep.subr.mxu0 %v227
    %1476 = vmatpush1.msra.mxu0 %v226
    %1477 = vmatprep.subr.mxu0 %v225
    %1478 = vmatpush1.msra.mxu0 %v224
    %1479 = vmatprep.subr.mxu0 %v223
    %1480 = vmatpush1.msra.mxu0 %v222
    %1481 = vmatprep.subr.mxu0 %v221
    %1482 = vmatpush1.msra.mxu0 %v220
    %1483 = vmatprep.subr.mxu0 0.0
    %1484 = vmatpush2.msra.mxu0 0.0
    %1485 = vmatprep.subr.mxu0 0.0
    %1486 = vmatpush2.msra.mxu0 0.0
    %1487 = vmatprep.subr.mxu0 0.0
    %1488 = vmatpush2.msra.mxu0 0.0
    %1489 = vmatprep.subr.mxu0 0.0
    %1490 = vmatpush2.msra.mxu0 0.0
    %1491 = vmatprep.subr.mxu0 0.0
    %1492 = vmatpush2.msra.mxu0 0.0
    %1493 = vmatprep.subr.mxu0 0.0
    %1494 = vmatpush2.msra.mxu0 0.0
    %1495 = vmatprep.subr.mxu0 0.0
    %1496 = vmatpush2.msra.mxu0 0.0
    %1497 = vmatprep.subr.mxu0 0.0
    %1498 = vmatpush2.msra.mxu0 0.0
    %1499 = vmatprep.subr.mxu0 0.0
    %1500 = vmatpush2.msra.mxu0 0.0
    %1501 = vmatprep.subr.mxu0 0.0
    %1502 = vmatpush2.msra.mxu0 0.0
    %1503 = vmatprep.subr.mxu0 0.0
    %1504 = vmatpush2.msra.mxu0 0.0
    %1505 = vmatprep.subr.mxu0 0.0
    %1506 = vmatpush2.msra.mxu0 0.0
    %1507 = vmatprep.subr.mxu0 0.0
    %1508 = vmatpush2.msra.mxu0 0.0
    %1509 = vmatprep.subr.mxu0 0.0
    %1510 = vmatpush2.msra.mxu0 0.0
    %1511 = vmatprep.subr.mxu0 0.0
    %1512 = vmatpush2.msra.mxu0 0.0
    %1513 = vmatprep.subr.mxu0 0.0
    %1514 = vmatpush2.msra.mxu0 0.0
    %1515 = vmatprep.mubr.f32.mxu0 0.0
    %1516 = vmatmul.mubr.f32.gmra.mxu0 %v1449
    %v1517 = vpop.f32.mrf.mxu0
    %v1518 = vadd.f32 0.0, %v1517
    %v1519 = vpop.f32.mrf.mxu0
    %v1520 = vadd.f32 0.0, %v1519
    %1521 = vdwg.mxu0
    %v1522 = vadd.f32 %v1399, %v1518
    %v1523 = vadd.f32 %v1400, %v1520
    %v1524 = vxor.u32 %v1522, 2147483648
    %v1525 = vxor.u32 %v1523, 2147483648
    %v1526 = vmul.f32 %v1524, 1.442695
    %v1527 = vpow.pop %v1526
    %v1528 = vmul.f32 %v1525, 1.442695
    %v1529 = vpow.pop %v1528
    %v1530 = vadd.f32 %v1527, 1.0
    %v1531 = vadd.f32 %v1529, 1.0
    %v1532 = vrcp.pop %v1530
    %v1533 = vmul.f32 1.0, %v1532
    %v1534 = vrcp.pop %v1531
    %v1535 = vmul.f32 1.0, %v1534
    %v1536 = vtanh.pop %v1523
    %v1537 = vmul.f32 %v1533, 0.0
    %v1538 = vmul.f32 %v1533, %v1536
    %1540 = vrot.lane.b32.xlu0 %v1538, 64
    %v1541 = vpop.permute.xlu0 %1540
    %v1543 = vadd.f32 %v1537, %v1541
    %v1544 = vtanh.pop %v1543
    %v1545 = vmul.f32 %v1535, %v1544
    %1547 = vrot.lane.b32.xlu0 %v1545, 32
    %v1548 = vpop.permute.xlu0 %1547
    %vm1549 = vcmask 261120
    %v1550 = vsel %vm1549, %v1548, 0
    %1552 = vmatprep.subr.mxu0 0.0
    %1553 = vmatpush1.msra.mxu0 0.0
    %1554 = vmatprep.subr.mxu0 0.0
    %1555 = vmatpush1.msra.mxu0 0.0
    %1556 = vmatprep.subr.mxu0 0.0
    %1557 = vmatpush1.msra.mxu0 0.0
    %1558 = vmatprep.subr.mxu0 0.0
    %1559 = vmatpush1.msra.mxu0 0.0
    %1560 = vmatprep.subr.mxu0 0.0
    %1561 = vmatpush1.msra.mxu0 0.0
    %1562 = vmatprep.subr.mxu0 0.0
    %1563 = vmatpush1.msra.mxu0 0.0
    %1564 = vmatprep.subr.mxu0 0.0
    %1565 = vmatpush1.msra.mxu0 0.0
    %1566 = vmatprep.subr.mxu0 0.0
    %1567 = vmatpush1.msra.mxu0 0.0
    %1568 = vmatprep.subr.mxu0 0.0
    %1569 = vmatpush1.msra.mxu0 0.0
    %1570 = vmatprep.subr.mxu0 0.0
    %1571 = vmatpush1.msra.mxu0 0.0
    %1572 = vmatprep.subr.mxu0 0.0
    %1573 = vmatpush1.msra.mxu0 0.0
    %1574 = vmatprep.subr.mxu0 0.0
    %1575 = vmatpush1.msra.mxu0 0.0
    %1576 = vmatprep.subr.mxu0 %v251
    %1577 = vmatpush1.msra.mxu0 %v250
    %1578 = vmatprep.subr.mxu0 %v249
    %1579 = vmatpush1.msra.mxu0 %v248
    %1580 = vmatprep.subr.mxu0 %v247
    %1581 = vmatpush1.msra.mxu0 %v246
    %1582 = vmatprep.subr.mxu0 %v245
    %1583 = vmatpush1.msra.mxu0 %v244
    %1584 = vmatprep.subr.mxu0 0.0
    %1585 = vmatpush2.msra.mxu0 0.0
    %1586 = vmatprep.subr.mxu0 0.0
    %1587 = vmatpush2.msra.mxu0 0.0
    %1588 = vmatprep.subr.mxu0 0.0
    %1589 = vmatpush2.msra.mxu0 0.0
    %1590 = vmatprep.subr.mxu0 0.0
    %1591 = vmatpush2.msra.mxu0 0.0
    %1592 = vmatprep.subr.mxu0 0.0
    %1593 = vmatpush2.msra.mxu0 0.0
    %1594 = vmatprep.subr.mxu0 0.0
    %1595 = vmatpush2.msra.mxu0 0.0
    %1596 = vmatprep.subr.mxu0 0.0
    %1597 = vmatpush2.msra.mxu0 0.0
    %1598 = vmatprep.subr.mxu0 0.0
    %1599 = vmatpush2.msra.mxu0 0.0
    %1600 = vmatprep.subr.mxu0 0.0
    %1601 = vmatpush2.msra.mxu0 0.0
    %1602 = vmatprep.subr.mxu0 0.0
    %1603 = vmatpush2.msra.mxu0 0.0
    %1604 = vmatprep.subr.mxu0 0.0
    %1605 = vmatpush2.msra.mxu0 0.0
    %1606 = vmatprep.subr.mxu0 0.0
    %1607 = vmatpush2.msra.mxu0 0.0
    %1608 = vmatprep.subr.mxu0 0.0
    %1609 = vmatpush2.msra.mxu0 0.0
    %1610 = vmatprep.subr.mxu0 0.0
    %1611 = vmatpush2.msra.mxu0 0.0
    %1612 = vmatprep.subr.mxu0 0.0
    %1613 = vmatpush2.msra.mxu0 0.0
    %1614 = vmatprep.subr.mxu0 0.0
    %1615 = vmatpush2.msra.mxu0 0.0
    %1616 = vmatprep.mubr.f32.mxu0 0.0
    %1617 = vmatmul.mubr.f32.gmra.mxu0 %v1550
    %v1618 = vpop.f32.mrf.mxu0
    %v1619 = vadd.f32 0.0, %v1618
    %v1620 = vpop.f32.mrf.mxu0
    %v1621 = vadd.f32 0.0, %v1620
    %1622 = vdwg.mxu0
    %1623 = vrot.lane.b32.xlu0 %v1545, 64
    %v1624 = vpop.permute.xlu0 %1623
    %v1625 = vsel %vm1447, %v1624, 0
    %1627 = vmatprep.subr.mxu0 0.0
    %1628 = vmatpush1.msra.mxu0 0.0
    %1629 = vmatprep.subr.mxu0 0.0
    %1630 = vmatpush1.msra.mxu0 0.0
    %1631 = vmatprep.subr.mxu0 0.0
    %1632 = vmatpush1.msra.mxu0 0.0
    %1633 = vmatprep.subr.mxu0 0.0
    %1634 = vmatpush1.msra.mxu0 0.0
    %1635 = vmatprep.subr.mxu0 0.0
    %1636 = vmatpush1.msra.mxu0 0.0
    %1637 = vmatprep.subr.mxu0 0.0
    %1638 = vmatpush1.msra.mxu0 0.0
    %1639 = vmatprep.subr.mxu0 0.0
    %1640 = vmatpush1.msra.mxu0 0.0
    %1641 = vmatprep.subr.mxu0 0.0
    %1642 = vmatpush1.msra.mxu0 0.0
    %1643 = vmatprep.subr.mxu0 %v235
    %1644 = vmatpush1.msra.mxu0 %v234
    %1645 = vmatprep.subr.mxu0 %v233
    %1646 = vmatpush1.msra.mxu0 %v232
    %1647 = vmatprep.subr.mxu0 %v231
    %1648 = vmatpush1.msra.mxu0 %v230
    %1649 = vmatprep.subr.mxu0 %v229
    %1650 = vmatpush1.msra.mxu0 %v228
    %1651 = vmatprep.subr.mxu0 %v227
    %1652 = vmatpush1.msra.mxu0 %v226
    %1653 = vmatprep.subr.mxu0 %v225
    %1654 = vmatpush1.msra.mxu0 %v224
    %1655 = vmatprep.subr.mxu0 %v223
    %1656 = vmatpush1.msra.mxu0 %v222
    %1657 = vmatprep.subr.mxu0 %v221
    %1658 = vmatpush1.msra.mxu0 %v220
    %1659 = vmatprep.subr.mxu0 0.0
    %1660 = vmatpush2.msra.mxu0 0.0
    %1661 = vmatprep.subr.mxu0 0.0
    %1662 = vmatpush2.msra.mxu0 0.0
    %1663 = vmatprep.subr.mxu0 0.0
    %1664 = vmatpush2.msra.mxu0 0.0
    %1665 = vmatprep.subr.mxu0 0.0
    %1666 = vmatpush2.msra.mxu0 0.0
    %1667 = vmatprep.subr.mxu0 0.0
    %1668 = vmatpush2.msra.mxu0 0.0
    %1669 = vmatprep.subr.mxu0 0.0
    %1670 = vmatpush2.msra.mxu0 0.0
    %1671 = vmatprep.subr.mxu0 0.0
    %1672 = vmatpush2.msra.mxu0 0.0
    %1673 = vmatprep.subr.mxu0 0.0
    %1674 = vmatpush2.msra.mxu0 0.0
    %1675 = vmatprep.subr.mxu0 0.0
    %1676 = vmatpush2.msra.mxu0 0.0
    %1677 = vmatprep.subr.mxu0 0.0
    %1678 = vmatpush2.msra.mxu0 0.0
    %1679 = vmatprep.subr.mxu0 0.0
    %1680 = vmatpush2.msra.mxu0 0.0
    %1681 = vmatprep.subr.mxu0 0.0
    %1682 = vmatpush2.msra.mxu0 0.0
    %1683 = vmatprep.subr.mxu0 0.0
    %1684 = vmatpush2.msra.mxu0 0.0
    %1685 = vmatprep.subr.mxu0 0.0
    %1686 = vmatpush2.msra.mxu0 0.0
    %1687 = vmatprep.subr.mxu0 0.0
    %1688 = vmatpush2.msra.mxu0 0.0
    %1689 = vmatprep.subr.mxu0 0.0
    %1690 = vmatpush2.msra.mxu0 0.0
    %1691 = vmatprep.mubr.f32.mxu0 0.0
    %1692 = vmatmul.mubr.f32.gmra.mxu0 %v1625
    %v1693 = vpop.f32.mrf.mxu0
    %v1694 = vadd.f32 0.0, %v1693
    %v1695 = vpop.f32.mrf.mxu0
    %v1696 = vadd.f32 0.0, %v1695
    %1697 = vdwg.mxu0
    %v1698 = vadd.f32 %v1441, %v1694
    %v1699 = vadd.f32 %v1442, %v1696
    %v1700 = vxor.u32 %v1698, 2147483648
    %v1701 = vxor.u32 %v1699, 2147483648
    %v1702 = vmul.f32 %v1700, 1.442695
    %v1703 = vpow.pop %v1702
    %v1704 = vmul.f32 %v1701, 1.442695
    %v1705 = vpow.pop %v1704
    %v1706 = vadd.f32 %v1703, 1.0
    %v1707 = vadd.f32 %v1705, 1.0
    %v1708 = vrcp.pop %v1706
    %v1709 = vmul.f32 1.0, %v1708
    %v1710 = vrcp.pop %v1707
    %v1711 = vmul.f32 1.0, %v1710
    %v1712 = vtanh.pop %v1699
    %v1713 = vmul.f32 %v1709, %v1543
    %v1714 = vmul.f32 %v1709, %v1712
    %1716 = vrot.lane.b32.xlu0 %v1714, 64
    %v1717 = vpop.permute.xlu0 %1716
    %v1719 = vadd.f32 %v1713, %v1717
    %v1720 = vtanh.pop %v1719
    %v1721 = vmul.f32 %v1711, %v1720
    %1723 = vrot.lane.b32.xlu0 %v1721, 32
    %v1724 = vpop.permute.xlu0 %1723
    %v1725 = vsel %vm1549, %v1724, 0
    %1727 = vmatprep.subr.mxu0 0.0
    %1728 = vmatpush1.msra.mxu0 0.0
    %1729 = vmatprep.subr.mxu0 0.0
    %1730 = vmatpush1.msra.mxu0 0.0
    %1731 = vmatprep.subr.mxu0 0.0
    %1732 = vmatpush1.msra.mxu0 0.0
    %1733 = vmatprep.subr.mxu0 0.0
    %1734 = vmatpush1.msra.mxu0 0.0
    %1735 = vmatprep.subr.mxu0 0.0
    %1736 = vmatpush1.msra.mxu0 0.0
    %1737 = vmatprep.subr.mxu0 0.0
    %1738 = vmatpush1.msra.mxu0 0.0
    %1739 = vmatprep.subr.mxu0 0.0
    %1740 = vmatpush1.msra.mxu0 0.0
    %1741 = vmatprep.subr.mxu0 0.0
    %1742 = vmatpush1.msra.mxu0 0.0
    %1743 = vmatprep.subr.mxu0 0.0
    %1744 = vmatpush1.msra.mxu0 0.0
    %1745 = vmatprep.subr.mxu0 0.0
    %1746 = vmatpush1.msra.mxu0 0.0
    %1747 = vmatprep.subr.mxu0 0.0
    %1748 = vmatpush1.msra.mxu0 0.0
    %1749 = vmatprep.subr.mxu0 0.0
    %1750 = vmatpush1.msra.mxu0 0.0
    %1751 = vmatprep.subr.mxu0 %v251
    %1752 = vmatpush1.msra.mxu0 %v250
    %1753 = vmatprep.subr.mxu0 %v249
    %1754 = vmatpush1.msra.mxu0 %v248
    %1755 = vmatprep.subr.mxu0 %v247
    %1756 = vmatpush1.msra.mxu0 %v246
    %1757 = vmatprep.subr.mxu0 %v245
    %1758 = vmatpush1.msra.mxu0 %v244
    %1759 = vmatprep.subr.mxu0 0.0
    %1760 = vmatpush2.msra.mxu0 0.0
    %1761 = vmatprep.subr.mxu0 0.0
    %1762 = vmatpush2.msra.mxu0 0.0
    %1763 = vmatprep.subr.mxu0 0.0
    %1764 = vmatpush2.msra.mxu0 0.0
    %1765 = vmatprep.subr.mxu0 0.0
    %1766 = vmatpush2.msra.mxu0 0.0
    %1767 = vmatprep.subr.mxu0 0.0
    %1768 = vmatpush2.msra.mxu0 0.0
    %1769 = vmatprep.subr.mxu0 0.0
    %1770 = vmatpush2.msra.mxu0 0.0
    %1771 = vmatprep.subr.mxu0 0.0
    %1772 = vmatpush2.msra.mxu0 0.0
    %1773 = vmatprep.subr.mxu0 0.0
    %1774 = vmatpush2.msra.mxu0 0.0
    %1775 = vmatprep.subr.mxu0 0.0
    %1776 = vmatpush2.msra.mxu0 0.0
    %1777 = vmatprep.subr.mxu0 0.0
    %1778 = vmatpush2.msra.mxu0 0.0
    %1779 = vmatprep.subr.mxu0 0.0
    %1780 = vmatpush2.msra.mxu0 0.0
    %1781 = vmatprep.subr.mxu0 0.0
    %1782 = vmatpush2.msra.mxu0 0.0
    %1783 = vmatprep.subr.mxu0 0.0
    %1784 = vmatpush2.msra.mxu0 0.0
    %1785 = vmatprep.subr.mxu0 0.0
    %1786 = vmatpush2.msra.mxu0 0.0
    %1787 = vmatprep.subr.mxu0 0.0
    %1788 = vmatpush2.msra.mxu0 0.0
    %1789 = vmatprep.subr.mxu0 0.0
    %1790 = vmatpush2.msra.mxu0 0.0
    %1791 = vmatprep.mubr.f32.mxu0 0.0
    %1792 = vmatmul.mubr.f32.gmra.mxu0 %v1725
    %v1793 = vpop.f32.mrf.mxu0
    %v1794 = vadd.f32 0.0, %v1793
    %v1795 = vpop.f32.mrf.mxu0
    %v1796 = vadd.f32 0.0, %v1795
    %1797 = vdwg.mxu0
    %1798 = vrot.lane.b32.xlu0 %v1721, 64
    %v1799 = vpop.permute.xlu0 %1798
    %v1800 = vsel %vm1447, %v1799, 0
    %1802 = vmatprep.subr.mxu0 0.0
    %1803 = vmatpush1.msra.mxu0 0.0
    %1804 = vmatprep.subr.mxu0 0.0
    %1805 = vmatpush1.msra.mxu0 0.0
    %1806 = vmatprep.subr.mxu0 0.0
    %1807 = vmatpush1.msra.mxu0 0.0
    %1808 = vmatprep.subr.mxu0 0.0
    %1809 = vmatpush1.msra.mxu0 0.0
    %1810 = vmatprep.subr.mxu0 0.0
    %1811 = vmatpush1.msra.mxu0 0.0
    %1812 = vmatprep.subr.mxu0 0.0
    %1813 = vmatpush1.msra.mxu0 0.0
    %1814 = vmatprep.subr.mxu0 0.0
    %1815 = vmatpush1.msra.mxu0 0.0
    %1816 = vmatprep.subr.mxu0 0.0
    %1817 = vmatpush1.msra.mxu0 0.0
    %1818 = vmatprep.subr.mxu0 %v235
    %1819 = vmatpush1.msra.mxu0 %v234
    %1820 = vmatprep.subr.mxu0 %v233
    %1821 = vmatpush1.msra.mxu0 %v232
    %1822 = vmatprep.subr.mxu0 %v231
    %1823 = vmatpush1.msra.mxu0 %v230
    %1824 = vmatprep.subr.mxu0 %v229
    %1825 = vmatpush1.msra.mxu0 %v228
    %1826 = vmatprep.subr.mxu0 %v227
    %1827 = vmatpush1.msra.mxu0 %v226
    %1828 = vmatprep.subr.mxu0 %v225
    %1829 = vmatpush1.msra.mxu0 %v224
    %1830 = vmatprep.subr.mxu0 %v223
    %1831 = vmatpush1.msra.mxu0 %v222
    %1832 = vmatprep.subr.mxu0 %v221
    %1833 = vmatpush1.msra.mxu0 %v220
    %1834 = vmatprep.subr.mxu0 0.0
    %1835 = vmatpush2.msra.mxu0 0.0
    %1836 = vmatprep.subr.mxu0 0.0
    %1837 = vmatpush2.msra.mxu0 0.0
    %1838 = vmatprep.subr.mxu0 0.0
    %1839 = vmatpush2.msra.mxu0 0.0
    %1840 = vmatprep.subr.mxu0 0.0
    %1841 = vmatpush2.msra.mxu0 0.0
    %1842 = vmatprep.subr.mxu0 0.0
    %1843 = vmatpush2.msra.mxu0 0.0
    %1844 = vmatprep.subr.mxu0 0.0
    %1845 = vmatpush2.msra.mxu0 0.0
    %1846 = vmatprep.subr.mxu0 0.0
    %1847 = vmatpush2.msra.mxu0 0.0
    %1848 = vmatprep.subr.mxu0 0.0
    %1849 = vmatpush2.msra.mxu0 0.0
    %1850 = vmatprep.subr.mxu0 0.0
    %1851 = vmatpush2.msra.mxu0 0.0
    %1852 = vmatprep.subr.mxu0 0.0
    %1853 = vmatpush2.msra.mxu0 0.0
    %1854 = vmatprep.subr.mxu0 0.0
    %1855 = vmatpush2.msra.mxu0 0.0
    %1856 = vmatprep.subr.mxu0 0.0
    %1857 = vmatpush2.msra.mxu0 0.0
    %1858 = vmatprep.subr.mxu0 0.0
    %1859 = vmatpush2.msra.mxu0 0.0
    %1860 = vmatprep.subr.mxu0 0.0
    %1861 = vmatpush2.msra.mxu0 0.0
    %1862 = vmatprep.subr.mxu0 0.0
    %1863 = vmatpush2.msra.mxu0 0.0
    %1864 = vmatprep.subr.mxu0 0.0
    %1865 = vmatpush2.msra.mxu0 0.0
    %1866 = vmatprep.mubr.f32.mxu0 0.0
    %1867 = vmatmul.mubr.f32.gmra.mxu0 %v1800
    %v1868 = vpop.f32.mrf.mxu0
    %v1869 = vadd.f32 0.0, %v1868
    %v1870 = vpop.f32.mrf.mxu0
    %v1871 = vadd.f32 0.0, %v1870
    %1872 = vdwg.mxu0
    %v1873 = vadd.f32 %v1443, %v1869
    %v1874 = vadd.f32 %v1444, %v1871
    %v1875 = vxor.u32 %v1873, 2147483648
    %v1876 = vxor.u32 %v1874, 2147483648
    %v1877 = vmul.f32 %v1875, 1.442695
    %v1878 = vpow.pop %v1877
    %v1879 = vmul.f32 %v1876, 1.442695
    %v1880 = vpow.pop %v1879
    %v1881 = vadd.f32 %v1878, 1.0
    %v1882 = vadd.f32 %v1880, 1.0
    %v1883 = vrcp.pop %v1881
    %v1884 = vmul.f32 1.0, %v1883
    %v1885 = vrcp.pop %v1882
    %v1886 = vmul.f32 1.0, %v1885
    %v1887 = vtanh.pop %v1874
    %v1888 = vmul.f32 %v1884, %v1719
    %v1889 = vmul.f32 %v1884, %v1887
    %1891 = vrot.lane.b32.xlu0 %v1889, 64
    %v1892 = vpop.permute.xlu0 %1891
    %v1894 = vadd.f32 %v1888, %v1892
    %v1895 = vtanh.pop %v1894
    %v1896 = vmul.f32 %v1886, %v1895
    %1898 = vrot.lane.b32.xlu0 %v1896, 32
    %v1899 = vpop.permute.xlu0 %1898
    %v1900 = vsel %vm1549, %v1899, 0
    %1902 = vmatprep.subr.mxu0 0.0
    %1903 = vmatpush1.msra.mxu0 0.0
    %1904 = vmatprep.subr.mxu0 0.0
    %1905 = vmatpush1.msra.mxu0 0.0
    %1906 = vmatprep.subr.mxu0 0.0
    %1907 = vmatpush1.msra.mxu0 0.0
    %1908 = vmatprep.subr.mxu0 0.0
    %1909 = vmatpush1.msra.mxu0 0.0
    %1910 = vmatprep.subr.mxu0 0.0
    %1911 = vmatpush1.msra.mxu0 0.0
    %1912 = vmatprep.subr.mxu0 0.0
    %1913 = vmatpush1.msra.mxu0 0.0
    %1914 = vmatprep.subr.mxu0 0.0
    %1915 = vmatpush1.msra.mxu0 0.0
    %1916 = vmatprep.subr.mxu0 0.0
    %1917 = vmatpush1.msra.mxu0 0.0
    %1918 = vmatprep.subr.mxu0 0.0
    %1919 = vmatpush1.msra.mxu0 0.0
    %1920 = vmatprep.subr.mxu0 0.0
    %1921 = vmatpush1.msra.mxu0 0.0
    %1922 = vmatprep.subr.mxu0 0.0
    %1923 = vmatpush1.msra.mxu0 0.0
    %1924 = vmatprep.subr.mxu0 0.0
    %1925 = vmatpush1.msra.mxu0 0.0
    %1926 = vmatprep.subr.mxu0 %v251
    %1927 = vmatpush1.msra.mxu0 %v250
    %1928 = vmatprep.subr.mxu0 %v249
    %1929 = vmatpush1.msra.mxu0 %v248
    %1930 = vmatprep.subr.mxu0 %v247
    %1931 = vmatpush1.msra.mxu0 %v246
    %1932 = vmatprep.subr.mxu0 %v245
    %1933 = vmatpush1.msra.mxu0 %v244
    %1934 = vmatprep.subr.mxu0 0.0
    %1935 = vmatpush2.msra.mxu0 0.0
    %1936 = vmatprep.subr.mxu0 0.0
    %1937 = vmatpush2.msra.mxu0 0.0
    %1938 = vmatprep.subr.mxu0 0.0
    %1939 = vmatpush2.msra.mxu0 0.0
    %1940 = vmatprep.subr.mxu0 0.0
    %1941 = vmatpush2.msra.mxu0 0.0
    %1942 = vmatprep.subr.mxu0 0.0
    %1943 = vmatpush2.msra.mxu0 0.0
    %1944 = vmatprep.subr.mxu0 0.0
    %1945 = vmatpush2.msra.mxu0 0.0
    %1946 = vmatprep.subr.mxu0 0.0
    %1947 = vmatpush2.msra.mxu0 0.0
    %1948 = vmatprep.subr.mxu0 0.0
    %1949 = vmatpush2.msra.mxu0 0.0
    %1950 = vmatprep.subr.mxu0 0.0
    %1951 = vmatpush2.msra.mxu0 0.0
    %1952 = vmatprep.subr.mxu0 0.0
    %1953 = vmatpush2.msra.mxu0 0.0
    %1954 = vmatprep.subr.mxu0 0.0
    %1955 = vmatpush2.msra.mxu0 0.0
    %1956 = vmatprep.subr.mxu0 0.0
    %1957 = vmatpush2.msra.mxu0 0.0
    %1958 = vmatprep.subr.mxu0 0.0
    %1959 = vmatpush2.msra.mxu0 0.0
    %1960 = vmatprep.subr.mxu0 0.0
    %1961 = vmatpush2.msra.mxu0 0.0
    %1962 = vmatprep.subr.mxu0 0.0
    %1963 = vmatpush2.msra.mxu0 0.0
    %1964 = vmatprep.subr.mxu0 0.0
    %1965 = vmatpush2.msra.mxu0 0.0
    %1966 = vmatprep.mubr.f32.mxu0 0.0
    %1967 = vmatmul.mubr.f32.gmra.mxu0 %v1900
    %v1968 = vpop.f32.mrf.mxu0
    %v1969 = vadd.f32 0.0, %v1968
    %v1970 = vpop.f32.mrf.mxu0
    %v1971 = vadd.f32 0.0, %v1970
    %1972 = vdwg.mxu0
    %1973 = vrot.lane.b32.xlu0 %v1896, 64
    %v1974 = vpop.permute.xlu0 %1973
    %v1975 = vsel %vm1447, %v1974, 0
    %1977 = vmatprep.subr.mxu0 0.0
    %1978 = vmatpush1.msra.mxu0 0.0
    %1979 = vmatprep.subr.mxu0 0.0
    %1980 = vmatpush1.msra.mxu0 0.0
    %1981 = vmatprep.subr.mxu0 0.0
    %1982 = vmatpush1.msra.mxu0 0.0
    %1983 = vmatprep.subr.mxu0 0.0
    %1984 = vmatpush1.msra.mxu0 0.0
    %1985 = vmatprep.subr.mxu0 0.0
    %1986 = vmatpush1.msra.mxu0 0.0
    %1987 = vmatprep.subr.mxu0 0.0
    %1988 = vmatpush1.msra.mxu0 0.0
    %1989 = vmatprep.subr.mxu0 0.0
    %1990 = vmatpush1.msra.mxu0 0.0
    %1991 = vmatprep.subr.mxu0 0.0
    %1992 = vmatpush1.msra.mxu0 0.0
    %1993 = vmatprep.subr.mxu0 %v235
    %1994 = vmatpush1.msra.mxu0 %v234
    %1995 = vmatprep.subr.mxu0 %v233
    %1996 = vmatpush1.msra.mxu0 %v232
    %1997 = vmatprep.subr.mxu0 %v231
    %1998 = vmatpush1.msra.mxu0 %v230
    %1999 = vmatprep.subr.mxu0 %v229
    %2000 = vmatpush1.msra.mxu0 %v228
    %2001 = vmatprep.subr.mxu0 %v227
    %2002 = vmatpush1.msra.mxu0 %v226
    %2003 = vmatprep.subr.mxu0 %v225
    %2004 = vmatpush1.msra.mxu0 %v224
    %2005 = vmatprep.subr.mxu0 %v223
    %2006 = vmatpush1.msra.mxu0 %v222
    %2007 = vmatprep.subr.mxu0 %v221
    %2008 = vmatpush1.msra.mxu0 %v220
    %2009 = vmatprep.subr.mxu0 0.0
    %2010 = vmatpush2.msra.mxu0 0.0
    %2011 = vmatprep.subr.mxu0 0.0
    %2012 = vmatpush2.msra.mxu0 0.0
    %2013 = vmatprep.subr.mxu0 0.0
    %2014 = vmatpush2.msra.mxu0 0.0
    %2015 = vmatprep.subr.mxu0 0.0
    %2016 = vmatpush2.msra.mxu0 0.0
    %2017 = vmatprep.subr.mxu0 0.0
    %2018 = vmatpush2.msra.mxu0 0.0
    %2019 = vmatprep.subr.mxu0 0.0
    %2020 = vmatpush2.msra.mxu0 0.0
    %2021 = vmatprep.subr.mxu0 0.0
    %2022 = vmatpush2.msra.mxu0 0.0
    %2023 = vmatprep.subr.mxu0 0.0
    %2024 = vmatpush2.msra.mxu0 0.0
    %2025 = vmatprep.subr.mxu0 0.0
    %2026 = vmatpush2.msra.mxu0 0.0
    %2027 = vmatprep.subr.mxu0 0.0
    %2028 = vmatpush2.msra.mxu0 0.0
    %2029 = vmatprep.subr.mxu0 0.0
    %2030 = vmatpush2.msra.mxu0 0.0
    %2031 = vmatprep.subr.mxu0 0.0
    %2032 = vmatpush2.msra.mxu0 0.0
    %2033 = vmatprep.subr.mxu0 0.0
    %2034 = vmatpush2.msra.mxu0 0.0
    %2035 = vmatprep.subr.mxu0 0.0
    %2036 = vmatpush2.msra.mxu0 0.0
    %2037 = vmatprep.subr.mxu0 0.0
    %2038 = vmatpush2.msra.mxu0 0.0
    %2039 = vmatprep.subr.mxu0 0.0
    %2040 = vmatpush2.msra.mxu0 0.0
    %2041 = vmatprep.mubr.f32.mxu0 0.0
    %2042 = vmatmul.mubr.f32.gmra.mxu0 %v1975
    %v2043 = vpop.f32.mrf.mxu0
    %v2044 = vadd.f32 0.0, %v2043
    %v2045 = vpop.f32.mrf.mxu0
    %v2046 = vadd.f32 0.0, %v2045
    %2047 = vdwg.mxu0
    %v2048 = vadd.f32 %v1445, %v2044
    %v2049 = vadd.f32 %v1446, %v2046
    %v2050 = vxor.u32 %v2048, 2147483648
    %v2051 = vxor.u32 %v2049, 2147483648
    %v2052 = vmul.f32 %v2050, 1.442695
    %v2053 = vpow.pop %v2052
    %v2054 = vmul.f32 %v2051, 1.442695
    %v2055 = vpow.pop %v2054
    %v2056 = vadd.f32 %v2053, 1.0
    %v2057 = vadd.f32 %v2055, 1.0
    %v2058 = vrcp.pop %v2056
    %v2059 = vmul.f32 1.0, %v2058
    %v2060 = vrcp.pop %v2057
    %v2061 = vmul.f32 1.0, %v2060
    %v2062 = vtanh.pop %v2049
    %v2063 = vmul.f32 %v2059, %v1894
    %v2064 = vmul.f32 %v2059, %v2062
    %2066 = vrot.lane.b32.xlu0 %v2064, 64
    %v2067 = vpop.permute.xlu0 %2066
    %v2069 = vadd.f32 %v2063, %v2067
    %v2070 = vtanh.pop %v2069
    %v2071 = vmul.f32 %v2061, %v2070
    %2073 = vrot.lane.b32.xlu0 %v2071, 32
    %v2074 = vpop.permute.xlu0 %2073
    %v2075 = vsel %vm1549, %v2074, 0
    %2077 = vmatprep.subr.mxu0 0.0
    %2078 = vmatpush1.msra.mxu0 0.0
    %2079 = vmatprep.subr.mxu0 0.0
    %2080 = vmatpush1.msra.mxu0 0.0
    %2081 = vmatprep.subr.mxu0 0.0
    %2082 = vmatpush1.msra.mxu0 0.0
    %2083 = vmatprep.subr.mxu0 0.0
    %2084 = vmatpush1.msra.mxu0 0.0
    %2085 = vmatprep.subr.mxu0 0.0
    %2086 = vmatpush1.msra.mxu0 0.0
    %2087 = vmatprep.subr.mxu0 0.0
    %2088 = vmatpush1.msra.mxu0 0.0
    %2089 = vmatprep.subr.mxu0 0.0
    %2090 = vmatpush1.msra.mxu0 0.0
    %2091 = vmatprep.subr.mxu0 0.0
    %2092 = vmatpush1.msra.mxu0 0.0
    %2093 = vmatprep.subr.mxu0 0.0
    %2094 = vmatpush1.msra.mxu0 0.0
    %2095 = vmatprep.subr.mxu0 0.0
    %2096 = vmatpush1.msra.mxu0 0.0
    %2097 = vmatprep.subr.mxu0 0.0
    %2098 = vmatpush1.msra.mxu0 0.0
    %2099 = vmatprep.subr.mxu0 0.0
    %2100 = vmatpush1.msra.mxu0 0.0
    %2101 = vmatprep.subr.mxu0 %v251
    %2102 = vmatpush1.msra.mxu0 %v250
    %2103 = vmatprep.subr.mxu0 %v249
    %2104 = vmatpush1.msra.mxu0 %v248
    %2105 = vmatprep.subr.mxu0 %v247
    %2106 = vmatpush1.msra.mxu0 %v246
    %2107 = vmatprep.subr.mxu0 %v245
    %2108 = vmatpush1.msra.mxu0 %v244
    %2109 = vmatprep.subr.mxu0 0.0
    %2110 = vmatpush2.msra.mxu0 0.0
    %2111 = vmatprep.subr.mxu0 0.0
    %2112 = vmatpush2.msra.mxu0 0.0
    %2113 = vmatprep.subr.mxu0 0.0
    %2114 = vmatpush2.msra.mxu0 0.0
    %2115 = vmatprep.subr.mxu0 0.0
    %2116 = vmatpush2.msra.mxu0 0.0
    %2117 = vmatprep.subr.mxu0 0.0
    %2118 = vmatpush2.msra.mxu0 0.0
    %2119 = vmatprep.subr.mxu0 0.0
    %2120 = vmatpush2.msra.mxu0 0.0
    %2121 = vmatprep.subr.mxu0 0.0
    %2122 = vmatpush2.msra.mxu0 0.0
    %2123 = vmatprep.subr.mxu0 0.0
    %2124 = vmatpush2.msra.mxu0 0.0
    %2125 = vmatprep.subr.mxu0 0.0
    %2126 = vmatpush2.msra.mxu0 0.0
    %2127 = vmatprep.subr.mxu0 0.0
    %2128 = vmatpush2.msra.mxu0 0.0
    %2129 = vmatprep.subr.mxu0 0.0
    %2130 = vmatpush2.msra.mxu0 0.0
    %2131 = vmatprep.subr.mxu0 0.0
    %2132 = vmatpush2.msra.mxu0 0.0
    %2133 = vmatprep.subr.mxu0 0.0
    %2134 = vmatpush2.msra.mxu0 0.0
    %2135 = vmatprep.subr.mxu0 0.0
    %2136 = vmatpush2.msra.mxu0 0.0
    %2137 = vmatprep.subr.mxu0 0.0
    %2138 = vmatpush2.msra.mxu0 0.0
    %2139 = vmatprep.subr.mxu0 0.0
    %2140 = vmatpush2.msra.mxu0 0.0
    %2141 = vmatprep.mubr.f32.mxu0 0.0
    %2142 = vmatmul.mubr.f32.gmra.mxu0 %v2075
    %v2143 = vpop.f32.mrf.mxu0
    %v2144 = vadd.f32 0.0, %v2143
    %v2145 = vpop.f32.mrf.mxu0
    %v2146 = vadd.f32 0.0, %v2145
    %2147 = vdwg.mxu0
    %v2148 = vsel %vm1549, %v1624, 0
    %2150 = vmatprep.subr.mxu0 0.0
    %2151 = vmatpush1.msra.mxu0 0.0
    %2152 = vmatprep.subr.mxu0 0.0
    %2153 = vmatpush1.msra.mxu0 0.0
    %2154 = vmatprep.subr.mxu0 0.0
    %2155 = vmatpush1.msra.mxu0 0.0
    %2156 = vmatprep.subr.mxu0 0.0
    %2157 = vmatpush1.msra.mxu0 0.0
    %2158 = vmatprep.subr.mxu0 0.0
    %2159 = vmatpush1.msra.mxu0 0.0
    %2160 = vmatprep.subr.mxu0 0.0
    %2161 = vmatpush1.msra.mxu0 0.0
    %2162 = vmatprep.subr.mxu0 0.0
    %2163 = vmatpush1.msra.mxu0 0.0
    %2164 = vmatprep.subr.mxu0 0.0
    %2165 = vmatpush1.msra.mxu0 0.0
    %2166 = vmatprep.subr.mxu0 0.0
    %2167 = vmatpush1.msra.mxu0 0.0
    %2168 = vmatprep.subr.mxu0 0.0
    %2169 = vmatpush1.msra.mxu0 0.0
    %2170 = vmatprep.subr.mxu0 0.0
    %2171 = vmatpush1.msra.mxu0 0.0
    %2172 = vmatprep.subr.mxu0 0.0
    %2173 = vmatpush1.msra.mxu0 0.0
    %2174 = vmatprep.subr.mxu0 %v243
    %2175 = vmatpush1.msra.mxu0 %v242
    %2176 = vmatprep.subr.mxu0 %v241
    %2177 = vmatpush1.msra.mxu0 %v240
    %2178 = vmatprep.subr.mxu0 %v239
    %2179 = vmatpush1.msra.mxu0 %v238
    %2180 = vmatprep.subr.mxu0 %v237
    %2181 = vmatpush1.msra.mxu0 %v236
    %2182 = vmatprep.subr.mxu0 0.0
    %2183 = vmatpush2.msra.mxu0 0.0
    %2184 = vmatprep.subr.mxu0 0.0
    %2185 = vmatpush2.msra.mxu0 0.0
    %2186 = vmatprep.subr.mxu0 0.0
    %2187 = vmatpush2.msra.mxu0 0.0
    %2188 = vmatprep.subr.mxu0 0.0
    %2189 = vmatpush2.msra.mxu0 0.0
    %2190 = vmatprep.subr.mxu0 0.0
    %2191 = vmatpush2.msra.mxu0 0.0
    %2192 = vmatprep.subr.mxu0 0.0
    %2193 = vmatpush2.msra.mxu0 0.0
    %2194 = vmatprep.subr.mxu0 0.0
    %2195 = vmatpush2.msra.mxu0 0.0
    %2196 = vmatprep.subr.mxu0 0.0
    %2197 = vmatpush2.msra.mxu0 0.0
    %2198 = vmatprep.subr.mxu0 0.0
    %2199 = vmatpush2.msra.mxu0 0.0
    %2200 = vmatprep.subr.mxu0 0.0
    %2201 = vmatpush2.msra.mxu0 0.0
    %2202 = vmatprep.subr.mxu0 0.0
    %2203 = vmatpush2.msra.mxu0 0.0
    %2204 = vmatprep.subr.mxu0 0.0
    %2205 = vmatpush2.msra.mxu0 0.0
    %2206 = vmatprep.subr.mxu0 0.0
    %2207 = vmatpush2.msra.mxu0 0.0
    %2208 = vmatprep.subr.mxu0 0.0
    %2209 = vmatpush2.msra.mxu0 0.0
    %2210 = vmatprep.subr.mxu0 0.0
    %2211 = vmatpush2.msra.mxu0 0.0
    %2212 = vmatprep.subr.mxu0 0.0
    %2213 = vmatpush2.msra.mxu0 0.0
    %2214 = vmatprep.mubr.f32.mxu0 0.0
    %2215 = vmatmul.mubr.f32.gmra.mxu0 %v2148
    %v2216 = vpop.f32.mrf.mxu0
    %v2217 = vadd.f32 %v2144, %v2216
    %v2218 = vpop.f32.mrf.mxu0
    %v2219 = vadd.f32 %v2146, %v2218
    %2220 = vdwg.mxu0
    %v2222 = vlaneseq
    %v2223 = vshrl.u32 %v2222, 7
    %v2224 = vsub.s32 0, %v2223
    %v2225 = vrot.slane %v218, %v2224
    %v2226 = vlaneseq
    %v2227 = vshrl.u32 %v2226, 7
    %v2228 = vsub.s32 1, %v2227
    %v2229 = vrot.slane %v218, %v2228
    %v2232 = vadd.f32 %v2217, %v2225
    %v2233 = vadd.f32 %v2219, %v2229
    %v2234 = vsel %vm1549, %v1799, 0
    %2236 = vmatprep.subr.mxu0 0.0
    %2237 = vmatpush1.msra.mxu0 0.0
    %2238 = vmatprep.subr.mxu0 0.0
    %2239 = vmatpush1.msra.mxu0 0.0
    %2240 = vmatprep.subr.mxu0 0.0
    %2241 = vmatpush1.msra.mxu0 0.0
    %2242 = vmatprep.subr.mxu0 0.0
    %2243 = vmatpush1.msra.mxu0 0.0
    %2244 = vmatprep.subr.mxu0 0.0
    %2245 = vmatpush1.msra.mxu0 0.0
    %2246 = vmatprep.subr.mxu0 0.0
    %2247 = vmatpush1.msra.mxu0 0.0
    %2248 = vmatprep.subr.mxu0 0.0
    %2249 = vmatpush1.msra.mxu0 0.0
    %2250 = vmatprep.subr.mxu0 0.0
    %2251 = vmatpush1.msra.mxu0 0.0
    %2252 = vmatprep.subr.mxu0 0.0
    %2253 = vmatpush1.msra.mxu0 0.0
    %2254 = vmatprep.subr.mxu0 0.0
    %2255 = vmatpush1.msra.mxu0 0.0
    %2256 = vmatprep.subr.mxu0 0.0
    %2257 = vmatpush1.msra.mxu0 0.0
    %2258 = vmatprep.subr.mxu0 0.0
    %2259 = vmatpush1.msra.mxu0 0.0
    %2260 = vmatprep.subr.mxu0 %v243
    %2261 = vmatpush1.msra.mxu0 %v242
    %2262 = vmatprep.subr.mxu0 %v241
    %2263 = vmatpush1.msra.mxu0 %v240
    %2264 = vmatprep.subr.mxu0 %v239
    %2265 = vmatpush1.msra.mxu0 %v238
    %2266 = vmatprep.subr.mxu0 %v237
    %2267 = vmatpush1.msra.mxu0 %v236
    %2268 = vmatprep.subr.mxu0 0.0
    %2269 = vmatpush2.msra.mxu0 0.0
    %2270 = vmatprep.subr.mxu0 0.0
    %2271 = vmatpush2.msra.mxu0 0.0
    %2272 = vmatprep.subr.mxu0 0.0
    %2273 = vmatpush2.msra.mxu0 0.0
    %2274 = vmatprep.subr.mxu0 0.0
    %2275 = vmatpush2.msra.mxu0 0.0
    %2276 = vmatprep.subr.mxu0 0.0
    %2277 = vmatpush2.msra.mxu0 0.0
    %2278 = vmatprep.subr.mxu0 0.0
    %2279 = vmatpush2.msra.mxu0 0.0
    %2280 = vmatprep.subr.mxu0 0.0
    %2281 = vmatpush2.msra.mxu0 0.0
    %2282 = vmatprep.subr.mxu0 0.0
    %2283 = vmatpush2.msra.mxu0 0.0
    %2284 = vmatprep.subr.mxu0 0.0
    %2285 = vmatpush2.msra.mxu0 0.0
    %2286 = vmatprep.subr.mxu0 0.0
    %2287 = vmatpush2.msra.mxu0 0.0
    %2288 = vmatprep.subr.mxu0 0.0
    %2289 = vmatpush2.msra.mxu0 0.0
    %2290 = vmatprep.subr.mxu0 0.0
    %2291 = vmatpush2.msra.mxu0 0.0
    %2292 = vmatprep.subr.mxu0 0.0
    %2293 = vmatpush2.msra.mxu0 0.0
    %2294 = vmatprep.subr.mxu0 0.0
    %2295 = vmatpush2.msra.mxu0 0.0
    %2296 = vmatprep.subr.mxu0 0.0
    %2297 = vmatpush2.msra.mxu0 0.0
    %2298 = vmatprep.subr.mxu0 0.0
    %2299 = vmatpush2.msra.mxu0 0.0
    %2300 = vmatprep.mubr.f32.mxu0 0.0
    %2301 = vmatmul.mubr.f32.gmra.mxu0 %v2234
    %v2302 = vpop.f32.mrf.mxu0
    %v2303 = vadd.f32 %v1969, %v2302
    %v2304 = vpop.f32.mrf.mxu0
    %v2305 = vadd.f32 %v1971, %v2304
    %2306 = vdwg.mxu0
    %v2307 = vadd.f32 %v2303, %v2225
    %v2308 = vadd.f32 %v2305, %v2229
    %v2309 = vsel %vm1549, %v1974, 0
    %2311 = vmatprep.subr.mxu0 0.0
    %2312 = vmatpush1.msra.mxu0 0.0
    %2313 = vmatprep.subr.mxu0 0.0
    %2314 = vmatpush1.msra.mxu0 0.0
    %2315 = vmatprep.subr.mxu0 0.0
    %2316 = vmatpush1.msra.mxu0 0.0
    %2317 = vmatprep.subr.mxu0 0.0
    %2318 = vmatpush1.msra.mxu0 0.0
    %2319 = vmatprep.subr.mxu0 0.0
    %2320 = vmatpush1.msra.mxu0 0.0
    %2321 = vmatprep.subr.mxu0 0.0
    %2322 = vmatpush1.msra.mxu0 0.0
    %2323 = vmatprep.subr.mxu0 0.0
    %2324 = vmatpush1.msra.mxu0 0.0
    %2325 = vmatprep.subr.mxu0 0.0
    %2326 = vmatpush1.msra.mxu0 0.0
    %2327 = vmatprep.subr.mxu0 0.0
    %2328 = vmatpush1.msra.mxu0 0.0
    %2329 = vmatprep.subr.mxu0 0.0
    %2330 = vmatpush1.msra.mxu0 0.0
    %2331 = vmatprep.subr.mxu0 0.0
    %2332 = vmatpush1.msra.mxu0 0.0
    %2333 = vmatprep.subr.mxu0 0.0
    %2334 = vmatpush1.msra.mxu0 0.0
    %2335 = vmatprep.subr.mxu0 %v243
    %2336 = vmatpush1.msra.mxu0 %v242
    %2337 = vmatprep.subr.mxu0 %v241
    %2338 = vmatpush1.msra.mxu0 %v240
    %2339 = vmatprep.subr.mxu0 %v239
    %2340 = vmatpush1.msra.mxu0 %v238
    %2341 = vmatprep.subr.mxu0 %v237
    %2342 = vmatpush1.msra.mxu0 %v236
    %2343 = vmatprep.subr.mxu0 0.0
    %2344 = vmatpush2.msra.mxu0 0.0
    %2345 = vmatprep.subr.mxu0 0.0
    %2346 = vmatpush2.msra.mxu0 0.0
    %2347 = vmatprep.subr.mxu0 0.0
    %2348 = vmatpush2.msra.mxu0 0.0
    %2349 = vmatprep.subr.mxu0 0.0
    %2350 = vmatpush2.msra.mxu0 0.0
    %2351 = vmatprep.subr.mxu0 0.0
    %2352 = vmatpush2.msra.mxu0 0.0
    %2353 = vmatprep.subr.mxu0 0.0
    %2354 = vmatpush2.msra.mxu0 0.0
    %2355 = vmatprep.subr.mxu0 0.0
    %2356 = vmatpush2.msra.mxu0 0.0
    %2357 = vmatprep.subr.mxu0 0.0
    %2358 = vmatpush2.msra.mxu0 0.0
    %2359 = vmatprep.subr.mxu0 0.0
    %2360 = vmatpush2.msra.mxu0 0.0
    %2361 = vmatprep.subr.mxu0 0.0
    %2362 = vmatpush2.msra.mxu0 0.0
    %2363 = vmatprep.subr.mxu0 0.0
    %2364 = vmatpush2.msra.mxu0 0.0
    %2365 = vmatprep.subr.mxu0 0.0
    %2366 = vmatpush2.msra.mxu0 0.0
    %2367 = vmatprep.subr.mxu0 0.0
    %2368 = vmatpush2.msra.mxu0 0.0
    %2369 = vmatprep.subr.mxu0 0.0
    %2370 = vmatpush2.msra.mxu0 0.0
    %2371 = vmatprep.subr.mxu0 0.0
    %2372 = vmatpush2.msra.mxu0 0.0
    %2373 = vmatprep.subr.mxu0 0.0
    %2374 = vmatpush2.msra.mxu0 0.0
    %2375 = vmatprep.mubr.f32.mxu0 0.0
    %2376 = vmatmul.mubr.f32.gmra.mxu0 %v2309
    %v2377 = vpop.f32.mrf.mxu0
    %v2378 = vadd.f32 %v1794, %v2377
    %v2379 = vpop.f32.mrf.mxu0
    %v2380 = vadd.f32 %v1796, %v2379
    %2381 = vdwg.mxu0
    %v2382 = vadd.f32 %v2378, %v2225
    %v2383 = vadd.f32 %v2380, %v2229
    %2384 = vrot.lane.b32.xlu0 %v2071, 64
    %v2385 = vpop.permute.xlu0 %2384
    %v2386 = vsel %vm1549, %v2385, 0
    %2388 = vmatprep.subr.mxu0 0.0
    %2389 = vmatpush1.msra.mxu0 0.0
    %2390 = vmatprep.subr.mxu0 0.0
    %2391 = vmatpush1.msra.mxu0 0.0
    %2392 = vmatprep.subr.mxu0 0.0
    %2393 = vmatpush1.msra.mxu0 0.0
    %2394 = vmatprep.subr.mxu0 0.0
    %2395 = vmatpush1.msra.mxu0 0.0
    %2396 = vmatprep.subr.mxu0 0.0
    %2397 = vmatpush1.msra.mxu0 0.0
    %2398 = vmatprep.subr.mxu0 0.0
    %2399 = vmatpush1.msra.mxu0 0.0
    %2400 = vmatprep.subr.mxu0 0.0
    %2401 = vmatpush1.msra.mxu0 0.0
    %2402 = vmatprep.subr.mxu0 0.0
    %2403 = vmatpush1.msra.mxu0 0.0
    %2404 = vmatprep.subr.mxu0 0.0
    %2405 = vmatpush1.msra.mxu0 0.0
    %2406 = vmatprep.subr.mxu0 0.0
    %2407 = vmatpush1.msra.mxu0 0.0
    %2408 = vmatprep.subr.mxu0 0.0
    %2409 = vmatpush1.msra.mxu0 0.0
    %2410 = vmatprep.subr.mxu0 0.0
    %2411 = vmatpush1.msra.mxu0 0.0
    %2412 = vmatprep.subr.mxu0 %v243
    %2413 = vmatpush1.msra.mxu0 %v242
    %2414 = vmatprep.subr.mxu0 %v241
    %2415 = vmatpush1.msra.mxu0 %v240
    %2416 = vmatprep.subr.mxu0 %v239
    %2417 = vmatpush1.msra.mxu0 %v238
    %2418 = vmatprep.subr.mxu0 %v237
    %2419 = vmatpush1.msra.mxu0 %v236
    %2420 = vmatprep.subr.mxu0 0.0
    %2421 = vmatpush2.msra.mxu0 0.0
    %2422 = vmatprep.subr.mxu0 0.0
    %2423 = vmatpush2.msra.mxu0 0.0
    %2424 = vmatprep.subr.mxu0 0.0
    %2425 = vmatpush2.msra.mxu0 0.0
    %2426 = vmatprep.subr.mxu0 0.0
    %2427 = vmatpush2.msra.mxu0 0.0
    %2428 = vmatprep.subr.mxu0 0.0
    %2429 = vmatpush2.msra.mxu0 0.0
    %2430 = vmatprep.subr.mxu0 0.0
    %2431 = vmatpush2.msra.mxu0 0.0
    %2432 = vmatprep.subr.mxu0 0.0
    %2433 = vmatpush2.msra.mxu0 0.0
    %2434 = vmatprep.subr.mxu0 0.0
    %2435 = vmatpush2.msra.mxu0 0.0
    %2436 = vmatprep.subr.mxu0 0.0
    %2437 = vmatpush2.msra.mxu0 0.0
    %2438 = vmatprep.subr.mxu0 0.0
    %2439 = vmatpush2.msra.mxu0 0.0
    %2440 = vmatprep.subr.mxu0 0.0
    %2441 = vmatpush2.msra.mxu0 0.0
    %2442 = vmatprep.subr.mxu0 0.0
    %2443 = vmatpush2.msra.mxu0 0.0
    %2444 = vmatprep.subr.mxu0 0.0
    %2445 = vmatpush2.msra.mxu0 0.0
    %2446 = vmatprep.subr.mxu0 0.0
    %2447 = vmatpush2.msra.mxu0 0.0
    %2448 = vmatprep.subr.mxu0 0.0
    %2449 = vmatpush2.msra.mxu0 0.0
    %2450 = vmatprep.subr.mxu0 0.0
    %2451 = vmatpush2.msra.mxu0 0.0
    %2452 = vmatprep.mubr.f32.mxu0 0.0
    %2453 = vmatmul.mubr.f32.gmra.mxu0 %v2386
    %v2454 = vpop.f32.mrf.mxu0
    %v2455 = vadd.f32 %v1619, %v2454
    %v2456 = vpop.f32.mrf.mxu0
    %v2457 = vadd.f32 %v1621, %v2456
    %2458 = vdwg.mxu0
    %v2459 = vadd.f32 %v2455, %v2225
    %v2460 = vadd.f32 %v2457, %v2229
    %v2461 = vsel %vm1356, %v2232, %v2459
    %v2462 = vsel %vm1357, %v2233, %v2460
    %v2463 = vsel %vm1356, %v2307, %v2382
    %v2464 = vsel %vm1357, %v2308, %v2383
    %v2465 = vsel %vm1356, %v2382, %v2307
    %v2466 = vsel %vm1357, %v2383, %v2308
    %v2467 = vsel %vm1356, %v2459, %v2232
    %v2468 = vsel %vm1357, %v2460, %v2233
    %2469 = vmatprep.subr.mxu0 0.0
    %2470 = vmatpush1.msra.mxu0 0.0
    %2471 = vmatprep.subr.mxu0 0.0
    %2472 = vmatpush1.msra.mxu0 0.0
    %2473 = vmatprep.subr.mxu0 0.0
    %2474 = vmatpush1.msra.mxu0 0.0
    %2475 = vmatprep.subr.mxu0 0.0
    %2476 = vmatpush1.msra.mxu0 0.0
    %2477 = vmatprep.subr.mxu0 0.0
    %2478 = vmatpush1.msra.mxu0 0.0
    %2479 = vmatprep.subr.mxu0 0.0
    %2480 = vmatpush1.msra.mxu0 0.0
    %2481 = vmatprep.subr.mxu0 0.0
    %2482 = vmatpush1.msra.mxu0 0.0
    %2483 = vmatprep.subr.mxu0 0.0
    %2484 = vmatpush1.msra.mxu0 0.0
    %2485 = vmatprep.subr.mxu0 %v267
    %2486 = vmatpush1.msra.mxu0 %v266
    %2487 = vmatprep.subr.mxu0 %v265
    %2488 = vmatpush1.msra.mxu0 %v264
    %2489 = vmatprep.subr.mxu0 %v263
    %2490 = vmatpush1.msra.mxu0 %v262
    %2491 = vmatprep.subr.mxu0 %v261
    %2492 = vmatpush1.msra.mxu0 %v260
    %2493 = vmatprep.subr.mxu0 %v259
    %2494 = vmatpush1.msra.mxu0 %v258
    %2495 = vmatprep.subr.mxu0 %v257
    %2496 = vmatpush1.msra.mxu0 %v256
    %2497 = vmatprep.subr.mxu0 %v255
    %2498 = vmatpush1.msra.mxu0 %v254
    %2499 = vmatprep.subr.mxu0 %v253
    %2500 = vmatpush1.msra.mxu0 %v252
    %2501 = vmatprep.subr.mxu0 0.0
    %2502 = vmatpush2.msra.mxu0 0.0
    %2503 = vmatprep.subr.mxu0 0.0
    %2504 = vmatpush2.msra.mxu0 0.0
    %2505 = vmatprep.subr.mxu0 0.0
    %2506 = vmatpush2.msra.mxu0 0.0
    %2507 = vmatprep.subr.mxu0 0.0
    %2508 = vmatpush2.msra.mxu0 0.0
    %2509 = vmatprep.subr.mxu0 0.0
    %2510 = vmatpush2.msra.mxu0 0.0
    %2511 = vmatprep.subr.mxu0 0.0
    %2512 = vmatpush2.msra.mxu0 0.0
    %2513 = vmatprep.subr.mxu0 0.0
    %2514 = vmatpush2.msra.mxu0 0.0
    %2515 = vmatprep.subr.mxu0 0.0
    %2516 = vmatpush2.msra.mxu0 0.0
    %2517 = vmatprep.subr.mxu0 0.0
    %2518 = vmatpush2.msra.mxu0 0.0
    %2519 = vmatprep.subr.mxu0 0.0
    %2520 = vmatpush2.msra.mxu0 0.0
    %2521 = vmatprep.subr.mxu0 0.0
    %2522 = vmatpush2.msra.mxu0 0.0
    %2523 = vmatprep.subr.mxu0 0.0
    %2524 = vmatpush2.msra.mxu0 0.0
    %2525 = vmatprep.subr.mxu0 0.0
    %2526 = vmatpush2.msra.mxu0 0.0
    %2527 = vmatprep.subr.mxu0 0.0
    %2528 = vmatpush2.msra.mxu0 0.0
    %2529 = vmatprep.subr.mxu0 0.0
    %2530 = vmatpush2.msra.mxu0 0.0
    %2531 = vmatprep.subr.mxu0 0.0
    %2532 = vmatpush2.msra.mxu0 0.0
    %2533 = vmatprep.mubr.f32.mxu0 0.0
    %2534 = vmatmul.mubr.f32.gmra.mxu0 %v1449
    %v2535 = vpop.f32.mrf.mxu0
    %v2536 = vadd.f32 0.0, %v2535
    %v2537 = vpop.f32.mrf.mxu0
    %v2538 = vadd.f32 0.0, %v2537
    %2539 = vdwg.mxu0
    %v2540 = vadd.f32 %v2461, %v2536
    %v2541 = vadd.f32 %v2462, %v2538
    %v2542 = vxor.u32 %v2540, 2147483648
    %v2543 = vxor.u32 %v2541, 2147483648
    %v2544 = vmul.f32 %v2542, 1.442695
    %v2545 = vpow.pop %v2544
    %v2546 = vmul.f32 %v2543, 1.442695
    %v2547 = vpow.pop %v2546
    %v2548 = vadd.f32 %v2545, 1.0
    %v2549 = vadd.f32 %v2547, 1.0
    %v2550 = vrcp.pop %v2548
    %v2551 = vmul.f32 1.0, %v2550
    %v2552 = vrcp.pop %v2549
    %v2553 = vmul.f32 1.0, %v2552
    %v2554 = vtanh.pop %v2541
    %v2555 = vmul.f32 %v2551, 0.0
    %v2556 = vmul.f32 %v2551, %v2554
    %2558 = vrot.lane.b32.xlu0 %v2556, 64
    %v2559 = vpop.permute.xlu0 %2558
    %v2561 = vadd.f32 %v2555, %v2559
    %v2562 = vtanh.pop %v2561
    %v2563 = vmul.f32 %v2553, %v2562
    %2565 = vrot.lane.b32.xlu0 %v2563, 64
    %v2566 = vpop.permute.xlu0 %2565
    %v2567 = vsel %vm1447, %v2566, 0
    %2569 = vmatprep.subr.mxu0 0.0
    %2570 = vmatpush1.msra.mxu0 0.0
    %2571 = vmatprep.subr.mxu0 0.0
    %2572 = vmatpush1.msra.mxu0 0.0
    %2573 = vmatprep.subr.mxu0 0.0
    %2574 = vmatpush1.msra.mxu0 0.0
    %2575 = vmatprep.subr.mxu0 0.0
    %2576 = vmatpush1.msra.mxu0 0.0
    %2577 = vmatprep.subr.mxu0 0.0
    %2578 = vmatpush1.msra.mxu0 0.0
    %2579 = vmatprep.subr.mxu0 0.0
    %2580 = vmatpush1.msra.mxu0 0.0
    %2581 = vmatprep.subr.mxu0 0.0
    %2582 = vmatpush1.msra.mxu0 0.0
    %2583 = vmatprep.subr.mxu0 0.0
    %2584 = vmatpush1.msra.mxu0 0.0
    %2585 = vmatprep.subr.mxu0 %v267
    %2586 = vmatpush1.msra.mxu0 %v266
    %2587 = vmatprep.subr.mxu0 %v265
    %2588 = vmatpush1.msra.mxu0 %v264
    %2589 = vmatprep.subr.mxu0 %v263
    %2590 = vmatpush1.msra.mxu0 %v262
    %2591 = vmatprep.subr.mxu0 %v261
    %2592 = vmatpush1.msra.mxu0 %v260
    %2593 = vmatprep.subr.mxu0 %v259
    %2594 = vmatpush1.msra.mxu0 %v258
    %2595 = vmatprep.subr.mxu0 %v257
    %2596 = vmatpush1.msra.mxu0 %v256
    %2597 = vmatprep.subr.mxu0 %v255
    %2598 = vmatpush1.msra.mxu0 %v254
    %2599 = vmatprep.subr.mxu0 %v253
    %2600 = vmatpush1.msra.mxu0 %v252
    %2601 = vmatprep.subr.mxu0 0.0
    %2602 = vmatpush2.msra.mxu0 0.0
    %2603 = vmatprep.subr.mxu0 0.0
    %2604 = vmatpush2.msra.mxu0 0.0
    %2605 = vmatprep.subr.mxu0 0.0
    %2606 = vmatpush2.msra.mxu0 0.0
    %2607 = vmatprep.subr.mxu0 0.0
    %2608 = vmatpush2.msra.mxu0 0.0
    %2609 = vmatprep.subr.mxu0 0.0
    %2610 = vmatpush2.msra.mxu0 0.0
    %2611 = vmatprep.subr.mxu0 0.0
    %2612 = vmatpush2.msra.mxu0 0.0
    %2613 = vmatprep.subr.mxu0 0.0
    %2614 = vmatpush2.msra.mxu0 0.0
    %2615 = vmatprep.subr.mxu0 0.0
    %2616 = vmatpush2.msra.mxu0 0.0
    %2617 = vmatprep.subr.mxu0 0.0
    %2618 = vmatpush2.msra.mxu0 0.0
    %2619 = vmatprep.subr.mxu0 0.0
    %2620 = vmatpush2.msra.mxu0 0.0
    %2621 = vmatprep.subr.mxu0 0.0
    %2622 = vmatpush2.msra.mxu0 0.0
    %2623 = vmatprep.subr.mxu0 0.0
    %2624 = vmatpush2.msra.mxu0 0.0
    %2625 = vmatprep.subr.mxu0 0.0
    %2626 = vmatpush2.msra.mxu0 0.0
    %2627 = vmatprep.subr.mxu0 0.0
    %2628 = vmatpush2.msra.mxu0 0.0
    %2629 = vmatprep.subr.mxu0 0.0
    %2630 = vmatpush2.msra.mxu0 0.0
    %2631 = vmatprep.subr.mxu0 0.0
    %2632 = vmatpush2.msra.mxu0 0.0
    %2633 = vmatprep.mubr.f32.mxu0 0.0
    %2634 = vmatmul.mubr.f32.gmra.mxu0 %v2567
    %v2635 = vpop.f32.mrf.mxu0
    %v2636 = vadd.f32 0.0, %v2635
    %v2637 = vpop.f32.mrf.mxu0
    %v2638 = vadd.f32 0.0, %v2637
    %2639 = vdwg.mxu0
    %v2640 = vadd.f32 %v2463, %v2636
    %v2641 = vadd.f32 %v2464, %v2638
    %v2642 = vxor.u32 %v2640, 2147483648
    %v2643 = vxor.u32 %v2641, 2147483648
    %v2644 = vmul.f32 %v2642, 1.442695
    %v2645 = vpow.pop %v2644
    %v2646 = vmul.f32 %v2643, 1.442695
    %v2647 = vpow.pop %v2646
    %v2648 = vadd.f32 %v2645, 1.0
    %v2649 = vadd.f32 %v2647, 1.0
    %v2650 = vrcp.pop %v2648
    %v2651 = vmul.f32 1.0, %v2650
    %v2652 = vrcp.pop %v2649
    %v2653 = vmul.f32 1.0, %v2652
    %v2654 = vtanh.pop %v2641
    %v2655 = vmul.f32 %v2651, %v2561
    %v2656 = vmul.f32 %v2651, %v2654
    %2658 = vrot.lane.b32.xlu0 %v2656, 64
    %v2659 = vpop.permute.xlu0 %2658
    %v2661 = vadd.f32 %v2655, %v2659
    %v2662 = vtanh.pop %v2661
    %v2663 = vmul.f32 %v2653, %v2662
    %2665 = vrot.lane.b32.xlu0 %v2663, 64
    %v2666 = vpop.permute.xlu0 %2665
    %v2667 = vsel %vm1447, %v2666, 0
    %2669 = vmatprep.subr.mxu0 0.0
    %2670 = vmatpush1.msra.mxu0 0.0
    %2671 = vmatprep.subr.mxu0 0.0
    %2672 = vmatpush1.msra.mxu0 0.0
    %2673 = vmatprep.subr.mxu0 0.0
    %2674 = vmatpush1.msra.mxu0 0.0
    %2675 = vmatprep.subr.mxu0 0.0
    %2676 = vmatpush1.msra.mxu0 0.0
    %2677 = vmatprep.subr.mxu0 0.0
    %2678 = vmatpush1.msra.mxu0 0.0
    %2679 = vmatprep.subr.mxu0 0.0
    %2680 = vmatpush1.msra.mxu0 0.0
    %2681 = vmatprep.subr.mxu0 0.0
    %2682 = vmatpush1.msra.mxu0 0.0
    %2683 = vmatprep.subr.mxu0 0.0
    %2684 = vmatpush1.msra.mxu0 0.0
    %2685 = vmatprep.subr.mxu0 %v267
    %2686 = vmatpush1.msra.mxu0 %v266
    %2687 = vmatprep.subr.mxu0 %v265
    %2688 = vmatpush1.msra.mxu0 %v264
    %2689 = vmatprep.subr.mxu0 %v263
    %2690 = vmatpush1.msra.mxu0 %v262
    %2691 = vmatprep.subr.mxu0 %v261
    %2692 = vmatpush1.msra.mxu0 %v260
    %2693 = vmatprep.subr.mxu0 %v259
    %2694 = vmatpush1.msra.mxu0 %v258
    %2695 = vmatprep.subr.mxu0 %v257
    %2696 = vmatpush1.msra.mxu0 %v256
    %2697 = vmatprep.subr.mxu0 %v255
    %2698 = vmatpush1.msra.mxu0 %v254
    %2699 = vmatprep.subr.mxu0 %v253
    %2700 = vmatpush1.msra.mxu0 %v252
    %2701 = vmatprep.subr.mxu0 0.0
    %2702 = vmatpush2.msra.mxu0 0.0
    %2703 = vmatprep.subr.mxu0 0.0
    %2704 = vmatpush2.msra.mxu0 0.0
    %2705 = vmatprep.subr.mxu0 0.0
    %2706 = vmatpush2.msra.mxu0 0.0
    %2707 = vmatprep.subr.mxu0 0.0
    %2708 = vmatpush2.msra.mxu0 0.0
    %2709 = vmatprep.subr.mxu0 0.0
    %2710 = vmatpush2.msra.mxu0 0.0
    %2711 = vmatprep.subr.mxu0 0.0
    %2712 = vmatpush2.msra.mxu0 0.0
    %2713 = vmatprep.subr.mxu0 0.0
    %2714 = vmatpush2.msra.mxu0 0.0
    %2715 = vmatprep.subr.mxu0 0.0
    %2716 = vmatpush2.msra.mxu0 0.0
    %2717 = vmatprep.subr.mxu0 0.0
    %2718 = vmatpush2.msra.mxu0 0.0
    %2719 = vmatprep.subr.mxu0 0.0
    %2720 = vmatpush2.msra.mxu0 0.0
    %2721 = vmatprep.subr.mxu0 0.0
    %2722 = vmatpush2.msra.mxu0 0.0
    %2723 = vmatprep.subr.mxu0 0.0
    %2724 = vmatpush2.msra.mxu0 0.0
    %2725 = vmatprep.subr.mxu0 0.0
    %2726 = vmatpush2.msra.mxu0 0.0
    %2727 = vmatprep.subr.mxu0 0.0
    %2728 = vmatpush2.msra.mxu0 0.0
    %2729 = vmatprep.subr.mxu0 0.0
    %2730 = vmatpush2.msra.mxu0 0.0
    %2731 = vmatprep.subr.mxu0 0.0
    %2732 = vmatpush2.msra.mxu0 0.0
    %2733 = vmatprep.mubr.f32.mxu0 0.0
    %2734 = vmatmul.mubr.f32.gmra.mxu0 %v2667
    %v2735 = vpop.f32.mrf.mxu0
    %v2736 = vadd.f32 0.0, %v2735
    %v2737 = vpop.f32.mrf.mxu0
    %v2738 = vadd.f32 0.0, %v2737
    %2739 = vdwg.mxu0
    %v2740 = vadd.f32 %v2465, %v2736
    %v2741 = vadd.f32 %v2466, %v2738
    %v2742 = vxor.u32 %v2740, 2147483648
    %v2743 = vxor.u32 %v2741, 2147483648
    %v2744 = vmul.f32 %v2742, 1.442695
    %v2745 = vpow.pop %v2744
    %v2746 = vmul.f32 %v2743, 1.442695
    %v2747 = vpow.pop %v2746
    %v2748 = vadd.f32 %v2745, 1.0
    %v2749 = vadd.f32 %v2747, 1.0
    %v2750 = vrcp.pop %v2748
    %v2751 = vmul.f32 1.0, %v2750
    %v2752 = vrcp.pop %v2749
    %v2753 = vmul.f32 1.0, %v2752
    %v2754 = vtanh.pop %v2741
    %v2755 = vmul.f32 %v2751, %v2661
    %v2756 = vmul.f32 %v2751, %v2754
    %2758 = vrot.lane.b32.xlu0 %v2756, 64
    %v2759 = vpop.permute.xlu0 %2758
    %v2761 = vadd.f32 %v2755, %v2759
    %v2762 = vtanh.pop %v2761
    %v2763 = vmul.f32 %v2753, %v2762
    %2765 = vrot.lane.b32.xlu0 %v2763, 64
    %v2766 = vpop.permute.xlu0 %2765
    %v2767 = vsel %vm1447, %v2766, 0
    %2769 = vmatprep.subr.mxu0 0.0
    %2770 = vmatpush1.msra.mxu0 0.0
    %2771 = vmatprep.subr.mxu0 0.0
    %2772 = vmatpush1.msra.mxu0 0.0
    %2773 = vmatprep.subr.mxu0 0.0
    %2774 = vmatpush1.msra.mxu0 0.0
    %2775 = vmatprep.subr.mxu0 0.0
    %2776 = vmatpush1.msra.mxu0 0.0
    %2777 = vmatprep.subr.mxu0 0.0
    %2778 = vmatpush1.msra.mxu0 0.0
    %2779 = vmatprep.subr.mxu0 0.0
    %2780 = vmatpush1.msra.mxu0 0.0
    %2781 = vmatprep.subr.mxu0 0.0
    %2782 = vmatpush1.msra.mxu0 0.0
    %2783 = vmatprep.subr.mxu0 0.0
    %2784 = vmatpush1.msra.mxu0 0.0
    %2785 = vmatprep.subr.mxu0 %v267
    %2786 = vmatpush1.msra.mxu0 %v266
    %2787 = vmatprep.subr.mxu0 %v265
    %2788 = vmatpush1.msra.mxu0 %v264
    %2789 = vmatprep.subr.mxu0 %v263
    %2790 = vmatpush1.msra.mxu0 %v262
    %2791 = vmatprep.subr.mxu0 %v261
    %2792 = vmatpush1.msra.mxu0 %v260
    %2793 = vmatprep.subr.mxu0 %v259
    %2794 = vmatpush1.msra.mxu0 %v258
    %2795 = vmatprep.subr.mxu0 %v257
    %2796 = vmatpush1.msra.mxu0 %v256
    %2797 = vmatprep.subr.mxu0 %v255
    %2798 = vmatpush1.msra.mxu0 %v254
    %2799 = vmatprep.subr.mxu0 %v253
    %2800 = vmatpush1.msra.mxu0 %v252
    %2801 = vmatprep.subr.mxu0 0.0
    %2802 = vmatpush2.msra.mxu0 0.0
    %2803 = vmatprep.subr.mxu0 0.0
    %2804 = vmatpush2.msra.mxu0 0.0
    %2805 = vmatprep.subr.mxu0 0.0
    %2806 = vmatpush2.msra.mxu0 0.0
    %2807 = vmatprep.subr.mxu0 0.0
    %2808 = vmatpush2.msra.mxu0 0.0
    %2809 = vmatprep.subr.mxu0 0.0
    %2810 = vmatpush2.msra.mxu0 0.0
    %2811 = vmatprep.subr.mxu0 0.0
    %2812 = vmatpush2.msra.mxu0 0.0
    %2813 = vmatprep.subr.mxu0 0.0
    %2814 = vmatpush2.msra.mxu0 0.0
    %2815 = vmatprep.subr.mxu0 0.0
    %2816 = vmatpush2.msra.mxu0 0.0
    %2817 = vmatprep.subr.mxu0 0.0
    %2818 = vmatpush2.msra.mxu0 0.0
    %2819 = vmatprep.subr.mxu0 0.0
    %2820 = vmatpush2.msra.mxu0 0.0
    %2821 = vmatprep.subr.mxu0 0.0
    %2822 = vmatpush2.msra.mxu0 0.0
    %2823 = vmatprep.subr.mxu0 0.0
    %2824 = vmatpush2.msra.mxu0 0.0
    %2825 = vmatprep.subr.mxu0 0.0
    %2826 = vmatpush2.msra.mxu0 0.0
    %2827 = vmatprep.subr.mxu0 0.0
    %2828 = vmatpush2.msra.mxu0 0.0
    %2829 = vmatprep.subr.mxu0 0.0
    %2830 = vmatpush2.msra.mxu0 0.0
    %2831 = vmatprep.subr.mxu0 0.0
    %2832 = vmatpush2.msra.mxu0 0.0
    %2833 = vmatprep.mubr.f32.mxu0 0.0
    %2834 = vmatmul.mubr.f32.gmra.mxu0 %v2767
    %v2835 = vpop.f32.mrf.mxu0
    %v2836 = vadd.f32 0.0, %v2835
    %v2837 = vpop.f32.mrf.mxu0
    %v2838 = vadd.f32 0.0, %v2837
    %2839 = vdwg.mxu0
    %v2840 = vadd.f32 %v2467, %v2836
    %v2841 = vadd.f32 %v2468, %v2838
    %v2842 = vxor.u32 %v2840, 2147483648
    %v2843 = vxor.u32 %v2841, 2147483648
    %v2844 = vmul.f32 %v2842, 1.442695
    %v2845 = vpow.pop %v2844
    %v2846 = vmul.f32 %v2843, 1.442695
    %v2847 = vpow.pop %v2846
    %v2848 = vadd.f32 %v2845, 1.0
    %v2849 = vadd.f32 %v2847, 1.0
    %v2850 = vrcp.pop %v2848
    %v2851 = vmul.f32 1.0, %v2850
    %v2852 = vrcp.pop %v2849
    %v2853 = vmul.f32 1.0, %v2852
    %v2854 = vtanh.pop %v2841
    %v2855 = vmul.f32 %v2851, %v2761
    %v2856 = vmul.f32 %v2851, %v2854
    %2858 = vrot.lane.b32.xlu0 %v2856, 64
    %v2859 = vpop.permute.xlu0 %2858
    %v2861 = vadd.f32 %v2855, %v2859
    %v2862 = vtanh.pop %v2861
    %v2863 = vmul.f32 %v2853, %v2862
    %2864 = vrot.lane.b32.xlu0 %v2563, 32
    %v2865 = vpop.permute.xlu0 %2864
    %v2866 = vsel %vm1549, %v2865, 0
    %2868 = vmatprep.subr.mxu0 0.0
    %2869 = vmatpush1.msra.mxu0 0.0
    %2870 = vmatprep.subr.mxu0 0.0
    %2871 = vmatpush1.msra.mxu0 0.0
    %2872 = vmatprep.subr.mxu0 0.0
    %2873 = vmatpush1.msra.mxu0 0.0
    %2874 = vmatprep.subr.mxu0 0.0
    %2875 = vmatpush1.msra.mxu0 0.0
    %2876 = vmatprep.subr.mxu0 0.0
    %2877 = vmatpush1.msra.mxu0 0.0
    %2878 = vmatprep.subr.mxu0 0.0
    %2879 = vmatpush1.msra.mxu0 0.0
    %2880 = vmatprep.subr.mxu0 0.0
    %2881 = vmatpush1.msra.mxu0 0.0
    %2882 = vmatprep.subr.mxu0 0.0
    %2883 = vmatpush1.msra.mxu0 0.0
    %2884 = vmatprep.subr.mxu0 0.0
    %2885 = vmatpush1.msra.mxu0 0.0
    %2886 = vmatprep.subr.mxu0 0.0
    %2887 = vmatpush1.msra.mxu0 0.0
    %2888 = vmatprep.subr.mxu0 0.0
    %2889 = vmatpush1.msra.mxu0 0.0
    %2890 = vmatprep.subr.mxu0 0.0
    %2891 = vmatpush1.msra.mxu0 0.0
    %2892 = vmatprep.subr.mxu0 0.0
    %2893 = vmatpush1.msra.mxu0 %v275
    %2894 = vmatprep.subr.mxu0 0.0
    %2895 = vmatpush1.msra.mxu0 %v274
    %2896 = vmatprep.subr.mxu0 0.0
    %2897 = vmatpush1.msra.mxu0 %v273
    %2898 = vmatprep.subr.mxu0 0.0
    %2899 = vmatpush1.msra.mxu0 %v272
    %2900 = vmatprep.subr.mxu0 0.0
    %2901 = vmatpush2.msra.mxu0 0.0
    %2902 = vmatprep.subr.mxu0 0.0
    %2903 = vmatpush2.msra.mxu0 0.0
    %2904 = vmatprep.subr.mxu0 0.0
    %2905 = vmatpush2.msra.mxu0 0.0
    %2906 = vmatprep.subr.mxu0 0.0
    %2907 = vmatpush2.msra.mxu0 0.0
    %2908 = vmatprep.subr.mxu0 0.0
    %2909 = vmatpush2.msra.mxu0 0.0
    %2910 = vmatprep.subr.mxu0 0.0
    %2911 = vmatpush2.msra.mxu0 0.0
    %2912 = vmatprep.subr.mxu0 0.0
    %2913 = vmatpush2.msra.mxu0 0.0
    %2914 = vmatprep.subr.mxu0 0.0
    %2915 = vmatpush2.msra.mxu0 0.0
    %2916 = vmatprep.subr.mxu0 0.0
    %2917 = vmatpush2.msra.mxu0 0.0
    %2918 = vmatprep.subr.mxu0 0.0
    %2919 = vmatpush2.msra.mxu0 0.0
    %2920 = vmatprep.subr.mxu0 0.0
    %2921 = vmatpush2.msra.mxu0 0.0
    %2922 = vmatprep.subr.mxu0 0.0
    %2923 = vmatpush2.msra.mxu0 0.0
    %2924 = vmatprep.subr.mxu0 0.0
    %2925 = vmatpush2.msra.mxu0 0.0
    %2926 = vmatprep.subr.mxu0 0.0
    %2927 = vmatpush2.msra.mxu0 0.0
    %2928 = vmatprep.subr.mxu0 0.0
    %2929 = vmatpush2.msra.mxu0 0.0
    %2930 = vmatprep.subr.mxu0 0.0
    %2931 = vmatpush2.msra.mxu0 0.0
    %2932 = vmatprep.mubr.f32.mxu0 0.0
    %2933 = vmatmul.mubr.f32.gmra.mxu0 %v2866
    %v2934 = vpop.f32.mrf.mxu0
    %v2935 = vadd.f32 0.0, %v2934
    %v2936 = vpop.f32.mrf.mxu0
    %2937 = vdwg.mxu0
    %2939 = vrot.lane.b32.xlu0 %v2863, 64
    %v2940 = vpop.permute.xlu0 %2939
    %v2941 = vsel %vm1549, %v2940, 0
    %2943 = vmatprep.subr.mxu0 0.0
    %2944 = vmatpush1.msra.mxu0 0.0
    %2945 = vmatprep.subr.mxu0 0.0
    %2946 = vmatpush1.msra.mxu0 0.0
    %2947 = vmatprep.subr.mxu0 0.0
    %2948 = vmatpush1.msra.mxu0 0.0
    %2949 = vmatprep.subr.mxu0 0.0
    %2950 = vmatpush1.msra.mxu0 0.0
    %2951 = vmatprep.subr.mxu0 0.0
    %2952 = vmatpush1.msra.mxu0 0.0
    %2953 = vmatprep.subr.mxu0 0.0
    %2954 = vmatpush1.msra.mxu0 0.0
    %2955 = vmatprep.subr.mxu0 0.0
    %2956 = vmatpush1.msra.mxu0 0.0
    %2957 = vmatprep.subr.mxu0 0.0
    %2958 = vmatpush1.msra.mxu0 0.0
    %2959 = vmatprep.subr.mxu0 0.0
    %2960 = vmatpush1.msra.mxu0 0.0
    %2961 = vmatprep.subr.mxu0 0.0
    %2962 = vmatpush1.msra.mxu0 0.0
    %2963 = vmatprep.subr.mxu0 0.0
    %2964 = vmatpush1.msra.mxu0 0.0
    %2965 = vmatprep.subr.mxu0 0.0
    %2966 = vmatpush1.msra.mxu0 0.0
    %2967 = vmatprep.subr.mxu0 0.0
    %2968 = vmatpush1.msra.mxu0 %v271
    %2969 = vmatprep.subr.mxu0 0.0
    %2970 = vmatpush1.msra.mxu0 %v270
    %2971 = vmatprep.subr.mxu0 0.0
    %2972 = vmatpush1.msra.mxu0 %v269
    %2973 = vmatprep.subr.mxu0 0.0
    %2974 = vmatpush1.msra.mxu0 %v268
    %2975 = vmatprep.subr.mxu0 0.0
    %2976 = vmatpush2.msra.mxu0 0.0
    %2977 = vmatprep.subr.mxu0 0.0
    %2978 = vmatpush2.msra.mxu0 0.0
    %2979 = vmatprep.subr.mxu0 0.0
    %2980 = vmatpush2.msra.mxu0 0.0
    %2981 = vmatprep.subr.mxu0 0.0
    %2982 = vmatpush2.msra.mxu0 0.0
    %2983 = vmatprep.subr.mxu0 0.0
    %2984 = vmatpush2.msra.mxu0 0.0
    %2985 = vmatprep.subr.mxu0 0.0
    %2986 = vmatpush2.msra.mxu0 0.0
    %2987 = vmatprep.subr.mxu0 0.0
    %2988 = vmatpush2.msra.mxu0 0.0
    %2989 = vmatprep.subr.mxu0 0.0
    %2990 = vmatpush2.msra.mxu0 0.0
    %2991 = vmatprep.subr.mxu0 0.0
    %2992 = vmatpush2.msra.mxu0 0.0
    %2993 = vmatprep.subr.mxu0 0.0
    %2994 = vmatpush2.msra.mxu0 0.0
    %2995 = vmatprep.subr.mxu0 0.0
    %2996 = vmatpush2.msra.mxu0 0.0
    %2997 = vmatprep.subr.mxu0 0.0
    %2998 = vmatpush2.msra.mxu0 0.0
    %2999 = vmatprep.subr.mxu0 0.0
    %3000 = vmatpush2.msra.mxu0 0.0
    %3001 = vmatprep.subr.mxu0 0.0
    %3002 = vmatpush2.msra.mxu0 0.0
    %3003 = vmatprep.subr.mxu0 0.0
    %3004 = vmatpush2.msra.mxu0 0.0
    %3005 = vmatprep.subr.mxu0 0.0
    %3006 = vmatpush2.msra.mxu0 0.0
    %3007 = vmatprep.mubr.f32.mxu0 0.0
    %3008 = vmatmul.mubr.f32.gmra.mxu0 %v2941
    %v3009 = vpop.f32.mrf.mxu0
    %v3010 = vadd.f32 %v2935, %v3009
    %v3011 = vpop.f32.mrf.mxu0
    %3012 = vdwg.mxu0
    %v3013 = vadd.f32 %v3010, %v219
    %3014 = vst [vmem:[#allocation8] sm:$0x3] %v3013
    // Predicated region
    $region26: #{tpu_custom_call.1} parent=1 // pred_check
      _
    $region27: #{tpu_custom_call.1} parent=1 // pred_check_branch
      %3016 = sbr.rel (0) target = $region29
    $region28: #{tpu_custom_call.1} parent=1 // pred_region
      %s3018 = ssub.s32 32, 32
      %3019 = vsyncadd [#allocation4], %s3018
      %s3021 = sshll.u32 [#allocation8], 4
      %s3022 = int_to_ptr.vmem [resolvable:$true] %s3021
      %3024 = dma.vmem_to_hbm [thread:$0]  %s3022, 32, %s3, [#allocation4]
    $region29: #{tpu_custom_call.1} parent=1 // pred_fallthru
      _
    // Predicated region
    $region30: #{tpu_custom_call.1} parent=1 // pred_check
      _
    $region31: #{tpu_custom_call.1} parent=1 // pred_check_branch
      %3026 = sbr.rel (0) target = $region33
    $region32: #{tpu_custom_call.1} parent=1 // pred_region
      %3027 = dma.done [#allocation4], 32
    $region33: #{tpu_custom_call.1} parent=1 // pred_fallthru
      _
    %3028 = vsyncpa [#allocation3], 1
    %3029 = vsyncpa [#allocation6], 1
    %3030 = vsyncpa [#allocation4], 1

</llo_original>
